<compile_context>
chip_gen: v7x
topology: tpu7x:2x2x1
jax: 0.10.0
libtpu: 0.0.40
codegen_flags: <defaults>
</compile_context>

<pallas_src>
import functools

import jax
import jax.numpy as jnp
from jax.experimental import pallas as pl
from jax.experimental.pallas import tpu as pltpu

CHANNEL = 3
D_CHANNEL = 16     # small-shape stand-in for the module's d_channel=64
IMG_SIZE = 64      # the architecture needs 64 so the final 4x4/s1/p0 conv is valid
BATCH = 2
NEG_SLOPE = 0.2
BN_EPS = 1e-5


# ---------------------------------------------------------------------------
# Kernel 1: conv-as-matmul + bias + LeakyReLU (layer 1, no BatchNorm)
# ---------------------------------------------------------------------------
def _conv_lrelu_kernel(p_ref, w_ref, b_ref, o_ref):
    acc = jnp.dot(p_ref[...], w_ref[...], preferred_element_type=jnp.float32)
    acc = acc + b_ref[...]
    acc = jnp.where(acc >= 0, acc, NEG_SLOPE * acc)
    o_ref[...] = acc.astype(o_ref.dtype)


def conv_lrelu(patches, w, b, *, out_dtype=jnp.bfloat16):
    """(M, K)bf16 @ (K, C)bf16 + (C,)f32, fused LeakyReLU -> (M, C)bf16."""
    M, K = patches.shape
    _, C = w.shape
    # Two parallel row blocks so v7x's two TensorCores both get work; a single
    # full-M block would serialize onto one core there (no effect on v5e/v6e).
    grid_m = 2 if M % 32 == 0 else 1
    tm = M // grid_m
    return pl.pallas_call(
        _conv_lrelu_kernel,
        out_shape=jax.ShapeDtypeStruct((M, C), out_dtype),
        grid=(grid_m,),
        in_specs=[
            pl.BlockSpec((tm, K), lambda i: (i, 0)),
            pl.BlockSpec((K, C), lambda i: (0, 0)),
            pl.BlockSpec((1, C), lambda i: (0, 0)),
        ],
        out_specs=pl.BlockSpec((tm, C), lambda i: (i, 0)),
        compiler_params=pltpu.CompilerParams(
            dimension_semantics=("parallel",)),
    )(patches, w, b.reshape(1, C))


# ---------------------------------------------------------------------------
# Kernel 2: fused conv + bias + BatchNorm(batch stats) + LeakyReLU (layers 2,3)
# ---------------------------------------------------------------------------
def _conv_bn_lrelu_kernel(p_ref, w_ref, b_ref, g_ref, bt_ref, o_ref):
    acc = jnp.dot(p_ref[...], w_ref[...], preferred_element_type=jnp.float32)
    acc = acc + b_ref[...]
    m = acc.shape[0]
    # training-mode BN over all N*Ho*Wo rows; acc is register/VMEM resident,
    # so use the numerically safer centered variance.
    mean = jnp.sum(acc, axis=0, keepdims=True) * (1.0 / m)
    xc = acc - mean
    var = jnp.sum(xc * xc, axis=0, keepdims=True) * (1.0 / m)   # biased var
    scale = g_ref[...] * jax.lax.rsqrt(var + BN_EPS)
    y = xc * scale + bt_ref[...]
    y = jnp.where(y >= 0, y, NEG_SLOPE * y)
    o_ref[...] = y.astype(o_ref.dtype)


def conv_bn_lrelu(patches, w, b, gamma, beta, *, out_dtype=jnp.bfloat16):
    M, K = patches.shape
    _, C = w.shape
    # Single full-M block: batch statistics need every row and the whole layer
    # fits comfortably in VMEM (largest: 512x256 bf16 patches = 256 KiB).
    return pl.pallas_call(
        _conv_bn_lrelu_kernel,
        out_shape=jax.ShapeDtypeStruct((M, C), out_dtype),
        grid=(1,),
        in_specs=[
            pl.BlockSpec((M, K), lambda i: (0, 0)),
            pl.BlockSpec((K, C), lambda i: (0, 0)),
            pl.BlockSpec((1, C), lambda i: (0, 0)),
            pl.BlockSpec((1, C), lambda i: (0, 0)),
            pl.BlockSpec((1, C), lambda i: (0, 0)),
        ],
        out_specs=pl.BlockSpec((M, C), lambda i: (0, 0)),
        compiler_params=pltpu.CompilerParams(
            dimension_semantics=("arbitrary",)),
    )(patches, w, b.reshape(1, C), gamma.reshape(1, C), beta.reshape(1, C))


# ---------------------------------------------------------------------------
# Kernel 3: layer 4 (conv+BN+LReLU) fused with layer 5 (4x4/s1/p0 conv -> 1)
#           and the final .mean(0) -- output is the (1,1) scalar.
# ---------------------------------------------------------------------------
def _final_block_kernel(p_ref, w_ref, b_ref, g_ref, bt_ref, w5_ref, b5_ref,
                        o_ref, *, inv_batch):
    acc = jnp.dot(p_ref[...], w_ref[...], preferred_element_type=jnp.float32)
    acc = acc + b_ref[...]
    m = acc.shape[0]
    mean = jnp.sum(acc, axis=0, keepdims=True) * (1.0 / m)
    xc = acc - mean
    var = jnp.sum(xc * xc, axis=0, keepdims=True) * (1.0 / m)
    scale = g_ref[...] * jax.lax.rsqrt(var + BN_EPS)
    y = xc * scale + bt_ref[...]
    y = jnp.where(y >= 0, y, NEG_SLOPE * y)
    # Layer 5 covers the whole 4x4 map, so per example it is a weighted sum of
    # y; w5_ref is pre-tiled per example (rows of y are ordered (n, h, w)), so
    # conv5 + batch mean collapses to one multiply + full reduce on the VPU/XLU.
    prod = y * w5_ref[...]
    col = jnp.sum(prod, axis=1, keepdims=True)      # (M, 1) lane reduce
    tot = jnp.sum(col, axis=0, keepdims=True)       # (1, 1) sublane reduce
    o_ref[...] = tot * inv_batch + b5_ref[...]


def final_block(patches, w4, b4, gamma, beta, w5, b5, *, batch):
    M, K = patches.shape
    _, C = w4.shape
    # w5 is in im2col layout (kh*kw*C, 1): reshape to (kh*kw, C) and tile over
    # the batch so it lines up row-for-row with y.
    w5_rows = jnp.tile(w5.reshape(M // batch, C), (batch, 1)).astype(jnp.float32)
    out = pl.pallas_call(
        functools.partial(_final_block_kernel, inv_batch=1.0 / batch),
        out_shape=jax.ShapeDtypeStruct((1, 1), jnp.float32),
        grid=(1,),
        in_specs=[
            pl.BlockSpec((M, K), lambda i: (0, 0)),
            pl.BlockSpec((K, C), lambda i: (0, 0)),
            pl.BlockSpec((1, C), lambda i: (0, 0)),
            pl.BlockSpec((1, C), lambda i: (0, 0)),
            pl.BlockSpec((1, C), lambda i: (0, 0)),
            pl.BlockSpec((M, C), lambda i: (0, 0)),
            pl.BlockSpec((1, 1), lambda i: (0, 0)),
        ],
        out_specs=pl.BlockSpec((1, 1), lambda i: (0, 0)),
        compiler_params=pltpu.CompilerParams(
            dimension_semantics=("arbitrary",)),
    )(patches, w4, b4.reshape(1, C), gamma.reshape(1, C), beta.reshape(1, C),
      w5_rows, b5.reshape(1, 1).astype(jnp.float32))
    return out.reshape(1)


# ---------------------------------------------------------------------------
# Glue: im2col patch extraction (pure XLA reshapes/slices, bf16)
# ---------------------------------------------------------------------------
def im2col(x, kh, kw, stride, pad):
    # x: (N, H, W, C) -> patches (N*Ho*Wo, kh*kw*C), column order (ki, kj, C)
    if pad:
        x = jnp.pad(x, ((0, 0), (pad, pad), (pad, pad), (0, 0)))
    N, H, W, C = x.shape
    Ho = (H - kh) // stride + 1
    Wo = (W - kw) // stride + 1
    cols = []
    for i in range(kh):
        for j in range(kw):
            cols.append(x[:, i:i + stride * Ho:stride, j:j + stride * Wo:stride, :])
    patches = jnp.concatenate(cols, axis=-1)          # (N, Ho, Wo, kh*kw*C)
    return patches.reshape(N * Ho * Wo, kh * kw * C), (N, Ho, Wo)


# ---------------------------------------------------------------------------
# DNet forward
# ---------------------------------------------------------------------------
def dnet_forward(x_nchw, params):
    x = jnp.transpose(x_nchw, (0, 2, 3, 1)).astype(jnp.bfloat16)   # NCHW -> NHWC

    # layer 1: Conv(3 -> d, 4, 2, 1) + LeakyReLU(0.2)   (one fused pallas_call)
    p, (n, ho, wo) = im2col(x, 4, 4, 2, 1)
    y = conv_lrelu(p, params["w1"], params["b1"])
    x = y.reshape(n, ho, wo, -1)

    # layers 2..3: Conv -> BatchNorm2d(batch stats) -> LeakyReLU, fully fused
    for idx in (2, 3):
        p, (n, ho, wo) = im2col(x, 4, 4, 2, 1)
        y = conv_bn_lrelu(p, params[f"w{idx}"], params[f"b{idx}"],
                          params[f"g{idx}"], params[f"bt{idx}"])
        x = y.reshape(n, ho, wo, -1)

    # layer 4 (Conv+BN+LReLU) + layer 5 (Conv 8d -> 1, 4, 1, 0) + .mean(0),
    # all in one kernel: layer-4's activation never touches HBM.
    p, (n, ho, wo) = im2col(x, 4, 4, 2, 1)
    return final_block(p, params["w4"], params["b4"], params["g4"],
                       params["bt4"], params["w5"], params["b5"], batch=n)


def init_params(key):
    d = D_CHANNEL
    dims = [(CHANNEL, d), (d, 2 * d), (2 * d, 4 * d), (4 * d, 8 * d), (8 * d, 1)]
    params = {}
    for idx, (cin, cout) in enumerate(dims, start=1):
        key, wk, bk = jax.random.split(key, 3)
        w = jax.random.normal(wk, (4 * 4 * cin, cout), jnp.float32) * 0.05
        # MXU operands in bf16; w5 is applied on the VPU in f32 in-kernel.
        params[f"w{idx}"] = w.astype(jnp.bfloat16) if idx <= 4 else w
        params[f"b{idx}"] = jax.random.normal(bk, (cout,), jnp.float32) * 0.05
        if idx in (2, 3, 4):
            params[f"g{idx}"] = jnp.ones((cout,), jnp.float32)    # BN gamma
            params[f"bt{idx}"] = jnp.zeros((cout,), jnp.float32)  # BN beta
    return params


if __name__ == "__main__":
    key = jax.random.PRNGKey(0)
    key, xk = jax.random.split(key)
    x = jax.random.normal(xk, (BATCH, CHANNEL, IMG_SIZE, IMG_SIZE), jnp.float32)
    params = init_params(key)

    out = jax.jit(dnet_forward)(x, params)
    out = jax.block_until_ready(out)
    assert out.shape == (1,) and out.dtype == jnp.float32
    print("KERNEL_OK")
</pallas_src>

<mosaic_0001>
module attributes {stable_mosaic.version = 11 : i64} {
  func.func @_conv_lrelu_kernel(%arg0: i32, %arg1: memref<1024x48xbf16, #tpu.memory_space<vmem>>, %arg2: memref<48x16xbf16, #tpu.memory_space<vmem>>, %arg3: memref<1x16xf32, #tpu.memory_space<vmem>>, %arg4: memref<1024x16xbf16, #tpu.memory_space<vmem>>) attributes {dimension_semantics = [#tpu.dimension_semantics<parallel>], iteration_bounds = array<i64: 2>, scalar_prefetch = 0 : i64, scratch_operands = 0 : i64, tpu.core_type = #tpu.core_type<tc>, window_params = [{transform_indices = @transform_0, window_bounds = array<i64: 1024, 48>}, {pipeline_mode = #tpu.pipeline_mode<synchronous>, transform_indices = @transform_1, window_bounds = array<i64: 48, 16>}, {pipeline_mode = #tpu.pipeline_mode<synchronous>, transform_indices = @transform_2, window_bounds = array<i64: 1, 16>}, {transform_indices = @transform_3, window_bounds = array<i64: 1024, 16>}]} {
    %c0 = arith.constant 0 : index
    %c0_0 = arith.constant 0 : index
    %0 = vector.load %arg1[%c0, %c0_0] : memref<1024x48xbf16, #tpu.memory_space<vmem>>, vector<1024x48xbf16>
    %c0_1 = arith.constant 0 : index
    %c0_2 = arith.constant 0 : index
    %1 = vector.load %arg2[%c0_1, %c0_2] : memref<48x16xbf16, #tpu.memory_space<vmem>>, vector<48x16xbf16>
    %cst = arith.constant dense<0.000000e+00> : vector<1024x16xf32>
    %2 = tpu.matmul %0, %1, %cst {dimension_numbers = #tpu.dot_dimension_numbers<[1], [0], [0], [1], [0, 0, 1, 1], [], []>} : vector<1024x48xbf16>, vector<48x16xbf16>, vector<1024x16xf32> -> vector<1024x16xf32>
    %c0_3 = arith.constant 0 : index
    %c0_4 = arith.constant 0 : index
    %3 = vector.load %arg3[%c0_3, %c0_4] : memref<1x16xf32, #tpu.memory_space<vmem>>, vector<1x16xf32>
    %4 = vector.broadcast %3 : vector<1x16xf32> to vector<1024x16xf32>
    %5 = arith.addf %2, %4 : vector<1024x16xf32>
    %cst_5 = arith.constant 0.000000e+00 : f32
    %6 = vector.broadcast %cst_5 : f32 to vector<1024x16xf32>
    %7 = arith.cmpf oge, %5, %6 : vector<1024x16xf32>
    %cst_6 = arith.constant 2.000000e-01 : f32
    %8 = vector.broadcast %cst_6 : f32 to vector<1024x16xf32>
    %9 = arith.mulf %8, %5 : vector<1024x16xf32>
    %10 = arith.select %7, %5, %9 : vector<1024x16xi1>, vector<1024x16xf32>
    %11 = arith.truncf %10 : vector<1024x16xf32> to vector<1024x16xbf16>
    %c0_7 = arith.constant 0 : index
    %c0_8 = arith.constant 0 : index
    %12 = vector.load %arg4[%c0_7, %c0_8] : memref<1024x16xbf16, #tpu.memory_space<vmem>>, vector<1024x16xbf16>
    tpu.vector_store %arg4[%c0_7, %c0_8], %11 {strides = array<i32>} : memref<1024x16xbf16, #tpu.memory_space<vmem>>, vector<1024x16xbf16>,
    return
  }
  func.func @transform_0(%arg0: i32) -> (i32, i32) {
    %c0_i32 = arith.constant 0 : i32
    %c0_i32_0 = arith.constant 0 : i32
    return %arg0, %c0_i32 : i32, i32
  }
  func.func @transform_1(%arg0: i32) -> (i32, i32) {
    %c0_i32 = arith.constant 0 : i32
    %c0_i32_0 = arith.constant 0 : i32
    %c0_i32_1 = arith.constant 0 : i32
    return %c0_i32, %c0_i32_0 : i32, i32
  }
  func.func @transform_2(%arg0: i32) -> (i32, i32) {
    %c0_i32 = arith.constant 0 : i32
    %c0_i32_0 = arith.constant 0 : i32
    %c0_i32_1 = arith.constant 0 : i32
    return %c0_i32, %c0_i32_0 : i32, i32
  }
  func.func @transform_3(%arg0: i32) -> (i32, i32) {
    %c0_i32 = arith.constant 0 : i32
    %c0_i32_0 = arith.constant 0 : i32
    return %arg0, %c0_i32 : i32, i32
  }
}

module attributes {stable_mosaic.version = 11 : i64} {
  func.func @_conv_bn_lrelu_kernel(%arg0: i32, %arg1: memref<512x256xbf16, #tpu.memory_space<vmem>>, %arg2: memref<256x32xbf16, #tpu.memory_space<vmem>>, %arg3: memref<1x32xf32, #tpu.memory_space<vmem>>, %arg4: memref<1x32xf32, #tpu.memory_space<vmem>>, %arg5: memref<1x32xf32, #tpu.memory_space<vmem>>, %arg6: memref<512x32xbf16, #tpu.memory_space<vmem>>) attributes {dimension_semantics = [#tpu.dimension_semantics<arbitrary>], iteration_bounds = array<i64: 1>, scalar_prefetch = 0 : i64, scratch_operands = 0 : i64, tpu.core_type = #tpu.core_type<tc>, window_params = [{pipeline_mode = #tpu.pipeline_mode<synchronous>, transform_indices = @transform_0, window_bounds = array<i64: 512, 256>}, {pipeline_mode = #tpu.pipeline_mode<synchronous>, transform_indices = @transform_1, window_bounds = array<i64: 256, 32>}, {pipeline_mode = #tpu.pipeline_mode<synchronous>, transform_indices = @transform_2, window_bounds = array<i64: 1, 32>}, {pipeline_mode = #tpu.pipeline_mode<synchronous>, transform_indices = @transform_3, window_bounds = array<i64: 1, 32>}, {pipeline_mode = #tpu.pipeline_mode<synchronous>, transform_indices = @transform_4, window_bounds = array<i64: 1, 32>}, {pipeline_mode = #tpu.pipeline_mode<synchronous>, transform_indices = @transform_5, window_bounds = array<i64: 512, 32>}]} {
    %c0 = arith.constant 0 : index
    %c0_0 = arith.constant 0 : index
    %0 = vector.load %arg1[%c0, %c0_0] : memref<512x256xbf16, #tpu.memory_space<vmem>>, vector<512x256xbf16>
    %c0_1 = arith.constant 0 : index
    %c0_2 = arith.constant 0 : index
    %1 = vector.load %arg2[%c0_1, %c0_2] : memref<256x32xbf16, #tpu.memory_space<vmem>>, vector<256x32xbf16>
    %cst = arith.constant dense<0.000000e+00> : vector<512x32xf32>
    %2 = tpu.matmul %0, %1, %cst {dimension_numbers = #tpu.dot_dimension_numbers<[1], [0], [0], [1], [0, 0, 1, 1], [], []>} : vector<512x256xbf16>, vector<256x32xbf16>, vector<512x32xf32> -> vector<512x32xf32>
    %c0_3 = arith.constant 0 : index
    %c0_4 = arith.constant 0 : index
    %3 = vector.load %arg3[%c0_3, %c0_4] : memref<1x32xf32, #tpu.memory_space<vmem>>, vector<1x32xf32>
    %4 = vector.broadcast %3 : vector<1x32xf32> to vector<512x32xf32>
    %5 = arith.addf %2, %4 : vector<512x32xf32>
    %cst_5 = arith.constant dense<0.000000e+00> : vector<32xf32>
    %6 = vector.multi_reduction <add>, %5, %cst_5 [0] : vector<512x32xf32> to vector<32xf32>
    %7 = vector.shape_cast %6 : vector<32xf32> to vector<1x32xf32>
    %cst_6 = arith.constant 0.001953125 : f32
    %8 = vector.broadcast %cst_6 : f32 to vector<1x32xf32>
    %9 = arith.mulf %7, %8 : vector<1x32xf32>
    %10 = vector.broadcast %9 : vector<1x32xf32> to vector<512x32xf32>
    %11 = arith.subf %5, %10 : vector<512x32xf32>
    %12 = arith.mulf %11, %11 : vector<512x32xf32>
    %cst_7 = arith.constant dense<0.000000e+00> : vector<32xf32>
    %13 = vector.multi_reduction <add>, %12, %cst_7 [0] : vector<512x32xf32> to vector<32xf32>
    %14 = vector.shape_cast %13 : vector<32xf32> to vector<1x32xf32>
    %cst_8 = arith.constant 0.001953125 : f32
    %15 = vector.broadcast %cst_8 : f32 to vector<1x32xf32>
    %16 = arith.mulf %14, %15 : vector<1x32xf32>
    %c0_9 = arith.constant 0 : index
    %c0_10 = arith.constant 0 : index
    %17 = vector.load %arg4[%c0_9, %c0_10] : memref<1x32xf32, #tpu.memory_space<vmem>>, vector<1x32xf32>
    %cst_11 = arith.constant 9.99999974E-6 : f32
    %18 = vector.broadcast %cst_11 : f32 to vector<1x32xf32>
    %19 = arith.addf %16, %18 : vector<1x32xf32>
    %20 = math.rsqrt %19 : vector<1x32xf32>
    %21 = arith.mulf %17, %20 : vector<1x32xf32>
    %22 = vector.broadcast %21 : vector<1x32xf32> to vector<512x32xf32>
    %23 = arith.mulf %11, %22 : vector<512x32xf32>
    %c0_12 = arith.constant 0 : index
    %c0_13 = arith.constant 0 : index
    %24 = vector.load %arg5[%c0_12, %c0_13] : memref<1x32xf32, #tpu.memory_space<vmem>>, vector<1x32xf32>
    %25 = vector.broadcast %24 : vector<1x32xf32> to vector<512x32xf32>
    %26 = arith.addf %23, %25 : vector<512x32xf32>
    %cst_14 = arith.constant 0.000000e+00 : f32
    %27 = vector.broadcast %cst_14 : f32 to vector<512x32xf32>
    %28 = arith.cmpf oge, %26, %27 : vector<512x32xf32>
    %cst_15 = arith.constant 2.000000e-01 : f32
    %29 = vector.broadcast %cst_15 : f32 to vector<512x32xf32>
    %30 = arith.mulf %29, %26 : vector<512x32xf32>
    %31 = arith.select %28, %26, %30 : vector<512x32xi1>, vector<512x32xf32>
    %32 = arith.truncf %31 : vector<512x32xf32> to vector<512x32xbf16>
    %c0_16 = arith.constant 0 : index
    %c0_17 = arith.constant 0 : index
    %33 = vector.load %arg6[%c0_16, %c0_17] : memref<512x32xbf16, #tpu.memory_space<vmem>>, vector<512x32xbf16>
    tpu.vector_store %arg6[%c0_16, %c0_17], %32 {strides = array<i32>} : memref<512x32xbf16, #tpu.memory_space<vmem>>, vector<512x32xbf16>,
    return
  }
  func.func @transform_0(%arg0: i32) -> (i32, i32) {
    %c0_i32 = arith.constant 0 : i32
    %c0_i32_0 = arith.constant 0 : i32
    %c0_i32_1 = arith.constant 0 : i32
    return %c0_i32, %c0_i32_0 : i32, i32
  }
  func.func @transform_1(%arg0: i32) -> (i32, i32) {
    %c0_i32 = arith.constant 0 : i32
    %c0_i32_0 = arith.constant 0 : i32
    %c0_i32_1 = arith.constant 0 : i32
    return %c0_i32, %c0_i32_0 : i32, i32
  }
  func.func @transform_2(%arg0: i32) -> (i32, i32) {
    %c0_i32 = arith.constant 0 : i32
    %c0_i32_0 = arith.constant 0 : i32
    %c0_i32_1 = arith.constant 0 : i32
    return %c0_i32, %c0_i32_0 : i32, i32
  }
  func.func @transform_3(%arg0: i32) -> (i32, i32) {
    %c0_i32 = arith.constant 0 : i32
    %c0_i32_0 = arith.constant 0 : i32
    %c0_i32_1 = arith.constant 0 : i32
    return %c0_i32, %c0_i32_0 : i32, i32
  }
  func.func @transform_4(%arg0: i32) -> (i32, i32) {
    %c0_i32 = arith.constant 0 : i32
    %c0_i32_0 = arith.constant 0 : i32
    %c0_i32_1 = arith.constant 0 : i32
    return %c0_i32, %c0_i32_0 : i32, i32
  }
  func.func @transform_5(%arg0: i32) -> (i32, i32) {
    %c0_i32 = arith.constant 0 : i32
    %c0_i32_0 = arith.constant 0 : i32
    %c0_i32_1 = arith.constant 0 : i32
    return %c0_i32, %c0_i32_0 : i32, i32
  }
}

module attributes {stable_mosaic.version = 11 : i64} {
  func.func @_conv_bn_lrelu_kernel(%arg0: i32, %arg1: memref<128x512xbf16, #tpu.memory_space<vmem>>, %arg2: memref<512x64xbf16, #tpu.memory_space<vmem>>, %arg3: memref<1x64xf32, #tpu.memory_space<vmem>>, %arg4: memref<1x64xf32, #tpu.memory_space<vmem>>, %arg5: memref<1x64xf32, #tpu.memory_space<vmem>>, %arg6: memref<128x64xbf16, #tpu.memory_space<vmem>>) attributes {dimension_semantics = [#tpu.dimension_semantics<arbitrary>], iteration_bounds = array<i64: 1>, scalar_prefetch = 0 : i64, scratch_operands = 0 : i64, tpu.core_type = #tpu.core_type<tc>, window_params = [{pipeline_mode = #tpu.pipeline_mode<synchronous>, transform_indices = @transform_0, window_bounds = array<i64: 128, 512>}, {pipeline_mode = #tpu.pipeline_mode<synchronous>, transform_indices = @transform_1, window_bounds = array<i64: 512, 64>}, {pipeline_mode = #tpu.pipeline_mode<synchronous>, transform_indices = @transform_2, window_bounds = array<i64: 1, 64>}, {pipeline_mode = #tpu.pipeline_mode<synchronous>, transform_indices = @transform_3, window_bounds = array<i64: 1, 64>}, {pipeline_mode = #tpu.pipeline_mode<synchronous>, transform_indices = @transform_4, window_bounds = array<i64: 1, 64>}, {pipeline_mode = #tpu.pipeline_mode<synchronous>, transform_indices = @transform_5, window_bounds = array<i64: 128, 64>}]} {
    %c0 = arith.constant 0 : index
    %c0_0 = arith.constant 0 : index
    %0 = vector.load %arg1[%c0, %c0_0] : memref<128x512xbf16, #tpu.memory_space<vmem>>, vector<128x512xbf16>
    %c0_1 = arith.constant 0 : index
    %c0_2 = arith.constant 0 : index
    %1 = vector.load %arg2[%c0_1, %c0_2] : memref<512x64xbf16, #tpu.memory_space<vmem>>, vector<512x64xbf16>
    %cst = arith.constant dense<0.000000e+00> : vector<128x64xf32>
    %2 = tpu.matmul %0, %1, %cst {dimension_numbers = #tpu.dot_dimension_numbers<[1], [0], [0], [1], [0, 0, 1, 1], [], []>} : vector<128x512xbf16>, vector<512x64xbf16>, vector<128x64xf32> -> vector<128x64xf32>
    %c0_3 = arith.constant 0 : index
    %c0_4 = arith.constant 0 : index
    %3 = vector.load %arg3[%c0_3, %c0_4] : memref<1x64xf32, #tpu.memory_space<vmem>>, vector<1x64xf32>
    %4 = vector.broadcast %3 : vector<1x64xf32> to vector<128x64xf32>
    %5 = arith.addf %2, %4 : vector<128x64xf32>
    %cst_5 = arith.constant dense<0.000000e+00> : vector<64xf32>
    %6 = vector.multi_reduction <add>, %5, %cst_5 [0] : vector<128x64xf32> to vector<64xf32>
    %7 = vector.shape_cast %6 : vector<64xf32> to vector<1x64xf32>
    %cst_6 = arith.constant 7.812500e-03 : f32
    %8 = vector.broadcast %cst_6 : f32 to vector<1x64xf32>
    %9 = arith.mulf %7, %8 : vector<1x64xf32>
    %10 = vector.broadcast %9 : vector<1x64xf32> to vector<128x64xf32>
    %11 = arith.subf %5, %10 : vector<128x64xf32>
    %12 = arith.mulf %11, %11 : vector<128x64xf32>
    %cst_7 = arith.constant dense<0.000000e+00> : vector<64xf32>
    %13 = vector.multi_reduction <add>, %12, %cst_7 [0] : vector<128x64xf32> to vector<64xf32>
    %14 = vector.shape_cast %13 : vector<64xf32> to vector<1x64xf32>
    %cst_8 = arith.constant 7.812500e-03 : f32
    %15 = vector.broadcast %cst_8 : f32 to vector<1x64xf32>
    %16 = arith.mulf %14, %15 : vector<1x64xf32>
    %c0_9 = arith.constant 0 : index
    %c0_10 = arith.constant 0 : index
    %17 = vector.load %arg4[%c0_9, %c0_10] : memref<1x64xf32, #tpu.memory_space<vmem>>, vector<1x64xf32>
    %cst_11 = arith.constant 9.99999974E-6 : f32
    %18 = vector.broadcast %cst_11 : f32 to vector<1x64xf32>
    %19 = arith.addf %16, %18 : vector<1x64xf32>
    %20 = math.rsqrt %19 : vector<1x64xf32>
    %21 = arith.mulf %17, %20 : vector<1x64xf32>
    %22 = vector.broadcast %21 : vector<1x64xf32> to vector<128x64xf32>
    %23 = arith.mulf %11, %22 : vector<128x64xf32>
    %c0_12 = arith.constant 0 : index
    %c0_13 = arith.constant 0 : index
    %24 = vector.load %arg5[%c0_12, %c0_13] : memref<1x64xf32, #tpu.memory_space<vmem>>, vector<1x64xf32>
    %25 = vector.broadcast %24 : vector<1x64xf32> to vector<128x64xf32>
    %26 = arith.addf %23, %25 : vector<128x64xf32>
    %cst_14 = arith.constant 0.000000e+00 : f32
    %27 = vector.broadcast %cst_14 : f32 to vector<128x64xf32>
    %28 = arith.cmpf oge, %26, %27 : vector<128x64xf32>
    %cst_15 = arith.constant 2.000000e-01 : f32
    %29 = vector.broadcast %cst_15 : f32 to vector<128x64xf32>
    %30 = arith.mulf %29, %26 : vector<128x64xf32>
    %31 = arith.select %28, %26, %30 : vector<128x64xi1>, vector<128x64xf32>
    %32 = arith.truncf %31 : vector<128x64xf32> to vector<128x64xbf16>
    %c0_16 = arith.constant 0 : index
    %c0_17 = arith.constant 0 : index
    %33 = vector.load %arg6[%c0_16, %c0_17] : memref<128x64xbf16, #tpu.memory_space<vmem>>, vector<128x64xbf16>
    tpu.vector_store %arg6[%c0_16, %c0_17], %32 {strides = array<i32>} : memref<128x64xbf16, #tpu.memory_space<vmem>>, vector<128x64xbf16>,
    return
  }
  func.func @transform_0(%arg0: i32) -> (i32, i32) {
    %c0_i32 = arith.constant 0 : i32
    %c0_i32_0 = arith.constant 0 : i32
    %c0_i32_1 = arith.constant 0 : i32
    return %c0_i32, %c0_i32_0 : i32, i32
  }
  func.func @transform_1(%arg0: i32) -> (i32, i32) {
    %c0_i32 = arith.constant 0 : i32
    %c0_i32_0 = arith.constant 0 : i32
    %c0_i32_1 = arith.constant 0 : i32
    return %c0_i32, %c0_i32_0 : i32, i32
  }
  func.func @transform_2(%arg0: i32) -> (i32, i32) {
    %c0_i32 = arith.constant 0 : i32
    %c0_i32_0 = arith.constant 0 : i32
    %c0_i32_1 = arith.constant 0 : i32
    return %c0_i32, %c0_i32_0 : i32, i32
  }
  func.func @transform_3(%arg0: i32) -> (i32, i32) {
    %c0_i32 = arith.constant 0 : i32
    %c0_i32_0 = arith.constant 0 : i32
    %c0_i32_1 = arith.constant 0 : i32
    return %c0_i32, %c0_i32_0 : i32, i32
  }
  func.func @transform_4(%arg0: i32) -> (i32, i32) {
    %c0_i32 = arith.constant 0 : i32
    %c0_i32_0 = arith.constant 0 : i32
    %c0_i32_1 = arith.constant 0 : i32
    return %c0_i32, %c0_i32_0 : i32, i32
  }
  func.func @transform_5(%arg0: i32) -> (i32, i32) {
    %c0_i32 = arith.constant 0 : i32
    %c0_i32_0 = arith.constant 0 : i32
    %c0_i32_1 = arith.constant 0 : i32
    return %c0_i32, %c0_i32_0 : i32, i32
  }
}

module attributes {stable_mosaic.version = 11 : i64} {
  func.func @_final_block_kernel(%arg0: i32, %arg1: memref<32x1024xbf16, #tpu.memory_space<vmem>>, %arg2: memref<1024x128xbf16, #tpu.memory_space<vmem>>, %arg3: memref<1x128xf32, #tpu.memory_space<vmem>>, %arg4: memref<1x128xf32, #tpu.memory_space<vmem>>, %arg5: memref<1x128xf32, #tpu.memory_space<vmem>>, %arg6: memref<32x128xf32, #tpu.memory_space<vmem>>, %arg7: memref<1x1xf32, #tpu.memory_space<vmem>>, %arg8: memref<1x1xf32, #tpu.memory_space<vmem>>) attributes {dimension_semantics = [#tpu.dimension_semantics<arbitrary>], iteration_bounds = array<i64: 1>, scalar_prefetch = 0 : i64, scratch_operands = 0 : i64, tpu.core_type = #tpu.core_type<tc>, window_params = [{pipeline_mode = #tpu.pipeline_mode<synchronous>, transform_indices = @transform_0, window_bounds = array<i64: 32, 1024>}, {pipeline_mode = #tpu.pipeline_mode<synchronous>, transform_indices = @transform_1, window_bounds = array<i64: 1024, 128>}, {pipeline_mode = #tpu.pipeline_mode<synchronous>, transform_indices = @transform_2, window_bounds = array<i64: 1, 128>}, {pipeline_mode = #tpu.pipeline_mode<synchronous>, transform_indices = @transform_3, window_bounds = array<i64: 1, 128>}, {pipeline_mode = #tpu.pipeline_mode<synchronous>, transform_indices = @transform_4, window_bounds = array<i64: 1, 128>}, {pipeline_mode = #tpu.pipeline_mode<synchronous>, transform_indices = @transform_5, window_bounds = array<i64: 32, 128>}, {pipeline_mode = #tpu.pipeline_mode<synchronous>, transform_indices = @transform_6, window_bounds = array<i64: 1, 1>}, {pipeline_mode = #tpu.pipeline_mode<synchronous>, transform_indices = @transform_7, window_bounds = array<i64: 1, 1>}]} {
    %c0 = arith.constant 0 : index
    %c0_0 = arith.constant 0 : index
    %0 = vector.load %arg1[%c0, %c0_0] : memref<32x1024xbf16, #tpu.memory_space<vmem>>, vector<32x1024xbf16>
    %c0_1 = arith.constant 0 : index
    %c0_2 = arith.constant 0 : index
    %1 = vector.load %arg2[%c0_1, %c0_2] : memref<1024x128xbf16, #tpu.memory_space<vmem>>, vector<1024x128xbf16>
    %cst = arith.constant dense<0.000000e+00> : vector<32x128xf32>
    %2 = tpu.matmul %0, %1, %cst {dimension_numbers = #tpu.dot_dimension_numbers<[1], [0], [0], [1], [0, 0, 1, 1], [], []>} : vector<32x1024xbf16>, vector<1024x128xbf16>, vector<32x128xf32> -> vector<32x128xf32>
    %c0_3 = arith.constant 0 : index
    %c0_4 = arith.constant 0 : index
    %3 = vector.load %arg3[%c0_3, %c0_4] : memref<1x128xf32, #tpu.memory_space<vmem>>, vector<1x128xf32>
    %4 = vector.broadcast %3 : vector<1x128xf32> to vector<32x128xf32>
    %5 = arith.addf %2, %4 : vector<32x128xf32>
    %cst_5 = arith.constant dense<0.000000e+00> : vector<128xf32>
    %6 = vector.multi_reduction <add>, %5, %cst_5 [0] : vector<32x128xf32> to vector<128xf32>
    %7 = vector.shape_cast %6 : vector<128xf32> to vector<1x128xf32>
    %cst_6 = arith.constant 3.125000e-02 : f32
    %8 = vector.broadcast %cst_6 : f32 to vector<1x128xf32>
    %9 = arith.mulf %7, %8 : vector<1x128xf32>
    %10 = vector.broadcast %9 : vector<1x128xf32> to vector<32x128xf32>
    %11 = arith.subf %5, %10 : vector<32x128xf32>
    %12 = arith.mulf %11, %11 : vector<32x128xf32>
    %cst_7 = arith.constant dense<0.000000e+00> : vector<128xf32>
    %13 = vector.multi_reduction <add>, %12, %cst_7 [0] : vector<32x128xf32> to vector<128xf32>
    %14 = vector.shape_cast %13 : vector<128xf32> to vector<1x128xf32>
    %cst_8 = arith.constant 3.125000e-02 : f32
    %15 = vector.broadcast %cst_8 : f32 to vector<1x128xf32>
    %16 = arith.mulf %14, %15 : vector<1x128xf32>
    %c0_9 = arith.constant 0 : index
    %c0_10 = arith.constant 0 : index
    %17 = vector.load %arg4[%c0_9, %c0_10] : memref<1x128xf32, #tpu.memory_space<vmem>>, vector<1x128xf32>
    %cst_11 = arith.constant 9.99999974E-6 : f32
    %18 = vector.broadcast %cst_11 : f32 to vector<1x128xf32>
    %19 = arith.addf %16, %18 : vector<1x128xf32>
    %20 = math.rsqrt %19 : vector<1x128xf32>
    %21 = arith.mulf %17, %20 : vector<1x128xf32>
    %22 = vector.broadcast %21 : vector<1x128xf32> to vector<32x128xf32>
    %23 = arith.mulf %11, %22 : vector<32x128xf32>
    %c0_12 = arith.constant 0 : index
    %c0_13 = arith.constant 0 : index
    %24 = vector.load %arg5[%c0_12, %c0_13] : memref<1x128xf32, #tpu.memory_space<vmem>>, vector<1x128xf32>
    %25 = vector.broadcast %24 : vector<1x128xf32> to vector<32x128xf32>
    %26 = arith.addf %23, %25 : vector<32x128xf32>
    %cst_14 = arith.constant 0.000000e+00 : f32
    %27 = vector.broadcast %cst_14 : f32 to vector<32x128xf32>
    %28 = arith.cmpf oge, %26, %27 : vector<32x128xf32>
    %cst_15 = arith.constant 2.000000e-01 : f32
    %29 = vector.broadcast %cst_15 : f32 to vector<32x128xf32>
    %30 = arith.mulf %29, %26 : vector<32x128xf32>
    %31 = arith.select %28, %26, %30 : vector<32x128xi1>, vector<32x128xf32>
    %c0_16 = arith.constant 0 : index
    %c0_17 = arith.constant 0 : index
    %32 = vector.load %arg6[%c0_16, %c0_17] : memref<32x128xf32, #tpu.memory_space<vmem>>, vector<32x128xf32>
    %33 = arith.mulf %31, %32 : vector<32x128xf32>
    %cst_18 = arith.constant dense<0.000000e+00> : vector<32xf32>
    %34 = vector.multi_reduction <add>, %33, %cst_18 [1] : vector<32x128xf32> to vector<32xf32>
    %35 = vector.shape_cast %34 : vector<32xf32> to vector<32x1xf32>
    %cst_19 = arith.constant dense<0.000000e+00> : vector<1xf32>
    %36 = vector.multi_reduction <add>, %35, %cst_19 [0] : vector<32x1xf32> to vector<1xf32>
    %37 = vector.shape_cast %36 : vector<1xf32> to vector<1x1xf32>
    %cst_20 = arith.constant 5.000000e-01 : f32
    %38 = vector.broadcast %cst_20 : f32 to vector<1x1xf32>
    %39 = arith.mulf %37, %38 : vector<1x1xf32>
    %c0_21 = arith.constant 0 : index
    %c0_22 = arith.constant 0 : index
    %40 = vector.load %arg7[%c0_21, %c0_22] : memref<1x1xf32, #tpu.memory_space<vmem>>, vector<1x1xf32>
    %41 = arith.addf %39, %40 : vector<1x1xf32>
    %c0_23 = arith.constant 0 : index
    %c0_24 = arith.constant 0 : index
    %42 = vector.load %arg8[%c0_23, %c0_24] : memref<1x1xf32, #tpu.memory_space<vmem>>, vector<1x1xf32>
    tpu.vector_store %arg8[%c0_23, %c0_24], %41 {strides = array<i32>} : memref<1x1xf32, #tpu.memory_space<vmem>>, vector<1x1xf32>,
    return
  }
  func.func @transform_0(%arg0: i32) -> (i32, i32) {
    %c0_i32 = arith.constant 0 : i32
    %c0_i32_0 = arith.constant 0 : i32
    %c0_i32_1 = arith.constant 0 : i32
    return %c0_i32, %c0_i32_0 : i32, i32
  }
  func.func @transform_1(%arg0: i32) -> (i32, i32) {
    %c0_i32 = arith.constant 0 : i32
    %c0_i32_0 = arith.constant 0 : i32
    %c0_i32_1 = arith.constant 0 : i32
    return %c0_i32, %c0_i32_0 : i32, i32
  }
  func.func @transform_2(%arg0: i32) -> (i32, i32) {
    %c0_i32 = arith.constant 0 : i32
    %c0_i32_0 = arith.constant 0 : i32
    %c0_i32_1 = arith.constant 0 : i32
    return %c0_i32, %c0_i32_0 : i32, i32
  }
  func.func @transform_3(%arg0: i32) -> (i32, i32) {
    %c0_i32 = arith.constant 0 : i32
    %c0_i32_0 = arith.constant 0 : i32
    %c0_i32_1 = arith.constant 0 : i32
    return %c0_i32, %c0_i32_0 : i32, i32
  }
  func.func @transform_4(%arg0: i32) -> (i32, i32) {
    %c0_i32 = arith.constant 0 : i32
    %c0_i32_0 = arith.constant 0 : i32
    %c0_i32_1 = arith.constant 0 : i32
    return %c0_i32, %c0_i32_0 : i32, i32
  }
  func.func @transform_5(%arg0: i32) -> (i32, i32) {
    %c0_i32 = arith.constant 0 : i32
    %c0_i32_0 = arith.constant 0 : i32
    %c0_i32_1 = arith.constant 0 : i32
    return %c0_i32, %c0_i32_0 : i32, i32
  }
  func.func @transform_6(%arg0: i32) -> (i32, i32) {
    %c0_i32 = arith.constant 0 : i32
    %c0_i32_0 = arith.constant 0 : i32
    %c0_i32_1 = arith.constant 0 : i32
    return %c0_i32, %c0_i32_0 : i32, i32
  }
  func.func @transform_7(%arg0: i32) -> (i32, i32) {
    %c0_i32 = arith.constant 0 : i32
    %c0_i32_0 = arith.constant 0 : i32
    %c0_i32_1 = arith.constant 0 : i32
    return %c0_i32, %c0_i32_0 : i32, i32
  }
}

</mosaic_0001>

<llo_original>
// kernel: dnet_forward.4
$region0: #{dnet_forward.4}
  #allocation0 [shape = 'u32[]', space=smem, size = 0x4, offset = 0x4, fixed_abs, tag = 'smem constant byte address 0x4 - core index']
  #allocation1 [shape = 'u32[144,128]{1,0:T(1,128)}', space=vmem, size = 0x12000, scoped, tag = 'internal scratch']
  %s0 = inlined_call_operand.vmem [shape: bf16[2048,48], index: 0, kind: input, shape index: {}]
  %s1 = inlined_call_operand.vmem [shape: bf16[48,16], index: 1, kind: input, shape index: {}]
  %s2 = inlined_call_operand.vmem [shape: f32[1,16], index: 2, kind: input, shape index: {}]
  %s3 = inlined_call_operand.vmem [shape: bf16[2048,16], index: 3, kind: output, shape index: {}]
  %s4 = sld [smem:[#allocation0]]
  $region45: #{dnet_forward.4} parent=0
    _
  %s6 = ssub.s32 1, %s4
  %s7 = scalar_select 0, %s6, %s4
  loop: start=0, step=1, limit=4
  $region2: #{dnet_forward.4} parent=0 // loop_pre_header
    _
  $region3: #{dnet_forward.4} parent=0 // loop_header
    %s9 = sphi 0, %s13
    %p10 = scmp.ge.s32.totalorder %s9, 4
    %s19 = sphi 0, %s21
    %s22 = sphi 0, %s19
    %s23 = sphi 0, %s22
    %s39 = sphi 0, %s23
    %s43 = sphi 0, %s43
    %s45 = sphi 0, %s43
    %s46 = sphi 0, %s45
    %s60 = sphi 0, %s46
    %s64 = sphi 0, %s64
    %s66 = sphi 0, %s64
    %s67 = sphi 0, %s66
    %s81 = sphi 0, %s67
    %s87 = sphi 0, %s89
    %s90 = sphi 0, %s87
    %s91 = sphi 0, %s90
    %s107 = sphi 0, %s91
  $region4: #{dnet_forward.4} parent=0 // loop_header_branch
    %12 = sbr.rel (%p10) target = $region8
  $region5: #{dnet_forward.4} parent=0 // loop_body
    %s14 = ssub.s32 %s9, 1
    %s15 = ssub.s32 %s9, 2
    %s16 = sadd.s32 %s9, 1
    %s17 = ssub.s32 %s9, %s16
    %p18 = scmp.eq.s32.totalorder %s17, 0
    %s20 = sadd.s32 %s19, 1
    %s21 = scalar_select %p18, %s19, %s20
    %p24 = pneg %p18
    %p25 = scmp.eq.s32.totalorder %s9, 1
    %p26 = por %p24, %p25
    %p27 = scmp.ne.s32.totalorder %s19, %s22
    %p28 = scmp.eq.s32.totalorder %s9, 0
    %p29 = por %p27, %p28
    %p30 = scmp.ne.s32.totalorder %s19, %s22
    %p31 = scmp.eq.s32.totalorder %s14, 1
    %p32 = por %p30, %p31
    %p33 = scmp.ne.s32.totalorder %s22, %s23
    %p34 = scmp.eq.s32.totalorder %s14, 0
    %p35 = por %p33, %p34
    %p36 = scmp.ne.s32.totalorder %s22, %s23
    %p37 = scmp.eq.s32.totalorder %s15, 1
    %p38 = por %p36, %p37
    %p40 = scmp.ne.s32.totalorder %s23, %s39
    %p41 = scmp.eq.s32.totalorder %s15, 0
    %p42 = por %p40, %p41
    %s44 = sadd.s32 %s43, 1
    %p47 = scmp.eq.s32.totalorder %s9, 1
    %p48 = scmp.ne.s32.totalorder %s43, %s45
    %p49 = scmp.eq.s32.totalorder %s9, 0
    %p50 = por %p48, %p49
    %p51 = scmp.ne.s32.totalorder %s43, %s45
    %p52 = scmp.eq.s32.totalorder %s14, 1
    %p53 = por %p51, %p52
    %p54 = scmp.ne.s32.totalorder %s45, %s46
    %p55 = scmp.eq.s32.totalorder %s14, 0
    %p56 = por %p54, %p55
    %p57 = scmp.ne.s32.totalorder %s45, %s46
    %p58 = scmp.eq.s32.totalorder %s15, 1
    %p59 = por %p57, %p58
    %p61 = scmp.ne.s32.totalorder %s46, %s60
    %p62 = scmp.eq.s32.totalorder %s15, 0
    %p63 = por %p61, %p62
    %s65 = sadd.s32 %s64, 1
    %p68 = scmp.eq.s32.totalorder %s9, 1
    %p69 = scmp.ne.s32.totalorder %s64, %s66
    %p70 = scmp.eq.s32.totalorder %s9, 0
    %p71 = por %p69, %p70
    %p72 = scmp.ne.s32.totalorder %s64, %s66
    %p73 = scmp.eq.s32.totalorder %s14, 1
    %p74 = por %p72, %p73
    %p75 = scmp.ne.s32.totalorder %s66, %s67
    %p76 = scmp.eq.s32.totalorder %s14, 0
    %p77 = por %p75, %p76
    %p78 = scmp.ne.s32.totalorder %s66, %s67
    %p79 = scmp.eq.s32.totalorder %s15, 1
    %p80 = por %p78, %p79
    %p82 = scmp.ne.s32.totalorder %s67, %s81
    %p83 = scmp.eq.s32.totalorder %s15, 0
    %p84 = por %p82, %p83
    %s85 = ssub.s32 %s9, %s16
    %p86 = scmp.eq.s32.totalorder %s85, 0
    %s88 = sadd.s32 %s87, 1
    %s89 = scalar_select %p86, %s87, %s88
    %p92 = pneg %p86
    %p93 = scmp.eq.s32.totalorder %s9, 1
    %p94 = por %p92, %p93
    %p95 = scmp.ne.s32.totalorder %s87, %s90
    %p96 = scmp.eq.s32.totalorder %s9, 0
    %p97 = por %p95, %p96
    %p98 = scmp.ne.s32.totalorder %s87, %s90
    %p99 = scmp.eq.s32.totalorder %s14, 1
    %p100 = por %p98, %p99
    %p101 = scmp.ne.s32.totalorder %s90, %s91
    %p102 = scmp.eq.s32.totalorder %s14, 0
    %p103 = por %p101, %p102
    %p104 = scmp.ne.s32.totalorder %s90, %s91
    %p105 = scmp.eq.s32.totalorder %s15, 1
    %p106 = por %p104, %p105
    %p108 = scmp.ne.s32.totalorder %s91, %s107
    %p109 = scmp.eq.s32.totalorder %s15, 0
    %p110 = por %p108, %p109
    %p111 = scmp.le.s32.totalorder 1, %s9
    %p112 = scmp.lt.s32.totalorder %s9, 3
    %p113 = pnand %p111, %p112
    %p114 = pneg %p113
    // Predicated region
    $region9: #{dnet_forward.4} parent=5 // pred_check
      _
    $region10: #{dnet_forward.4} parent=5 // pred_check_branch
      %116 = sbr.rel (%p113) target = $region12
    $region11: #{dnet_forward.4} parent=5 // pred_region
      %s117 = ssub.s32 %s9, 1
      // Predicated region
      $region13: #{dnet_forward.4} parent=11 // pred_check
        %p118 = pneg %p56
      $region14: #{dnet_forward.4} parent=11 // pred_check_branch
        %120 = sbr.rel (%p118) target = $region16
      $region15: #{dnet_forward.4} parent=11 // pred_region
        _
      $region16: #{dnet_forward.4} parent=11 // pred_fallthru
        _
      // Predicated region
      $region17: #{dnet_forward.4} parent=11 // pred_check
        %p121 = pneg %p77
      $region18: #{dnet_forward.4} parent=11 // pred_check_branch
        %123 = sbr.rel (%p121) target = $region20
      $region19: #{dnet_forward.4} parent=11 // pred_region
        _
      $region20: #{dnet_forward.4} parent=11 // pred_fallthru
        _
    $region12: #{dnet_forward.4} parent=5 // pred_fallthru
      _
    %p124 = scmp.lt.s32.totalorder %s9, 2
    // Predicated region
    $region21: #{dnet_forward.4} parent=5 // pred_check
      %p125 = pneg %p124
    $region22: #{dnet_forward.4} parent=5 // pred_check_branch
      %127 = sbr.rel (%p125) target = $region24
    $region23: #{dnet_forward.4} parent=5 // pred_region
      // Predicated region
      $region25: #{dnet_forward.4} parent=23 // pred_check
        %p128 = pneg %p29
      $region26: #{dnet_forward.4} parent=23 // pred_check_branch
        %130 = sbr.rel (%p128) target = $region28
      $region27: #{dnet_forward.4} parent=23 // pred_region
        %s131 = smul.u32 128, %s9
        %p132 = scmp.lt.s32.totalorder %s131, 255
        %s133 = scalar_select %p132, %s131, 255
        %s134 = smul.addr %s133, 4
        %s135 = scalar_lea.vmem %s0, %s134
        %s136 = smul.u32 128, %s9
      $region28: #{dnet_forward.4} parent=23 // pred_fallthru
        _
    $region24: #{dnet_forward.4} parent=5 // pred_fallthru
      _
    %p137 = scmp.le.s32.totalorder 1, %s9
    %p138 = scmp.lt.s32.totalorder %s9, 3
    %p139 = pnand %p137, %p138
    %p140 = pneg %p139
    // Predicated region
    $region29: #{dnet_forward.4} parent=5 // pred_check
      _
    $region30: #{dnet_forward.4} parent=5 // pred_check_branch
      %142 = sbr.rel (%p139) target = $region32
    $region31: #{dnet_forward.4} parent=5 // pred_region
      %s143 = ssub.s32 %s9, 1
      %s144 = smul.u32 128, %s14
      %p145 = scmp.lt.s32.totalorder %s144, 255
      %s146 = scalar_select %p145, %s144, 255
      %s147 = smul.addr %s146, 4
      %s148 = scalar_lea.vmem %s0, %s147
      %p149 = pneg %p35
      %p150 = pneg %p32
      %p151 = pneg %p56
      %p152 = pneg %p53
      %p153 = pneg %p77
      %p154 = pneg %p74
      %p155 = pneg %p103
      %p156 = pneg %p100
      %s157 = smul.u32 128, %s14
      %p158 = scmp.lt.s32.totalorder %s157, 255
      %s159 = scalar_select %p158, %s157, 255
      %s160 = smul.addr %s159, 4
      %s161 = scalar_lea.vmem %s3, %s160
      %s162 = smul.u32 128, %s14
      %p163 = scmp.lt.s32.totalorder %s162, 255
      %s164 = scalar_select %p163, %s162, 255
      %s165 = smul.addr %s164, 4
      %s166 = scalar_lea.vmem %s0, %s165
      %s167 = smul.u32 128, %s14
      %s168 = smul.u32 128, %s14
      %p169 = scmp.lt.s32.totalorder %s168, 255
      %s170 = scalar_select %p169, %s168, 255
      %s171 = smul.addr %s170, 4
      %s172 = scalar_lea.vmem %s3, %s171
      %s173 = smul.u32 128, %s14
      %v175 = vld [vmem:[%s166] sm:$0xf]
      %v176 = vld [vmem:[%s166 + $0x4] sm:$0xf]
      %v177 = vld [vmem:[%s166 + $0x8] sm:$0xf]
      %v178 = vld [vmem:[%s166 + $0xc] sm:$0xf]
      %v179 = vld [vmem:[%s166 + $0x10] sm:$0xf]
      %v180 = vld [vmem:[%s166 + $0x14] sm:$0xf]
      %v181 = vld [vmem:[%s166 + $0x18] sm:$0xf]
      %v182 = vld [vmem:[%s166 + $0x1c] sm:$0xf]
      %v183 = vld [vmem:[%s166 + $0x20] sm:$0xf]
      %v184 = vld [vmem:[%s166 + $0x24] sm:$0xf]
      %v185 = vld [vmem:[%s166 + $0x28] sm:$0xf]
      %v186 = vld [vmem:[%s166 + $0x2c] sm:$0xf]
      %v187 = vld [vmem:[%s166 + $0x30] sm:$0xf]
      %v188 = vld [vmem:[%s166 + $0x34] sm:$0xf]
      %v189 = vld [vmem:[%s166 + $0x38] sm:$0xf]
      %v190 = vld [vmem:[%s166 + $0x3c] sm:$0xf]
      %v191 = vld [vmem:[%s166 + $0x40] sm:$0xf]
      %v192 = vld [vmem:[%s166 + $0x44] sm:$0xf]
      %v193 = vld [vmem:[%s166 + $0x48] sm:$0xf]
      %v194 = vld [vmem:[%s166 + $0x4c] sm:$0xf]
      %v195 = vld [vmem:[%s166 + $0x50] sm:$0xf]
      %v196 = vld [vmem:[%s166 + $0x54] sm:$0xf]
      %v197 = vld [vmem:[%s166 + $0x58] sm:$0xf]
      %v198 = vld [vmem:[%s166 + $0x5c] sm:$0xf]
      %v199 = vld [vmem:[%s166 + $0x60] sm:$0xf]
      %v200 = vld [vmem:[%s166 + $0x64] sm:$0xf]
      %v201 = vld [vmem:[%s166 + $0x68] sm:$0xf]
      %v202 = vld [vmem:[%s166 + $0x6c] sm:$0xf]
      %v203 = vld [vmem:[%s166 + $0x70] sm:$0xf]
      %v204 = vld [vmem:[%s166 + $0x74] sm:$0xf]
      %v205 = vld [vmem:[%s166 + $0x78] sm:$0xf]
      %v206 = vld [vmem:[%s166 + $0x7c] sm:$0xf]
      %v207 = vld [vmem:[%s166 + $0x80] sm:$0xf]
      %v208 = vld [vmem:[%s166 + $0x84] sm:$0xf]
      %v209 = vld [vmem:[%s166 + $0x88] sm:$0xf]
      %v210 = vld [vmem:[%s166 + $0x8c] sm:$0xf]
      %v211 = vld [vmem:[%s166 + $0x90] sm:$0xf]
      %v212 = vld [vmem:[%s166 + $0x94] sm:$0xf]
      %v213 = vld [vmem:[%s166 + $0x98] sm:$0xf]
      %v214 = vld [vmem:[%s166 + $0x9c] sm:$0xf]
      %v215 = vld [vmem:[%s166 + $0xa0] sm:$0xf]
      %v216 = vld [vmem:[%s166 + $0xa4] sm:$0xf]
      %v217 = vld [vmem:[%s166 + $0xa8] sm:$0xf]
      %v218 = vld [vmem:[%s166 + $0xac] sm:$0xf]
      %v219 = vld [vmem:[%s166 + $0xb0] sm:$0xf]
      %v220 = vld [vmem:[%s166 + $0xb4] sm:$0xf]
      %v221 = vld [vmem:[%s166 + $0xb8] sm:$0xf]
      %v222 = vld [vmem:[%s166 + $0xbc] sm:$0xf]
      %v223 = vld [vmem:[%s166 + $0xc0] sm:$0xf]
      %v224 = vld [vmem:[%s166 + $0xc4] sm:$0xf]
      %v225 = vld [vmem:[%s166 + $0xc8] sm:$0xf]
      %v226 = vld [vmem:[%s166 + $0xcc] sm:$0xf]
      %v227 = vld [vmem:[%s166 + $0xd0] sm:$0xf]
      %v228 = vld [vmem:[%s166 + $0xd4] sm:$0xf]
      %v229 = vld [vmem:[%s166 + $0xd8] sm:$0xf]
      %v230 = vld [vmem:[%s166 + $0xdc] sm:$0xf]
      %v231 = vld [vmem:[%s166 + $0xe0] sm:$0xf]
      %v232 = vld [vmem:[%s166 + $0xe4] sm:$0xf]
      %v233 = vld [vmem:[%s166 + $0xe8] sm:$0xf]
      %v234 = vld [vmem:[%s166 + $0xec] sm:$0xf]
      %v235 = vld [vmem:[%s166 + $0xf0] sm:$0xf]
      %v236 = vld [vmem:[%s166 + $0xf4] sm:$0xf]
      %v237 = vld [vmem:[%s166 + $0xf8] sm:$0xf]
      %v238 = vld [vmem:[%s166 + $0xfc] sm:$0xf]
      %v239 = vld [vmem:[%s166 + $0x100] sm:$0xf]
      %v240 = vld [vmem:[%s166 + $0x104] sm:$0xf]
      %v241 = vld [vmem:[%s166 + $0x108] sm:$0xf]
      %v242 = vld [vmem:[%s166 + $0x10c] sm:$0xf]
      %v243 = vld [vmem:[%s166 + $0x110] sm:$0xf]
      %v244 = vld [vmem:[%s166 + $0x114] sm:$0xf]
      %v245 = vld [vmem:[%s166 + $0x118] sm:$0xf]
      %v246 = vld [vmem:[%s166 + $0x11c] sm:$0xf]
      %v247 = vld [vmem:[%s166 + $0x120] sm:$0xf]
      %v248 = vld [vmem:[%s166 + $0x124] sm:$0xf]
      %v249 = vld [vmem:[%s166 + $0x128] sm:$0xf]
      %v250 = vld [vmem:[%s166 + $0x12c] sm:$0xf]
      %v251 = vld [vmem:[%s166 + $0x130] sm:$0xf]
      %v252 = vld [vmem:[%s166 + $0x134] sm:$0xf]
      %v253 = vld [vmem:[%s166 + $0x138] sm:$0xf]
      %v254 = vld [vmem:[%s166 + $0x13c] sm:$0xf]
      %v255 = vld [vmem:[%s166 + $0x140] sm:$0xf]
      %v256 = vld [vmem:[%s166 + $0x144] sm:$0xf]
      %v257 = vld [vmem:[%s166 + $0x148] sm:$0xf]
      %v258 = vld [vmem:[%s166 + $0x14c] sm:$0xf]
      %v259 = vld [vmem:[%s166 + $0x150] sm:$0xf]
      %v260 = vld [vmem:[%s166 + $0x154] sm:$0xf]
      %v261 = vld [vmem:[%s166 + $0x158] sm:$0xf]
      %v262 = vld [vmem:[%s166 + $0x15c] sm:$0xf]
      %v263 = vld [vmem:[%s166 + $0x160] sm:$0xf]
      %v264 = vld [vmem:[%s166 + $0x164] sm:$0xf]
      %v265 = vld [vmem:[%s166 + $0x168] sm:$0xf]
      %v266 = vld [vmem:[%s166 + $0x16c] sm:$0xf]
      %v267 = vld [vmem:[%s166 + $0x170] sm:$0xf]
      %v268 = vld [vmem:[%s166 + $0x174] sm:$0xf]
      %v269 = vld [vmem:[%s166 + $0x178] sm:$0xf]
      %v270 = vld [vmem:[%s166 + $0x17c] sm:$0xf]
      %v271 = vld [vmem:[%s166 + $0x180] sm:$0xf]
      %v272 = vld [vmem:[%s166 + $0x184] sm:$0xf]
      %v273 = vld [vmem:[%s166 + $0x188] sm:$0xf]
      %v274 = vld [vmem:[%s166 + $0x18c] sm:$0xf]
      %v275 = vld [vmem:[%s166 + $0x190] sm:$0xf]
      %v276 = vld [vmem:[%s166 + $0x194] sm:$0xf]
      %v277 = vld [vmem:[%s166 + $0x198] sm:$0xf]
      %v278 = vld [vmem:[%s166 + $0x19c] sm:$0xf]
      %v279 = vld [vmem:[%s166 + $0x1a0] sm:$0xf]
      %v280 = vld [vmem:[%s166 + $0x1a4] sm:$0xf]
      %v281 = vld [vmem:[%s166 + $0x1a8] sm:$0xf]
      %v282 = vld [vmem:[%s166 + $0x1ac] sm:$0xf]
      %v283 = vld [vmem:[%s166 + $0x1b0] sm:$0xf]
      %v284 = vld [vmem:[%s166 + $0x1b4] sm:$0xf]
      %v285 = vld [vmem:[%s166 + $0x1b8] sm:$0xf]
      %v286 = vld [vmem:[%s166 + $0x1bc] sm:$0xf]
      %v287 = vld [vmem:[%s166 + $0x1c0] sm:$0xf]
      %v288 = vld [vmem:[%s166 + $0x1c4] sm:$0xf]
      %v289 = vld [vmem:[%s166 + $0x1c8] sm:$0xf]
      %v290 = vld [vmem:[%s166 + $0x1cc] sm:$0xf]
      %v291 = vld [vmem:[%s166 + $0x1d0] sm:$0xf]
      %v292 = vld [vmem:[%s166 + $0x1d4] sm:$0xf]
      %v293 = vld [vmem:[%s166 + $0x1d8] sm:$0xf]
      %v294 = vld [vmem:[%s166 + $0x1dc] sm:$0xf]
      %v295 = vld [vmem:[%s166 + $0x1e0] sm:$0xf]
      %v296 = vld [vmem:[%s166 + $0x1e4] sm:$0xf]
      %v297 = vld [vmem:[%s166 + $0x1e8] sm:$0xf]
      %v298 = vld [vmem:[%s166 + $0x1ec] sm:$0xf]
      %v299 = vld [vmem:[%s166 + $0x1f0] sm:$0xf]
      %v300 = vld [vmem:[%s166 + $0x1f4] sm:$0xf]
      %v301 = vld [vmem:[%s166 + $0x1f8] sm:$0xf]
      %v302 = vld [vmem:[%s166 + $0x1fc] sm:$0xf]
      %v303 = vld [vmem:[%s1] sm:$0xf]
      %v304 = vld [vmem:[%s1 + $0x4] sm:$0xf]
      %v305 = vld [vmem:[%s1 + $0x8] sm:$0xf]
      %v306 = vld [vmem:[%s1 + $0xc] sm:$0xf]
      %v307 = vld [vmem:[%s1 + $0x10] sm:$0xf]
      %v308 = vld [vmem:[%s1 + $0x14] sm:$0xf]
      %v309 = vld [vmem:[%s2] sm:$0x1]
      %v311 = vlaneseq
      %v312 = vshrl.u32 %v311, 7
      %v313 = vsub.s32 0, %v312
      %v314 = vrot.slane %v309, %v313
      %v444 = vunpack.c.l.b16 %v175
      %v445 = vunpack.c.l.b16 %v176
      %v446 = vunpack.c.l.b16 %v177
      %v447 = vunpack.c.l.b16 %v178
      %v448 = vunpack.c.l.b16 %v179
      %v449 = vunpack.c.l.b16 %v180
      %v450 = vunpack.c.l.b16 %v181
      %v451 = vunpack.c.l.b16 %v182
      %v452 = vunpack.c.l.b16 %v183
      %v453 = vunpack.c.l.b16 %v184
      %v454 = vunpack.c.l.b16 %v185
      %v455 = vunpack.c.l.b16 %v186
      %v456 = vunpack.c.l.b16 %v187
      %v457 = vunpack.c.l.b16 %v188
      %v458 = vunpack.c.l.b16 %v189
      %v459 = vunpack.c.l.b16 %v190
      %v460 = vunpack.c.l.b16 %v191
      %v461 = vunpack.c.l.b16 %v192
      %v462 = vunpack.c.l.b16 %v193
      %v463 = vunpack.c.l.b16 %v194
      %v464 = vunpack.c.l.b16 %v195
      %v465 = vunpack.c.l.b16 %v196
      %v466 = vunpack.c.l.b16 %v197
      %v467 = vunpack.c.l.b16 %v198
      %v468 = vunpack.c.l.b16 %v199
      %v469 = vunpack.c.l.b16 %v200
      %v470 = vunpack.c.l.b16 %v201
      %v471 = vunpack.c.l.b16 %v202
      %v472 = vunpack.c.l.b16 %v203
      %v473 = vunpack.c.l.b16 %v204
      %v474 = vunpack.c.l.b16 %v205
      %v475 = vunpack.c.l.b16 %v206
      %v476 = vunpack.c.l.b16 %v207
      %v477 = vunpack.c.l.b16 %v208
      %v478 = vunpack.c.l.b16 %v209
      %v479 = vunpack.c.l.b16 %v210
      %v480 = vunpack.c.l.b16 %v211
      %v481 = vunpack.c.l.b16 %v212
      %v482 = vunpack.c.l.b16 %v213
      %v483 = vunpack.c.l.b16 %v214
      %v484 = vunpack.c.l.b16 %v215
      %v485 = vunpack.c.l.b16 %v216
      %v486 = vunpack.c.l.b16 %v217
      %v487 = vunpack.c.l.b16 %v218
      %v488 = vunpack.c.l.b16 %v219
      %v489 = vunpack.c.l.b16 %v220
      %v490 = vunpack.c.l.b16 %v221
      %v491 = vunpack.c.l.b16 %v222
      %v492 = vunpack.c.l.b16 %v223
      %v493 = vunpack.c.l.b16 %v224
      %v494 = vunpack.c.l.b16 %v225
      %v495 = vunpack.c.l.b16 %v226
      %v496 = vunpack.c.l.b16 %v227
      %v497 = vunpack.c.l.b16 %v228
      %v498 = vunpack.c.l.b16 %v229
      %v499 = vunpack.c.l.b16 %v230
      %v500 = vunpack.c.l.b16 %v231
      %v501 = vunpack.c.l.b16 %v232
      %v502 = vunpack.c.l.b16 %v233
      %v503 = vunpack.c.l.b16 %v234
      %v504 = vunpack.c.l.b16 %v235
      %v505 = vunpack.c.l.b16 %v236
      %v506 = vunpack.c.l.b16 %v237
      %v507 = vunpack.c.l.b16 %v238
      %v508 = vunpack.c.l.b16 %v239
      %v509 = vunpack.c.l.b16 %v240
      %v510 = vunpack.c.l.b16 %v241
      %v511 = vunpack.c.l.b16 %v242
      %v512 = vunpack.c.l.b16 %v243
      %v513 = vunpack.c.l.b16 %v244
      %v514 = vunpack.c.l.b16 %v245
      %v515 = vunpack.c.l.b16 %v246
      %v516 = vunpack.c.l.b16 %v247
      %v517 = vunpack.c.l.b16 %v248
      %v518 = vunpack.c.l.b16 %v249
      %v519 = vunpack.c.l.b16 %v250
      %v520 = vunpack.c.l.b16 %v251
      %v521 = vunpack.c.l.b16 %v252
      %v522 = vunpack.c.l.b16 %v253
      %v523 = vunpack.c.l.b16 %v254
      %v524 = vunpack.c.l.b16 %v255
      %v525 = vunpack.c.l.b16 %v256
      %v526 = vunpack.c.l.b16 %v257
      %v527 = vunpack.c.l.b16 %v258
      %v528 = vunpack.c.l.b16 %v259
      %v529 = vunpack.c.l.b16 %v260
      %v530 = vunpack.c.l.b16 %v261
      %v531 = vunpack.c.l.b16 %v262
      %v532 = vunpack.c.l.b16 %v263
      %v533 = vunpack.c.l.b16 %v264
      %v534 = vunpack.c.l.b16 %v265
      %v535 = vunpack.c.l.b16 %v266
      %v536 = vunpack.c.l.b16 %v267
      %v537 = vunpack.c.l.b16 %v268
      %v538 = vunpack.c.l.b16 %v269
      %v539 = vunpack.c.l.b16 %v270
      %v540 = vunpack.c.l.b16 %v271
      %v541 = vunpack.c.l.b16 %v272
      %v542 = vunpack.c.l.b16 %v273
      %v543 = vunpack.c.l.b16 %v274
      %v544 = vunpack.c.l.b16 %v275
      %v545 = vunpack.c.l.b16 %v276
      %v546 = vunpack.c.l.b16 %v277
      %v547 = vunpack.c.l.b16 %v278
      %v548 = vunpack.c.l.b16 %v279
      %v549 = vunpack.c.l.b16 %v280
      %v550 = vunpack.c.l.b16 %v281
      %v551 = vunpack.c.l.b16 %v282
      %v552 = vunpack.c.l.b16 %v283
      %v553 = vunpack.c.l.b16 %v284
      %v554 = vunpack.c.l.b16 %v285
      %v555 = vunpack.c.l.b16 %v286
      %v556 = vunpack.c.l.b16 %v287
      %v557 = vunpack.c.l.b16 %v288
      %v558 = vunpack.c.l.b16 %v289
      %v559 = vunpack.c.l.b16 %v290
      %v560 = vunpack.c.l.b16 %v291
      %v561 = vunpack.c.l.b16 %v292
      %v562 = vunpack.c.l.b16 %v293
      %v563 = vunpack.c.l.b16 %v294
      %v564 = vunpack.c.l.b16 %v295
      %v565 = vunpack.c.l.b16 %v296
      %v566 = vunpack.c.l.b16 %v297
      %v567 = vunpack.c.l.b16 %v298
      %v568 = vunpack.c.l.b16 %v299
      %v569 = vunpack.c.l.b16 %v300
      %v570 = vunpack.c.l.b16 %v301
      %v571 = vunpack.c.l.b16 %v302
      %v572 = vpack.c.b16 %v445, %v444
      %v573 = vpack.c.b16 %v447, %v446
      %v574 = vpack.c.b16 %v449, %v448
      %v575 = vpack.c.b16 %v451, %v450
      %v576 = vpack.c.b16 %v453, %v452
      %v577 = vpack.c.b16 %v455, %v454
      %v578 = vpack.c.b16 %v457, %v456
      %v579 = vpack.c.b16 %v459, %v458
      %v580 = vpack.c.b16 %v461, %v460
      %v581 = vpack.c.b16 %v463, %v462
      %v582 = vpack.c.b16 %v465, %v464
      %v583 = vpack.c.b16 %v467, %v466
      %v584 = vpack.c.b16 %v469, %v468
      %v585 = vpack.c.b16 %v471, %v470
      %v586 = vpack.c.b16 %v473, %v472
      %v587 = vpack.c.b16 %v475, %v474
      %v588 = vpack.c.b16 %v477, %v476
      %v589 = vpack.c.b16 %v479, %v478
      %v590 = vpack.c.b16 %v481, %v480
      %v591 = vpack.c.b16 %v483, %v482
      %v592 = vpack.c.b16 %v485, %v484
      %v593 = vpack.c.b16 %v487, %v486
      %v594 = vpack.c.b16 %v489, %v488
      %v595 = vpack.c.b16 %v491, %v490
      %v596 = vpack.c.b16 %v493, %v492
      %v597 = vpack.c.b16 %v495, %v494
      %v598 = vpack.c.b16 %v497, %v496
      %v599 = vpack.c.b16 %v499, %v498
      %v600 = vpack.c.b16 %v501, %v500
      %v601 = vpack.c.b16 %v503, %v502
      %v602 = vpack.c.b16 %v505, %v504
      %v603 = vpack.c.b16 %v507, %v506
      %v604 = vpack.c.b16 %v509, %v508
      %v605 = vpack.c.b16 %v511, %v510
      %v606 = vpack.c.b16 %v513, %v512
      %v607 = vpack.c.b16 %v515, %v514
      %v608 = vpack.c.b16 %v517, %v516
      %v609 = vpack.c.b16 %v519, %v518
      %v610 = vpack.c.b16 %v521, %v520
      %v611 = vpack.c.b16 %v523, %v522
      %v612 = vpack.c.b16 %v525, %v524
      %v613 = vpack.c.b16 %v527, %v526
      %v614 = vpack.c.b16 %v529, %v528
      %v615 = vpack.c.b16 %v531, %v530
      %v616 = vpack.c.b16 %v533, %v532
      %v617 = vpack.c.b16 %v535, %v534
      %v618 = vpack.c.b16 %v537, %v536
      %v619 = vpack.c.b16 %v539, %v538
      %v620 = vpack.c.b16 %v541, %v540
      %v621 = vpack.c.b16 %v543, %v542
      %v622 = vpack.c.b16 %v545, %v544
      %v623 = vpack.c.b16 %v547, %v546
      %v624 = vpack.c.b16 %v549, %v548
      %v625 = vpack.c.b16 %v551, %v550
      %v626 = vpack.c.b16 %v553, %v552
      %v627 = vpack.c.b16 %v555, %v554
      %v628 = vpack.c.b16 %v557, %v556
      %v629 = vpack.c.b16 %v559, %v558
      %v630 = vpack.c.b16 %v561, %v560
      %v631 = vpack.c.b16 %v563, %v562
      %v632 = vpack.c.b16 %v565, %v564
      %v633 = vpack.c.b16 %v567, %v566
      %v634 = vpack.c.b16 %v569, %v568
      %v635 = vpack.c.b16 %v571, %v570
      %v642 = vunpack.c.l.b16 %v303
      %v643 = vunpack.c.l.b16 %v304
      %v644 = vunpack.c.l.b16 %v305
      %v645 = vunpack.c.l.b16 %v306
      %v646 = vunpack.c.l.b16 %v307
      %v647 = vunpack.c.l.b16 %v308
      %v648 = vpack.c.b16 %v643, %v642
      %v649 = vpack.c.b16 %v645, %v644
      %v650 = vpack.c.b16 %v647, %v646
      %vm654 = vcmask 392192
      %v656 = vsel %vm654, %v572, 0
      %v659 = vsel %vm654, %v573, 0
      %v662 = vsel %vm654, %v574, 0
      %v665 = vsel %vm654, %v575, 0
      %v668 = vsel %vm654, %v576, 0
      %v671 = vsel %vm654, %v577, 0
      %v674 = vsel %vm654, %v578, 0
      %v677 = vsel %vm654, %v579, 0
      %v680 = vsel %vm654, %v580, 0
      %v683 = vsel %vm654, %v581, 0
      %v686 = vsel %vm654, %v582, 0
      %v689 = vsel %vm654, %v583, 0
      %v692 = vsel %vm654, %v584, 0
      %v695 = vsel %vm654, %v585, 0
      %v698 = vsel %vm654, %v586, 0
      %v701 = vsel %vm654, %v587, 0
      %v704 = vsel %vm654, %v588, 0
      %v707 = vsel %vm654, %v589, 0
      %v710 = vsel %vm654, %v590, 0
      %v713 = vsel %vm654, %v591, 0
      %v716 = vsel %vm654, %v592, 0
      %v719 = vsel %vm654, %v593, 0
      %v722 = vsel %vm654, %v594, 0
      %v725 = vsel %vm654, %v595, 0
      %v728 = vsel %vm654, %v596, 0
      %v731 = vsel %vm654, %v597, 0
      %v734 = vsel %vm654, %v598, 0
      %v737 = vsel %vm654, %v599, 0
      %v740 = vsel %vm654, %v600, 0
      %v743 = vsel %vm654, %v601, 0
      %v746 = vsel %vm654, %v602, 0
      %v749 = vsel %vm654, %v603, 0
      %v752 = vsel %vm654, %v604, 0
      %v755 = vsel %vm654, %v605, 0
      %v758 = vsel %vm654, %v606, 0
      %v761 = vsel %vm654, %v607, 0
      %v764 = vsel %vm654, %v608, 0
      %v767 = vsel %vm654, %v609, 0
      %v770 = vsel %vm654, %v610, 0
      %v773 = vsel %vm654, %v611, 0
      %v776 = vsel %vm654, %v612, 0
      %v779 = vsel %vm654, %v613, 0
      %v782 = vsel %vm654, %v614, 0
      %v785 = vsel %vm654, %v615, 0
      %v788 = vsel %vm654, %v616, 0
      %v791 = vsel %vm654, %v617, 0
      %v794 = vsel %vm654, %v618, 0
      %v797 = vsel %vm654, %v619, 0
      %v800 = vsel %vm654, %v620, 0
      %v803 = vsel %vm654, %v621, 0
      %v806 = vsel %vm654, %v622, 0
      %v809 = vsel %vm654, %v623, 0
      %v812 = vsel %vm654, %v624, 0
      %v815 = vsel %vm654, %v625, 0
      %v818 = vsel %vm654, %v626, 0
      %v821 = vsel %vm654, %v627, 0
      %v824 = vsel %vm654, %v628, 0
      %v827 = vsel %vm654, %v629, 0
      %v830 = vsel %vm654, %v630, 0
      %v833 = vsel %vm654, %v631, 0
      %v836 = vsel %vm654, %v632, 0
      %v839 = vsel %vm654, %v633, 0
      %v842 = vsel %vm654, %v634, 0
      %v845 = vsel %vm654, %v635, 0
      %847 = vmatprep.subr.bf16.mxu0 0
      %848 = vmatpush1.bf16.msra.mxu0 %v648
      %849 = vmatprep.subr.bf16.mxu0 0
      %850 = vmatpush1.bf16.msra.mxu0 %v649
      %851 = vmatprep.subr.bf16.mxu0 0
      %852 = vmatpush1.bf16.msra.mxu0 %v650
      %853 = vmatprep.subr.bf16.mxu0 0
      %854 = vmatpush1.bf16.msra.mxu0 0
      %855 = vmatprep.subr.bf16.mxu0 0
      %856 = vmatpush1.bf16.msra.mxu0 0
      %857 = vmatprep.subr.bf16.mxu0 0
      %858 = vmatpush1.bf16.msra.mxu0 0
      %859 = vmatprep.subr.bf16.mxu0 0
      %860 = vmatpush1.bf16.msra.mxu0 0
      %861 = vmatprep.subr.bf16.mxu0 0
      %862 = vmatpush1.bf16.msra.mxu0 0
      %863 = vmatprep.subr.bf16.mxu0 0
      %864 = vmatpush1.bf16.msra.mxu0 0
      %865 = vmatprep.subr.bf16.mxu0 0
      %866 = vmatpush1.bf16.msra.mxu0 0
      %867 = vmatprep.subr.bf16.mxu0 0
      %868 = vmatpush1.bf16.msra.mxu0 0
      %869 = vmatprep.subr.bf16.mxu0 0
      %870 = vmatpush1.bf16.msra.mxu0 0
      %871 = vmatprep.subr.bf16.mxu0 0
      %872 = vmatpush1.bf16.msra.mxu0 0
      %873 = vmatprep.subr.bf16.mxu0 0
      %874 = vmatpush1.bf16.msra.mxu0 0
      %875 = vmatprep.subr.bf16.mxu0 0
      %876 = vmatpush1.bf16.msra.mxu0 0
      %877 = vmatprep.subr.bf16.mxu0 0
      %878 = vmatpush1.bf16.msra.mxu0 0
      %879 = vmatprep.mubr.bf16.mxu0 0
      %880 = vmatmul.mubr.bf16.gmra.mrb[0].mxu0 %v656
      %v881 = vpop.f32.mrb[0].mxu0
      %v882 = vadd.f32 %v314, %v881
      %v883 = vpop.f32.mrb[0].mxu0
      %v884 = vpop.f32.mrb[0].mxu0
      %v885 = vadd.f32 %v314, %v884
      %v886 = vpop.f32.mrb[0].mxu0
      %887 = vmatprep.mubr.bf16.mxu0 0
      %888 = vmatmul.mubr.bf16.gmra.mrb[0].mxu0 %v659
      %v889 = vpop.f32.mrb[0].mxu0
      %v890 = vadd.f32 %v314, %v889
      %v891 = vpop.f32.mrb[0].mxu0
      %v892 = vpop.f32.mrb[0].mxu0
      %v893 = vadd.f32 %v314, %v892
      %v894 = vpop.f32.mrb[0].mxu0
      %895 = vmatprep.mubr.bf16.mxu0 0
      %896 = vmatmul.mubr.bf16.gmra.mrb[0].mxu0 %v662
      %v897 = vpop.f32.mrb[0].mxu0
      %v898 = vadd.f32 %v314, %v897
      %v899 = vpop.f32.mrb[0].mxu0
      %v900 = vpop.f32.mrb[0].mxu0
      %v901 = vadd.f32 %v314, %v900
      %v902 = vpop.f32.mrb[0].mxu0
      %903 = vmatprep.mubr.bf16.mxu0 0
      %904 = vmatmul.mubr.bf16.gmra.mrb[0].mxu0 %v665
      %v905 = vpop.f32.mrb[0].mxu0
      %v906 = vadd.f32 %v314, %v905
      %v907 = vpop.f32.mrb[0].mxu0
      %v908 = vpop.f32.mrb[0].mxu0
      %v909 = vadd.f32 %v314, %v908
      %v910 = vpop.f32.mrb[0].mxu0
      %911 = vmatprep.mubr.bf16.mxu0 0
      %912 = vmatmul.mubr.bf16.gmra.mrb[0].mxu0 %v668
      %v913 = vpop.f32.mrb[0].mxu0
      %v914 = vadd.f32 %v314, %v913
      %v915 = vpop.f32.mrb[0].mxu0
      %v916 = vpop.f32.mrb[0].mxu0
      %v917 = vadd.f32 %v314, %v916
      %v918 = vpop.f32.mrb[0].mxu0
      %919 = vmatprep.mubr.bf16.mxu0 0
      %920 = vmatmul.mubr.bf16.gmra.mrb[0].mxu0 %v671
      %v921 = vpop.f32.mrb[0].mxu0
      %v922 = vadd.f32 %v314, %v921
      %v923 = vpop.f32.mrb[0].mxu0
      %v924 = vpop.f32.mrb[0].mxu0
      %v925 = vadd.f32 %v314, %v924
      %v926 = vpop.f32.mrb[0].mxu0
      %927 = vmatprep.mubr.bf16.mxu0 0
      %928 = vmatmul.mubr.bf16.gmra.mrb[0].mxu0 %v674
      %v929 = vpop.f32.mrb[0].mxu0
      %v930 = vadd.f32 %v314, %v929
      %v931 = vpop.f32.mrb[0].mxu0
      %v932 = vpop.f32.mrb[0].mxu0
      %v933 = vadd.f32 %v314, %v932
      %v934 = vpop.f32.mrb[0].mxu0
      %935 = vmatprep.mubr.bf16.mxu0 0
      %936 = vmatmul.mubr.bf16.gmra.mrb[0].mxu0 %v677
      %v937 = vpop.f32.mrb[0].mxu0
      %v938 = vadd.f32 %v314, %v937
      %v939 = vpop.f32.mrb[0].mxu0
      %v940 = vpop.f32.mrb[0].mxu0
      %v941 = vadd.f32 %v314, %v940
      %v942 = vpop.f32.mrb[0].mxu0
      %943 = vmatprep.mubr.bf16.mxu0 0
      %944 = vmatmul.mubr.bf16.gmra.mrb[0].mxu0 %v680
      %v945 = vpop.f32.mrb[0].mxu0
      %v946 = vadd.f32 %v314, %v945
      %v947 = vpop.f32.mrb[0].mxu0
      %v948 = vpop.f32.mrb[0].mxu0
      %v949 = vadd.f32 %v314, %v948
      %v950 = vpop.f32.mrb[0].mxu0
      %951 = vmatprep.mubr.bf16.mxu0 0
      %952 = vmatmul.mubr.bf16.gmra.mrb[0].mxu0 %v683
      %v953 = vpop.f32.mrb[0].mxu0
      %v954 = vadd.f32 %v314, %v953
      %v955 = vpop.f32.mrb[0].mxu0
      %v956 = vpop.f32.mrb[0].mxu0
      %v957 = vadd.f32 %v314, %v956
      %v958 = vpop.f32.mrb[0].mxu0
      %959 = vmatprep.mubr.bf16.mxu0 0
      %960 = vmatmul.mubr.bf16.gmra.mrb[0].mxu0 %v686
      %v961 = vpop.f32.mrb[0].mxu0
      %v962 = vadd.f32 %v314, %v961
      %v963 = vpop.f32.mrb[0].mxu0
      %v964 = vpop.f32.mrb[0].mxu0
      %v965 = vadd.f32 %v314, %v964
      %v966 = vpop.f32.mrb[0].mxu0
      %967 = vmatprep.mubr.bf16.mxu0 0
      %968 = vmatmul.mubr.bf16.gmra.mrb[0].mxu0 %v689
      %v969 = vpop.f32.mrb[0].mxu0
      %v970 = vadd.f32 %v314, %v969
      %v971 = vpop.f32.mrb[0].mxu0
      %v972 = vpop.f32.mrb[0].mxu0
      %v973 = vadd.f32 %v314, %v972
      %v974 = vpop.f32.mrb[0].mxu0
      %975 = vmatprep.mubr.bf16.mxu0 0
      %976 = vmatmul.mubr.bf16.gmra.mrb[0].mxu0 %v692
      %v977 = vpop.f32.mrb[0].mxu0
      %v978 = vadd.f32 %v314, %v977
      %v979 = vpop.f32.mrb[0].mxu0
      %v980 = vpop.f32.mrb[0].mxu0
      %v981 = vadd.f32 %v314, %v980
      %v982 = vpop.f32.mrb[0].mxu0
      %983 = vmatprep.mubr.bf16.mxu0 0
      %984 = vmatmul.mubr.bf16.gmra.mrb[0].mxu0 %v695
      %v985 = vpop.f32.mrb[0].mxu0
      %v986 = vadd.f32 %v314, %v985
      %v987 = vpop.f32.mrb[0].mxu0
      %v988 = vpop.f32.mrb[0].mxu0
      %v989 = vadd.f32 %v314, %v988
      %v990 = vpop.f32.mrb[0].mxu0
      %991 = vmatprep.mubr.bf16.mxu0 0
      %992 = vmatmul.mubr.bf16.gmra.mrb[0].mxu0 %v698
      %v993 = vpop.f32.mrb[0].mxu0
      %v994 = vadd.f32 %v314, %v993
      %v995 = vpop.f32.mrb[0].mxu0
      %v996 = vpop.f32.mrb[0].mxu0
      %v997 = vadd.f32 %v314, %v996
      %v998 = vpop.f32.mrb[0].mxu0
      %999 = vmatprep.mubr.bf16.mxu0 0
      %1000 = vmatmul.mubr.bf16.gmra.mrb[0].mxu0 %v701
      %v1001 = vpop.f32.mrb[0].mxu0
      %v1002 = vadd.f32 %v314, %v1001
      %v1003 = vpop.f32.mrb[0].mxu0
      %v1004 = vpop.f32.mrb[0].mxu0
      %v1005 = vadd.f32 %v314, %v1004
      %v1006 = vpop.f32.mrb[0].mxu0
      %1007 = vmatprep.mubr.bf16.mxu0 0
      %1008 = vmatmul.mubr.bf16.gmra.mrb[0].mxu0 %v704
      %v1009 = vpop.f32.mrb[0].mxu0
      %v1010 = vadd.f32 %v314, %v1009
      %v1011 = vpop.f32.mrb[0].mxu0
      %v1012 = vpop.f32.mrb[0].mxu0
      %v1013 = vadd.f32 %v314, %v1012
      %v1014 = vpop.f32.mrb[0].mxu0
      %1015 = vmatprep.mubr.bf16.mxu0 0
      %1016 = vmatmul.mubr.bf16.gmra.mrb[0].mxu0 %v707
      %v1017 = vpop.f32.mrb[0].mxu0
      %v1018 = vadd.f32 %v314, %v1017
      %v1019 = vpop.f32.mrb[0].mxu0
      %v1020 = vpop.f32.mrb[0].mxu0
      %v1021 = vadd.f32 %v314, %v1020
      %v1022 = vpop.f32.mrb[0].mxu0
      %1023 = vmatprep.mubr.bf16.mxu0 0
      %1024 = vmatmul.mubr.bf16.gmra.mrb[0].mxu0 %v710
      %v1025 = vpop.f32.mrb[0].mxu0
      %v1026 = vadd.f32 %v314, %v1025
      %v1027 = vpop.f32.mrb[0].mxu0
      %v1028 = vpop.f32.mrb[0].mxu0
      %v1029 = vadd.f32 %v314, %v1028
      %v1030 = vpop.f32.mrb[0].mxu0
      %1031 = vmatprep.mubr.bf16.mxu0 0
      %1032 = vmatmul.mubr.bf16.gmra.mrb[0].mxu0 %v713
      %v1033 = vpop.f32.mrb[0].mxu0
      %v1034 = vadd.f32 %v314, %v1033
      %v1035 = vpop.f32.mrb[0].mxu0
      %v1036 = vpop.f32.mrb[0].mxu0
      %v1037 = vadd.f32 %v314, %v1036
      %v1038 = vpop.f32.mrb[0].mxu0
      %1039 = vmatprep.mubr.bf16.mxu0 0
      %1040 = vmatmul.mubr.bf16.gmra.mrb[0].mxu0 %v716
      %v1041 = vpop.f32.mrb[0].mxu0
      %v1042 = vadd.f32 %v314, %v1041
      %v1043 = vpop.f32.mrb[0].mxu0
      %v1044 = vpop.f32.mrb[0].mxu0
      %v1045 = vadd.f32 %v314, %v1044
      %v1046 = vpop.f32.mrb[0].mxu0
      %1047 = vmatprep.mubr.bf16.mxu0 0
      %1048 = vmatmul.mubr.bf16.gmra.mrb[0].mxu0 %v719
      %v1049 = vpop.f32.mrb[0].mxu0
      %v1050 = vadd.f32 %v314, %v1049
      %v1051 = vpop.f32.mrb[0].mxu0
      %v1052 = vpop.f32.mrb[0].mxu0
      %v1053 = vadd.f32 %v314, %v1052
      %v1054 = vpop.f32.mrb[0].mxu0
      %1055 = vmatprep.mubr.bf16.mxu0 0
      %1056 = vmatmul.mubr.bf16.gmra.mrb[0].mxu0 %v722
      %v1057 = vpop.f32.mrb[0].mxu0
      %v1058 = vadd.f32 %v314, %v1057
      %v1059 = vpop.f32.mrb[0].mxu0
      %v1060 = vpop.f32.mrb[0].mxu0
      %v1061 = vadd.f32 %v314, %v1060
      %v1062 = vpop.f32.mrb[0].mxu0
      %1063 = vmatprep.mubr.bf16.mxu0 0
      %1064 = vmatmul.mubr.bf16.gmra.mrb[0].mxu0 %v725
      %v1065 = vpop.f32.mrb[0].mxu0
      %v1066 = vadd.f32 %v314, %v1065
      %v1067 = vpop.f32.mrb[0].mxu0
      %v1068 = vpop.f32.mrb[0].mxu0
      %v1069 = vadd.f32 %v314, %v1068
      %v1070 = vpop.f32.mrb[0].mxu0
      %1071 = vmatprep.mubr.bf16.mxu0 0
      %1072 = vmatmul.mubr.bf16.gmra.mrb[0].mxu0 %v728
      %v1073 = vpop.f32.mrb[0].mxu0
      %v1074 = vadd.f32 %v314, %v1073
      %v1075 = vpop.f32.mrb[0].mxu0
      %v1076 = vpop.f32.mrb[0].mxu0
      %v1077 = vadd.f32 %v314, %v1076
      %v1078 = vpop.f32.mrb[0].mxu0
      %1079 = vmatprep.mubr.bf16.mxu0 0
      %1080 = vmatmul.mubr.bf16.gmra.mrb[0].mxu0 %v731
      %v1081 = vpop.f32.mrb[0].mxu0
      %v1082 = vadd.f32 %v314, %v1081
      %v1083 = vpop.f32.mrb[0].mxu0
      %v1084 = vpop.f32.mrb[0].mxu0
      %v1085 = vadd.f32 %v314, %v1084
      %v1086 = vpop.f32.mrb[0].mxu0
      %1087 = vmatprep.mubr.bf16.mxu0 0
      %1088 = vmatmul.mubr.bf16.gmra.mrb[0].mxu0 %v734
      %v1089 = vpop.f32.mrb[0].mxu0
      %v1090 = vadd.f32 %v314, %v1089
      %v1091 = vpop.f32.mrb[0].mxu0
      %v1092 = vpop.f32.mrb[0].mxu0
      %v1093 = vadd.f32 %v314, %v1092
      %v1094 = vpop.f32.mrb[0].mxu0
      %1095 = vmatprep.mubr.bf16.mxu0 0
      %1096 = vmatmul.mubr.bf16.gmra.mrb[0].mxu0 %v737
      %v1097 = vpop.f32.mrb[0].mxu0
      %v1098 = vadd.f32 %v314, %v1097
      %v1099 = vpop.f32.mrb[0].mxu0
      %v1100 = vpop.f32.mrb[0].mxu0
      %v1101 = vadd.f32 %v314, %v1100
      %v1102 = vpop.f32.mrb[0].mxu0
      %1103 = vmatprep.mubr.bf16.mxu0 0
      %1104 = vmatmul.mubr.bf16.gmra.mrb[0].mxu0 %v740
      %v1105 = vpop.f32.mrb[0].mxu0
      %v1106 = vadd.f32 %v314, %v1105
      %v1107 = vpop.f32.mrb[0].mxu0
      %v1108 = vpop.f32.mrb[0].mxu0
      %v1109 = vadd.f32 %v314, %v1108
      %v1110 = vpop.f32.mrb[0].mxu0
      %1111 = vmatprep.mubr.bf16.mxu0 0
      %1112 = vmatmul.mubr.bf16.gmra.mrb[0].mxu0 %v743
      %v1113 = vpop.f32.mrb[0].mxu0
      %v1114 = vadd.f32 %v314, %v1113
      %v1115 = vpop.f32.mrb[0].mxu0
      %v1116 = vpop.f32.mrb[0].mxu0
      %v1117 = vadd.f32 %v314, %v1116
      %v1118 = vpop.f32.mrb[0].mxu0
      %1119 = vmatprep.mubr.bf16.mxu0 0
      %1120 = vmatmul.mubr.bf16.gmra.mrb[0].mxu0 %v746
      %v1121 = vpop.f32.mrb[0].mxu0
      %v1122 = vadd.f32 %v314, %v1121
      %v1123 = vpop.f32.mrb[0].mxu0
      %v1124 = vpop.f32.mrb[0].mxu0
      %v1125 = vadd.f32 %v314, %v1124
      %v1126 = vpop.f32.mrb[0].mxu0
      %1127 = vmatprep.mubr.bf16.mxu0 0
      %1128 = vmatmul.mubr.bf16.gmra.mrb[0].mxu0 %v749
      %v1129 = vpop.f32.mrb[0].mxu0
      %v1130 = vadd.f32 %v314, %v1129
      %v1131 = vpop.f32.mrb[0].mxu0
      %v1132 = vpop.f32.mrb[0].mxu0
      %v1133 = vadd.f32 %v314, %v1132
      %v1134 = vpop.f32.mrb[0].mxu0
      %1135 = vmatprep.mubr.bf16.mxu0 0
      %1136 = vmatmul.mubr.bf16.gmra.mrb[0].mxu0 %v752
      %v1137 = vpop.f32.mrb[0].mxu0
      %v1138 = vadd.f32 %v314, %v1137
      %v1139 = vpop.f32.mrb[0].mxu0
      %v1140 = vpop.f32.mrb[0].mxu0
      %v1141 = vadd.f32 %v314, %v1140
      %v1142 = vpop.f32.mrb[0].mxu0
      %1143 = vmatprep.mubr.bf16.mxu0 0
      %1144 = vmatmul.mubr.bf16.gmra.mrb[0].mxu0 %v755
      %v1145 = vpop.f32.mrb[0].mxu0
      %v1146 = vadd.f32 %v314, %v1145
      %v1147 = vpop.f32.mrb[0].mxu0
      %v1148 = vpop.f32.mrb[0].mxu0
      %v1149 = vadd.f32 %v314, %v1148
      %v1150 = vpop.f32.mrb[0].mxu0
      %1151 = vmatprep.mubr.bf16.mxu0 0
      %1152 = vmatmul.mubr.bf16.gmra.mrb[0].mxu0 %v758
      %v1153 = vpop.f32.mrb[0].mxu0
      %v1154 = vadd.f32 %v314, %v1153
      %v1155 = vpop.f32.mrb[0].mxu0
      %v1156 = vpop.f32.mrb[0].mxu0
      %v1157 = vadd.f32 %v314, %v1156
      %v1158 = vpop.f32.mrb[0].mxu0
      %1159 = vmatprep.mubr.bf16.mxu0 0
      %1160 = vmatmul.mubr.bf16.gmra.mrb[0].mxu0 %v761
      %v1161 = vpop.f32.mrb[0].mxu0
      %v1162 = vadd.f32 %v314, %v1161
      %v1163 = vpop.f32.mrb[0].mxu0
      %v1164 = vpop.f32.mrb[0].mxu0
      %v1165 = vadd.f32 %v314, %v1164
      %v1166 = vpop.f32.mrb[0].mxu0
      %1167 = vmatprep.mubr.bf16.mxu0 0
      %1168 = vmatmul.mubr.bf16.gmra.mrb[0].mxu0 %v764
      %v1169 = vpop.f32.mrb[0].mxu0
      %v1170 = vadd.f32 %v314, %v1169
      %v1171 = vpop.f32.mrb[0].mxu0
      %v1172 = vpop.f32.mrb[0].mxu0
      %v1173 = vadd.f32 %v314, %v1172
      %v1174 = vpop.f32.mrb[0].mxu0
      %1175 = vmatprep.mubr.bf16.mxu0 0
      %1176 = vmatmul.mubr.bf16.gmra.mrb[0].mxu0 %v767
      %v1177 = vpop.f32.mrb[0].mxu0
      %v1178 = vadd.f32 %v314, %v1177
      %v1179 = vpop.f32.mrb[0].mxu0
      %v1180 = vpop.f32.mrb[0].mxu0
      %v1181 = vadd.f32 %v314, %v1180
      %v1182 = vpop.f32.mrb[0].mxu0
      %1183 = vmatprep.mubr.bf16.mxu0 0
      %1184 = vmatmul.mubr.bf16.gmra.mrb[0].mxu0 %v770
      %v1185 = vpop.f32.mrb[0].mxu0
      %v1186 = vadd.f32 %v314, %v1185
      %v1187 = vpop.f32.mrb[0].mxu0
      %v1188 = vpop.f32.mrb[0].mxu0
      %v1189 = vadd.f32 %v314, %v1188
      %v1190 = vpop.f32.mrb[0].mxu0
      %1191 = vmatprep.mubr.bf16.mxu0 0
      %1192 = vmatmul.mubr.bf16.gmra.mrb[0].mxu0 %v773
      %v1193 = vpop.f32.mrb[0].mxu0
      %v1194 = vadd.f32 %v314, %v1193
      %v1195 = vpop.f32.mrb[0].mxu0
      %v1196 = vpop.f32.mrb[0].mxu0
      %v1197 = vadd.f32 %v314, %v1196
      %v1198 = vpop.f32.mrb[0].mxu0
      %1199 = vmatprep.mubr.bf16.mxu0 0
      %1200 = vmatmul.mubr.bf16.gmra.mrb[0].mxu0 %v776
      %v1201 = vpop.f32.mrb[0].mxu0
      %v1202 = vadd.f32 %v314, %v1201
      %v1203 = vpop.f32.mrb[0].mxu0
      %v1204 = vpop.f32.mrb[0].mxu0
      %v1205 = vadd.f32 %v314, %v1204
      %v1206 = vpop.f32.mrb[0].mxu0
      %1207 = vmatprep.mubr.bf16.mxu0 0
      %1208 = vmatmul.mubr.bf16.gmra.mrb[0].mxu0 %v779
      %v1209 = vpop.f32.mrb[0].mxu0
      %v1210 = vadd.f32 %v314, %v1209
      %v1211 = vpop.f32.mrb[0].mxu0
      %v1212 = vpop.f32.mrb[0].mxu0
      %v1213 = vadd.f32 %v314, %v1212
      %v1214 = vpop.f32.mrb[0].mxu0
      %1215 = vmatprep.mubr.bf16.mxu0 0
      %1216 = vmatmul.mubr.bf16.gmra.mrb[0].mxu0 %v782
      %v1217 = vpop.f32.mrb[0].mxu0
      %v1218 = vadd.f32 %v314, %v1217
      %v1219 = vpop.f32.mrb[0].mxu0
      %v1220 = vpop.f32.mrb[0].mxu0
      %v1221 = vadd.f32 %v314, %v1220
      %v1222 = vpop.f32.mrb[0].mxu0
      %1223 = vmatprep.mubr.bf16.mxu0 0
      %1224 = vmatmul.mubr.bf16.gmra.mrb[0].mxu0 %v785
      %v1225 = vpop.f32.mrb[0].mxu0
      %v1226 = vadd.f32 %v314, %v1225
      %v1227 = vpop.f32.mrb[0].mxu0
      %v1228 = vpop.f32.mrb[0].mxu0
      %v1229 = vadd.f32 %v314, %v1228
      %v1230 = vpop.f32.mrb[0].mxu0
      %1231 = vmatprep.mubr.bf16.mxu0 0
      %1232 = vmatmul.mubr.bf16.gmra.mrb[0].mxu0 %v788
      %v1233 = vpop.f32.mrb[0].mxu0
      %v1234 = vadd.f32 %v314, %v1233
      %v1235 = vpop.f32.mrb[0].mxu0
      %v1236 = vpop.f32.mrb[0].mxu0
      %v1237 = vadd.f32 %v314, %v1236
      %v1238 = vpop.f32.mrb[0].mxu0
      %1239 = vmatprep.mubr.bf16.mxu0 0
      %1240 = vmatmul.mubr.bf16.gmra.mrb[0].mxu0 %v791
      %v1241 = vpop.f32.mrb[0].mxu0
      %v1242 = vadd.f32 %v314, %v1241
      %v1243 = vpop.f32.mrb[0].mxu0
      %v1244 = vpop.f32.mrb[0].mxu0
      %v1245 = vadd.f32 %v314, %v1244
      %v1246 = vpop.f32.mrb[0].mxu0
      %1247 = vmatprep.mubr.bf16.mxu0 0
      %1248 = vmatmul.mubr.bf16.gmra.mrb[0].mxu0 %v794
      %v1249 = vpop.f32.mrb[0].mxu0
      %v1250 = vadd.f32 %v314, %v1249
      %v1251 = vpop.f32.mrb[0].mxu0
      %v1252 = vpop.f32.mrb[0].mxu0
      %v1253 = vadd.f32 %v314, %v1252
      %v1254 = vpop.f32.mrb[0].mxu0
      %1255 = vmatprep.mubr.bf16.mxu0 0
      %1256 = vmatmul.mubr.bf16.gmra.mrb[0].mxu0 %v797
      %v1257 = vpop.f32.mrb[0].mxu0
      %v1258 = vadd.f32 %v314, %v1257
      %v1259 = vpop.f32.mrb[0].mxu0
      %v1260 = vpop.f32.mrb[0].mxu0
      %v1261 = vadd.f32 %v314, %v1260
      %v1262 = vpop.f32.mrb[0].mxu0
      %1263 = vmatprep.mubr.bf16.mxu0 0
      %1264 = vmatmul.mubr.bf16.gmra.mrb[0].mxu0 %v800
      %v1265 = vpop.f32.mrb[0].mxu0
      %v1266 = vadd.f32 %v314, %v1265
      %v1267 = vpop.f32.mrb[0].mxu0
      %v1268 = vpop.f32.mrb[0].mxu0
      %v1269 = vadd.f32 %v314, %v1268
      %v1270 = vpop.f32.mrb[0].mxu0
      %1271 = vmatprep.mubr.bf16.mxu0 0
      %1272 = vmatmul.mubr.bf16.gmra.mrb[0].mxu0 %v803
      %v1273 = vpop.f32.mrb[0].mxu0
      %v1274 = vadd.f32 %v314, %v1273
      %v1275 = vpop.f32.mrb[0].mxu0
      %v1276 = vpop.f32.mrb[0].mxu0
      %v1277 = vadd.f32 %v314, %v1276
      %v1278 = vpop.f32.mrb[0].mxu0
      %1279 = vmatprep.mubr.bf16.mxu0 0
      %1280 = vmatmul.mubr.bf16.gmra.mrb[0].mxu0 %v806
      %v1281 = vpop.f32.mrb[0].mxu0
      %v1282 = vadd.f32 %v314, %v1281
      %v1283 = vpop.f32.mrb[0].mxu0
      %v1284 = vpop.f32.mrb[0].mxu0
      %v1285 = vadd.f32 %v314, %v1284
      %v1286 = vpop.f32.mrb[0].mxu0
      %1287 = vmatprep.mubr.bf16.mxu0 0
      %1288 = vmatmul.mubr.bf16.gmra.mrb[0].mxu0 %v809
      %v1289 = vpop.f32.mrb[0].mxu0
      %v1290 = vadd.f32 %v314, %v1289
      %v1291 = vpop.f32.mrb[0].mxu0
      %v1292 = vpop.f32.mrb[0].mxu0
      %v1293 = vadd.f32 %v314, %v1292
      %v1294 = vpop.f32.mrb[0].mxu0
      %1295 = vmatprep.mubr.bf16.mxu0 0
      %1296 = vmatmul.mubr.bf16.gmra.mrb[0].mxu0 %v812
      %v1297 = vpop.f32.mrb[0].mxu0
      %v1298 = vadd.f32 %v314, %v1297
      %v1299 = vpop.f32.mrb[0].mxu0
      %v1300 = vpop.f32.mrb[0].mxu0
      %v1301 = vadd.f32 %v314, %v1300
      %v1302 = vpop.f32.mrb[0].mxu0
      %1303 = vmatprep.mubr.bf16.mxu0 0
      %1304 = vmatmul.mubr.bf16.gmra.mrb[0].mxu0 %v815
      %v1305 = vpop.f32.mrb[0].mxu0
      %v1306 = vadd.f32 %v314, %v1305
      %v1307 = vpop.f32.mrb[0].mxu0
      %v1308 = vpop.f32.mrb[0].mxu0
      %v1309 = vadd.f32 %v314, %v1308
      %v1310 = vpop.f32.mrb[0].mxu0
      %1311 = vmatprep.mubr.bf16.mxu0 0
      %1312 = vmatmul.mubr.bf16.gmra.mrb[0].mxu0 %v818
      %v1313 = vpop.f32.mrb[0].mxu0
      %v1314 = vadd.f32 %v314, %v1313
      %v1315 = vpop.f32.mrb[0].mxu0
      %v1316 = vpop.f32.mrb[0].mxu0
      %v1317 = vadd.f32 %v314, %v1316
      %v1318 = vpop.f32.mrb[0].mxu0
      %1319 = vmatprep.mubr.bf16.mxu0 0
      %1320 = vmatmul.mubr.bf16.gmra.mrb[0].mxu0 %v821
      %v1321 = vpop.f32.mrb[0].mxu0
      %v1322 = vadd.f32 %v314, %v1321
      %v1323 = vpop.f32.mrb[0].mxu0
      %v1324 = vpop.f32.mrb[0].mxu0
      %v1325 = vadd.f32 %v314, %v1324
      %v1326 = vpop.f32.mrb[0].mxu0
      %1327 = vmatprep.mubr.bf16.mxu0 0
      %1328 = vmatmul.mubr.bf16.gmra.mrb[0].mxu0 %v824
      %v1329 = vpop.f32.mrb[0].mxu0
      %v1330 = vadd.f32 %v314, %v1329
      %v1331 = vpop.f32.mrb[0].mxu0
      %v1332 = vpop.f32.mrb[0].mxu0
      %v1333 = vadd.f32 %v314, %v1332
      %v1334 = vpop.f32.mrb[0].mxu0
      %1335 = vmatprep.mubr.bf16.mxu0 0
      %1336 = vmatmul.mubr.bf16.gmra.mrb[0].mxu0 %v827
      %v1337 = vpop.f32.mrb[0].mxu0
      %v1338 = vadd.f32 %v314, %v1337
      %v1339 = vpop.f32.mrb[0].mxu0
      %v1340 = vpop.f32.mrb[0].mxu0
      %v1341 = vadd.f32 %v314, %v1340
      %v1342 = vpop.f32.mrb[0].mxu0
      %1343 = vmatprep.mubr.bf16.mxu0 0
      %1344 = vmatmul.mubr.bf16.gmra.mrb[0].mxu0 %v830
      %v1345 = vpop.f32.mrb[0].mxu0
      %v1346 = vadd.f32 %v314, %v1345
      %v1347 = vpop.f32.mrb[0].mxu0
      %v1348 = vpop.f32.mrb[0].mxu0
      %v1349 = vadd.f32 %v314, %v1348
      %v1350 = vpop.f32.mrb[0].mxu0
      %1351 = vmatprep.mubr.bf16.mxu0 0
      %1352 = vmatmul.mubr.bf16.gmra.mrb[0].mxu0 %v833
      %v1353 = vpop.f32.mrb[0].mxu0
      %v1354 = vadd.f32 %v314, %v1353
      %v1355 = vpop.f32.mrb[0].mxu0
      %v1356 = vpop.f32.mrb[0].mxu0
      %v1357 = vadd.f32 %v314, %v1356
      %v1358 = vpop.f32.mrb[0].mxu0
      %1359 = vmatprep.mubr.bf16.mxu0 0
      %1360 = vmatmul.mubr.bf16.gmra.mrb[0].mxu0 %v836
      %v1361 = vpop.f32.mrb[0].mxu0
      %v1362 = vadd.f32 %v314, %v1361
      %v1363 = vpop.f32.mrb[0].mxu0
      %v1364 = vpop.f32.mrb[0].mxu0
      %v1365 = vadd.f32 %v314, %v1364
      %v1366 = vpop.f32.mrb[0].mxu0
      %1367 = vmatprep.mubr.bf16.mxu0 0
      %1368 = vmatmul.mubr.bf16.gmra.mrb[0].mxu0 %v839
      %v1369 = vpop.f32.mrb[0].mxu0
      %v1370 = vadd.f32 %v314, %v1369
      %v1371 = vpop.f32.mrb[0].mxu0
      %v1372 = vpop.f32.mrb[0].mxu0
      %v1373 = vadd.f32 %v314, %v1372
      %v1374 = vpop.f32.mrb[0].mxu0
      %1375 = vmatprep.mubr.bf16.mxu0 0
      %1376 = vmatmul.mubr.bf16.gmra.mrb[0].mxu0 %v842
      %v1377 = vpop.f32.mrb[0].mxu0
      %v1378 = vadd.f32 %v314, %v1377
      %v1379 = vpop.f32.mrb[0].mxu0
      %v1380 = vpop.f32.mrb[0].mxu0
      %v1381 = vadd.f32 %v314, %v1380
      %v1382 = vpop.f32.mrb[0].mxu0
      %1383 = vmatprep.mubr.bf16.mxu0 0
      %1384 = vmatmul.mubr.bf16.gmra.mrb[0].mxu0 %v845
      %v1385 = vpop.f32.mrb[0].mxu0
      %v1386 = vadd.f32 %v314, %v1385
      %v1387 = vpop.f32.mrb[0].mxu0
      %v1388 = vpop.f32.mrb[0].mxu0
      %v1389 = vadd.f32 %v314, %v1388
      %v1390 = vpop.f32.mrb[0].mxu0
      %1391 = vdwg.mxu0
      %vm1392 = vcmp.ge.f32.partialorder %v882, 0.0
      %vm1393 = vcmp.ge.f32.partialorder %v885, 0.0
      %vm1394 = vcmp.ge.f32.partialorder %v890, 0.0
      %vm1395 = vcmp.ge.f32.partialorder %v893, 0.0
      %vm1396 = vcmp.ge.f32.partialorder %v898, 0.0
      %vm1397 = vcmp.ge.f32.partialorder %v901, 0.0
      %vm1398 = vcmp.ge.f32.partialorder %v906, 0.0
      %vm1399 = vcmp.ge.f32.partialorder %v909, 0.0
      %vm1400 = vcmp.ge.f32.partialorder %v914, 0.0
      %vm1401 = vcmp.ge.f32.partialorder %v917, 0.0
      %vm1402 = vcmp.ge.f32.partialorder %v922, 0.0
      %vm1403 = vcmp.ge.f32.partialorder %v925, 0.0
      %vm1404 = vcmp.ge.f32.partialorder %v930, 0.0
      %vm1405 = vcmp.ge.f32.partialorder %v933, 0.0
      %vm1406 = vcmp.ge.f32.partialorder %v938, 0.0
      %vm1407 = vcmp.ge.f32.partialorder %v941, 0.0
      %vm1408 = vcmp.ge.f32.partialorder %v946, 0.0
      %vm1409 = vcmp.ge.f32.partialorder %v949, 0.0
      %vm1410 = vcmp.ge.f32.partialorder %v954, 0.0
      %vm1411 = vcmp.ge.f32.partialorder %v957, 0.0
      %vm1412 = vcmp.ge.f32.partialorder %v962, 0.0
      %vm1413 = vcmp.ge.f32.partialorder %v965, 0.0
      %vm1414 = vcmp.ge.f32.partialorder %v970, 0.0
      %vm1415 = vcmp.ge.f32.partialorder %v973, 0.0
      %vm1416 = vcmp.ge.f32.partialorder %v978, 0.0
      %vm1417 = vcmp.ge.f32.partialorder %v981, 0.0
      %vm1418 = vcmp.ge.f32.partialorder %v986, 0.0
      %vm1419 = vcmp.ge.f32.partialorder %v989, 0.0
      %vm1420 = vcmp.ge.f32.partialorder %v994, 0.0
      %vm1421 = vcmp.ge.f32.partialorder %v997, 0.0
      %vm1422 = vcmp.ge.f32.partialorder %v1002, 0.0
      %vm1423 = vcmp.ge.f32.partialorder %v1005, 0.0
      %vm1424 = vcmp.ge.f32.partialorder %v1010, 0.0
      %vm1425 = vcmp.ge.f32.partialorder %v1013, 0.0
      %vm1426 = vcmp.ge.f32.partialorder %v1018, 0.0
      %vm1427 = vcmp.ge.f32.partialorder %v1021, 0.0
      %vm1428 = vcmp.ge.f32.partialorder %v1026, 0.0
      %vm1429 = vcmp.ge.f32.partialorder %v1029, 0.0
      %vm1430 = vcmp.ge.f32.partialorder %v1034, 0.0
      %vm1431 = vcmp.ge.f32.partialorder %v1037, 0.0
      %vm1432 = vcmp.ge.f32.partialorder %v1042, 0.0
      %vm1433 = vcmp.ge.f32.partialorder %v1045, 0.0
      %vm1434 = vcmp.ge.f32.partialorder %v1050, 0.0
      %vm1435 = vcmp.ge.f32.partialorder %v1053, 0.0
      %vm1436 = vcmp.ge.f32.partialorder %v1058, 0.0
      %vm1437 = vcmp.ge.f32.partialorder %v1061, 0.0
      %vm1438 = vcmp.ge.f32.partialorder %v1066, 0.0
      %vm1439 = vcmp.ge.f32.partialorder %v1069, 0.0
      %vm1440 = vcmp.ge.f32.partialorder %v1074, 0.0
      %vm1441 = vcmp.ge.f32.partialorder %v1077, 0.0
      %vm1442 = vcmp.ge.f32.partialorder %v1082, 0.0
      %vm1443 = vcmp.ge.f32.partialorder %v1085, 0.0
      %vm1444 = vcmp.ge.f32.partialorder %v1090, 0.0
      %vm1445 = vcmp.ge.f32.partialorder %v1093, 0.0
      %vm1446 = vcmp.ge.f32.partialorder %v1098, 0.0
      %vm1447 = vcmp.ge.f32.partialorder %v1101, 0.0
      %vm1448 = vcmp.ge.f32.partialorder %v1106, 0.0
      %vm1449 = vcmp.ge.f32.partialorder %v1109, 0.0
      %vm1450 = vcmp.ge.f32.partialorder %v1114, 0.0
      %vm1451 = vcmp.ge.f32.partialorder %v1117, 0.0
      %vm1452 = vcmp.ge.f32.partialorder %v1122, 0.0
      %vm1453 = vcmp.ge.f32.partialorder %v1125, 0.0
      %vm1454 = vcmp.ge.f32.partialorder %v1130, 0.0
      %vm1455 = vcmp.ge.f32.partialorder %v1133, 0.0
      %vm1456 = vcmp.ge.f32.partialorder %v1138, 0.0
      %vm1457 = vcmp.ge.f32.partialorder %v1141, 0.0
      %vm1458 = vcmp.ge.f32.partialorder %v1146, 0.0
      %vm1459 = vcmp.ge.f32.partialorder %v1149, 0.0
      %vm1460 = vcmp.ge.f32.partialorder %v1154, 0.0
      %vm1461 = vcmp.ge.f32.partialorder %v1157, 0.0
      %vm1462 = vcmp.ge.f32.partialorder %v1162, 0.0
      %vm1463 = vcmp.ge.f32.partialorder %v1165, 0.0
      %vm1464 = vcmp.ge.f32.partialorder %v1170, 0.0
      %vm1465 = vcmp.ge.f32.partialorder %v1173, 0.0
      %vm1466 = vcmp.ge.f32.partialorder %v1178, 0.0
      %vm1467 = vcmp.ge.f32.partialorder %v1181, 0.0
      %vm1468 = vcmp.ge.f32.partialorder %v1186, 0.0
      %vm1469 = vcmp.ge.f32.partialorder %v1189, 0.0
      %vm1470 = vcmp.ge.f32.partialorder %v1194, 0.0
      %vm1471 = vcmp.ge.f32.partialorder %v1197, 0.0
      %vm1472 = vcmp.ge.f32.partialorder %v1202, 0.0
      %vm1473 = vcmp.ge.f32.partialorder %v1205, 0.0
      %vm1474 = vcmp.ge.f32.partialorder %v1210, 0.0
      %vm1475 = vcmp.ge.f32.partialorder %v1213, 0.0
      %vm1476 = vcmp.ge.f32.partialorder %v1218, 0.0
      %vm1477 = vcmp.ge.f32.partialorder %v1221, 0.0
      %vm1478 = vcmp.ge.f32.partialorder %v1226, 0.0
      %vm1479 = vcmp.ge.f32.partialorder %v1229, 0.0
      %vm1480 = vcmp.ge.f32.partialorder %v1234, 0.0
      %vm1481 = vcmp.ge.f32.partialorder %v1237, 0.0
      %vm1482 = vcmp.ge.f32.partialorder %v1242, 0.0
      %vm1483 = vcmp.ge.f32.partialorder %v1245, 0.0
      %vm1484 = vcmp.ge.f32.partialorder %v1250, 0.0
      %vm1485 = vcmp.ge.f32.partialorder %v1253, 0.0
      %vm1486 = vcmp.ge.f32.partialorder %v1258, 0.0
      %vm1487 = vcmp.ge.f32.partialorder %v1261, 0.0
      %vm1488 = vcmp.ge.f32.partialorder %v1266, 0.0
      %vm1489 = vcmp.ge.f32.partialorder %v1269, 0.0
      %vm1490 = vcmp.ge.f32.partialorder %v1274, 0.0
      %vm1491 = vcmp.ge.f32.partialorder %v1277, 0.0
      %vm1492 = vcmp.ge.f32.partialorder %v1282, 0.0
      %vm1493 = vcmp.ge.f32.partialorder %v1285, 0.0
      %vm1494 = vcmp.ge.f32.partialorder %v1290, 0.0
      %vm1495 = vcmp.ge.f32.partialorder %v1293, 0.0
      %vm1496 = vcmp.ge.f32.partialorder %v1298, 0.0
      %vm1497 = vcmp.ge.f32.partialorder %v1301, 0.0
      %vm1498 = vcmp.ge.f32.partialorder %v1306, 0.0
      %vm1499 = vcmp.ge.f32.partialorder %v1309, 0.0
      %vm1500 = vcmp.ge.f32.partialorder %v1314, 0.0
      %vm1501 = vcmp.ge.f32.partialorder %v1317, 0.0
      %vm1502 = vcmp.ge.f32.partialorder %v1322, 0.0
      %vm1503 = vcmp.ge.f32.partialorder %v1325, 0.0
      %vm1504 = vcmp.ge.f32.partialorder %v1330, 0.0
      %vm1505 = vcmp.ge.f32.partialorder %v1333, 0.0
      %vm1506 = vcmp.ge.f32.partialorder %v1338, 0.0
      %vm1507 = vcmp.ge.f32.partialorder %v1341, 0.0
      %vm1508 = vcmp.ge.f32.partialorder %v1346, 0.0
      %vm1509 = vcmp.ge.f32.partialorder %v1349, 0.0
      %vm1510 = vcmp.ge.f32.partialorder %v1354, 0.0
      %vm1511 = vcmp.ge.f32.partialorder %v1357, 0.0
      %vm1512 = vcmp.ge.f32.partialorder %v1362, 0.0
      %vm1513 = vcmp.ge.f32.partialorder %v1365, 0.0
      %vm1514 = vcmp.ge.f32.partialorder %v1370, 0.0
      %vm1515 = vcmp.ge.f32.partialorder %v1373, 0.0
      %vm1516 = vcmp.ge.f32.partialorder %v1378, 0.0
      %vm1517 = vcmp.ge.f32.partialorder %v1381, 0.0
      %vm1518 = vcmp.ge.f32.partialorder %v1386, 0.0
      %vm1519 = vcmp.ge.f32.partialorder %v1389, 0.0
      %v1520 = vmul.f32 %v882, 0.2
      %v1521 = vmul.f32 %v885, 0.2
      %v1522 = vmul.f32 %v890, 0.2
      %v1523 = vmul.f32 %v893, 0.2
      %v1524 = vmul.f32 %v898, 0.2
      %v1525 = vmul.f32 %v901, 0.2
      %v1526 = vmul.f32 %v906, 0.2
      %v1527 = vmul.f32 %v909, 0.2
      %v1528 = vmul.f32 %v914, 0.2
      %v1529 = vmul.f32 %v917, 0.2
      %v1530 = vmul.f32 %v922, 0.2
      %v1531 = vmul.f32 %v925, 0.2
      %v1532 = vmul.f32 %v930, 0.2
      %v1533 = vmul.f32 %v933, 0.2
      %v1534 = vmul.f32 %v938, 0.2
      %v1535 = vmul.f32 %v941, 0.2
      %v1536 = vmul.f32 %v946, 0.2
      %v1537 = vmul.f32 %v949, 0.2
      %v1538 = vmul.f32 %v954, 0.2
      %v1539 = vmul.f32 %v957, 0.2
      %v1540 = vmul.f32 %v962, 0.2
      %v1541 = vmul.f32 %v965, 0.2
      %v1542 = vmul.f32 %v970, 0.2
      %v1543 = vmul.f32 %v973, 0.2
      %v1544 = vmul.f32 %v978, 0.2
      %v1545 = vmul.f32 %v981, 0.2
      %v1546 = vmul.f32 %v986, 0.2
      %v1547 = vmul.f32 %v989, 0.2
      %v1548 = vmul.f32 %v994, 0.2
      %v1549 = vmul.f32 %v997, 0.2
      %v1550 = vmul.f32 %v1002, 0.2
      %v1551 = vmul.f32 %v1005, 0.2
      %v1552 = vmul.f32 %v1010, 0.2
      %v1553 = vmul.f32 %v1013, 0.2
      %v1554 = vmul.f32 %v1018, 0.2
      %v1555 = vmul.f32 %v1021, 0.2
      %v1556 = vmul.f32 %v1026, 0.2
      %v1557 = vmul.f32 %v1029, 0.2
      %v1558 = vmul.f32 %v1034, 0.2
      %v1559 = vmul.f32 %v1037, 0.2
      %v1560 = vmul.f32 %v1042, 0.2
      %v1561 = vmul.f32 %v1045, 0.2
      %v1562 = vmul.f32 %v1050, 0.2
      %v1563 = vmul.f32 %v1053, 0.2
      %v1564 = vmul.f32 %v1058, 0.2
      %v1565 = vmul.f32 %v1061, 0.2
      %v1566 = vmul.f32 %v1066, 0.2
      %v1567 = vmul.f32 %v1069, 0.2
      %v1568 = vmul.f32 %v1074, 0.2
      %v1569 = vmul.f32 %v1077, 0.2
      %v1570 = vmul.f32 %v1082, 0.2
      %v1571 = vmul.f32 %v1085, 0.2
      %v1572 = vmul.f32 %v1090, 0.2
      %v1573 = vmul.f32 %v1093, 0.2
      %v1574 = vmul.f32 %v1098, 0.2
      %v1575 = vmul.f32 %v1101, 0.2
      %v1576 = vmul.f32 %v1106, 0.2
      %v1577 = vmul.f32 %v1109, 0.2
      %v1578 = vmul.f32 %v1114, 0.2
      %v1579 = vmul.f32 %v1117, 0.2
      %v1580 = vmul.f32 %v1122, 0.2
      %v1581 = vmul.f32 %v1125, 0.2
      %v1582 = vmul.f32 %v1130, 0.2
      %v1583 = vmul.f32 %v1133, 0.2
      %v1584 = vmul.f32 %v1138, 0.2
      %v1585 = vmul.f32 %v1141, 0.2
      %v1586 = vmul.f32 %v1146, 0.2
      %v1587 = vmul.f32 %v1149, 0.2
      %v1588 = vmul.f32 %v1154, 0.2
      %v1589 = vmul.f32 %v1157, 0.2
      %v1590 = vmul.f32 %v1162, 0.2
      %v1591 = vmul.f32 %v1165, 0.2
      %v1592 = vmul.f32 %v1170, 0.2
      %v1593 = vmul.f32 %v1173, 0.2
      %v1594 = vmul.f32 %v1178, 0.2
      %v1595 = vmul.f32 %v1181, 0.2
      %v1596 = vmul.f32 %v1186, 0.2
      %v1597 = vmul.f32 %v1189, 0.2
      %v1598 = vmul.f32 %v1194, 0.2
      %v1599 = vmul.f32 %v1197, 0.2
      %v1600 = vmul.f32 %v1202, 0.2
      %v1601 = vmul.f32 %v1205, 0.2
      %v1602 = vmul.f32 %v1210, 0.2
      %v1603 = vmul.f32 %v1213, 0.2
      %v1604 = vmul.f32 %v1218, 0.2
      %v1605 = vmul.f32 %v1221, 0.2
      %v1606 = vmul.f32 %v1226, 0.2
      %v1607 = vmul.f32 %v1229, 0.2
      %v1608 = vmul.f32 %v1234, 0.2
      %v1609 = vmul.f32 %v1237, 0.2
      %v1610 = vmul.f32 %v1242, 0.2
      %v1611 = vmul.f32 %v1245, 0.2
      %v1612 = vmul.f32 %v1250, 0.2
      %v1613 = vmul.f32 %v1253, 0.2
      %v1614 = vmul.f32 %v1258, 0.2
      %v1615 = vmul.f32 %v1261, 0.2
      %v1616 = vmul.f32 %v1266, 0.2
      %v1617 = vmul.f32 %v1269, 0.2
      %v1618 = vmul.f32 %v1274, 0.2
      %v1619 = vmul.f32 %v1277, 0.2
      %v1620 = vmul.f32 %v1282, 0.2
      %v1621 = vmul.f32 %v1285, 0.2
      %v1622 = vmul.f32 %v1290, 0.2
      %v1623 = vmul.f32 %v1293, 0.2
      %v1624 = vmul.f32 %v1298, 0.2
      %v1625 = vmul.f32 %v1301, 0.2
      %v1626 = vmul.f32 %v1306, 0.2
      %v1627 = vmul.f32 %v1309, 0.2
      %v1628 = vmul.f32 %v1314, 0.2
      %v1629 = vmul.f32 %v1317, 0.2
      %v1630 = vmul.f32 %v1322, 0.2
      %v1631 = vmul.f32 %v1325, 0.2
      %v1632 = vmul.f32 %v1330, 0.2
      %v1633 = vmul.f32 %v1333, 0.2
      %v1634 = vmul.f32 %v1338, 0.2
      %v1635 = vmul.f32 %v1341, 0.2
      %v1636 = vmul.f32 %v1346, 0.2
      %v1637 = vmul.f32 %v1349, 0.2
      %v1638 = vmul.f32 %v1354, 0.2
      %v1639 = vmul.f32 %v1357, 0.2
      %v1640 = vmul.f32 %v1362, 0.2
      %v1641 = vmul.f32 %v1365, 0.2
      %v1642 = vmul.f32 %v1370, 0.2
      %v1643 = vmul.f32 %v1373, 0.2
      %v1644 = vmul.f32 %v1378, 0.2
      %v1645 = vmul.f32 %v1381, 0.2
      %v1646 = vmul.f32 %v1386, 0.2
      %v1647 = vmul.f32 %v1389, 0.2
      %v1648 = vsel %vm1392, %v882, %v1520
      %v1649 = vsel %vm1393, %v885, %v1521
      %v1650 = vsel %vm1394, %v890, %v1522
      %v1651 = vsel %vm1395, %v893, %v1523
      %v1652 = vsel %vm1396, %v898, %v1524
      %v1653 = vsel %vm1397, %v901, %v1525
      %v1654 = vsel %vm1398, %v906, %v1526
      %v1655 = vsel %vm1399, %v909, %v1527
      %v1656 = vsel %vm1400, %v914, %v1528
      %v1657 = vsel %vm1401, %v917, %v1529
      %v1658 = vsel %vm1402, %v922, %v1530
      %v1659 = vsel %vm1403, %v925, %v1531
      %v1660 = vsel %vm1404, %v930, %v1532
      %v1661 = vsel %vm1405, %v933, %v1533
      %v1662 = vsel %vm1406, %v938, %v1534
      %v1663 = vsel %vm1407, %v941, %v1535
      %v1664 = vsel %vm1408, %v946, %v1536
      %v1665 = vsel %vm1409, %v949, %v1537
      %v1666 = vsel %vm1410, %v954, %v1538
      %v1667 = vsel %vm1411, %v957, %v1539
      %v1668 = vsel %vm1412, %v962, %v1540
      %v1669 = vsel %vm1413, %v965, %v1541
      %v1670 = vsel %vm1414, %v970, %v1542
      %v1671 = vsel %vm1415, %v973, %v1543
      %v1672 = vsel %vm1416, %v978, %v1544
      %v1673 = vsel %vm1417, %v981, %v1545
      %v1674 = vsel %vm1418, %v986, %v1546
      %v1675 = vsel %vm1419, %v989, %v1547
      %v1676 = vsel %vm1420, %v994, %v1548
      %v1677 = vsel %vm1421, %v997, %v1549
      %v1678 = vsel %vm1422, %v1002, %v1550
      %v1679 = vsel %vm1423, %v1005, %v1551
      %v1680 = vsel %vm1424, %v1010, %v1552
      %v1681 = vsel %vm1425, %v1013, %v1553
      %v1682 = vsel %vm1426, %v1018, %v1554
      %v1683 = vsel %vm1427, %v1021, %v1555
      %v1684 = vsel %vm1428, %v1026, %v1556
      %v1685 = vsel %vm1429, %v1029, %v1557
      %v1686 = vsel %vm1430, %v1034, %v1558
      %v1687 = vsel %vm1431, %v1037, %v1559
      %v1688 = vsel %vm1432, %v1042, %v1560
      %v1689 = vsel %vm1433, %v1045, %v1561
      %v1690 = vsel %vm1434, %v1050, %v1562
      %v1691 = vsel %vm1435, %v1053, %v1563
      %v1692 = vsel %vm1436, %v1058, %v1564
      %v1693 = vsel %vm1437, %v1061, %v1565
      %v1694 = vsel %vm1438, %v1066, %v1566
      %v1695 = vsel %vm1439, %v1069, %v1567
      %v1696 = vsel %vm1440, %v1074, %v1568
      %v1697 = vsel %vm1441, %v1077, %v1569
      %v1698 = vsel %vm1442, %v1082, %v1570
      %v1699 = vsel %vm1443, %v1085, %v1571
      %v1700 = vsel %vm1444, %v1090, %v1572
      %v1701 = vsel %vm1445, %v1093, %v1573
      %v1702 = vsel %vm1446, %v1098, %v1574
      %v1703 = vsel %vm1447, %v1101, %v1575
      %v1704 = vsel %vm1448, %v1106, %v1576
      %v1705 = vsel %vm1449, %v1109, %v1577
      %v1706 = vsel %vm1450, %v1114, %v1578
      %v1707 = vsel %vm1451, %v1117, %v1579
      %v1708 = vsel %vm1452, %v1122, %v1580
      %v1709 = vsel %vm1453, %v1125, %v1581
      %v1710 = vsel %vm1454, %v1130, %v1582
      %v1711 = vsel %vm1455, %v1133, %v1583
      %v1712 = vsel %vm1456, %v1138, %v1584
      %v1713 = vsel %vm1457, %v1141, %v1585
      %v1714 = vsel %vm1458, %v1146, %v1586
      %v1715 = vsel %vm1459, %v1149, %v1587
      %v1716 = vsel %vm1460, %v1154, %v1588
      %v1717 = vsel %vm1461, %v1157, %v1589
      %v1718 = vsel %vm1462, %v1162, %v1590
      %v1719 = vsel %vm1463, %v1165, %v1591
      %v1720 = vsel %vm1464, %v1170, %v1592
      %v1721 = vsel %vm1465, %v1173, %v1593
      %v1722 = vsel %vm1466, %v1178, %v1594
      %v1723 = vsel %vm1467, %v1181, %v1595
      %v1724 = vsel %vm1468, %v1186, %v1596
      %v1725 = vsel %vm1469, %v1189, %v1597
      %v1726 = vsel %vm1470, %v1194, %v1598
      %v1727 = vsel %vm1471, %v1197, %v1599
      %v1728 = vsel %vm1472, %v1202, %v1600
      %v1729 = vsel %vm1473, %v1205, %v1601
      %v1730 = vsel %vm1474, %v1210, %v1602
      %v1731 = vsel %vm1475, %v1213, %v1603
      %v1732 = vsel %vm1476, %v1218, %v1604
      %v1733 = vsel %vm1477, %v1221, %v1605
      %v1734 = vsel %vm1478, %v1226, %v1606
      %v1735 = vsel %vm1479, %v1229, %v1607
      %v1736 = vsel %vm1480, %v1234, %v1608
      %v1737 = vsel %vm1481, %v1237, %v1609
      %v1738 = vsel %vm1482, %v1242, %v1610
      %v1739 = vsel %vm1483, %v1245, %v1611
      %v1740 = vsel %vm1484, %v1250, %v1612
      %v1741 = vsel %vm1485, %v1253, %v1613
      %v1742 = vsel %vm1486, %v1258, %v1614
      %v1743 = vsel %vm1487, %v1261, %v1615
      %v1744 = vsel %vm1488, %v1266, %v1616
      %v1745 = vsel %vm1489, %v1269, %v1617
      %v1746 = vsel %vm1490, %v1274, %v1618
      %v1747 = vsel %vm1491, %v1277, %v1619
      %v1748 = vsel %vm1492, %v1282, %v1620
      %v1749 = vsel %vm1493, %v1285, %v1621
      %v1750 = vsel %vm1494, %v1290, %v1622
      %v1751 = vsel %vm1495, %v1293, %v1623
      %v1752 = vsel %vm1496, %v1298, %v1624
      %v1753 = vsel %vm1497, %v1301, %v1625
      %v1754 = vsel %vm1498, %v1306, %v1626
      %v1755 = vsel %vm1499, %v1309, %v1627
      %v1756 = vsel %vm1500, %v1314, %v1628
      %v1757 = vsel %vm1501, %v1317, %v1629
      %v1758 = vsel %vm1502, %v1322, %v1630
      %v1759 = vsel %vm1503, %v1325, %v1631
      %v1760 = vsel %vm1504, %v1330, %v1632
      %v1761 = vsel %vm1505, %v1333, %v1633
      %v1762 = vsel %vm1506, %v1338, %v1634
      %v1763 = vsel %vm1507, %v1341, %v1635
      %v1764 = vsel %vm1508, %v1346, %v1636
      %v1765 = vsel %vm1509, %v1349, %v1637
      %v1766 = vsel %vm1510, %v1354, %v1638
      %v1767 = vsel %vm1511, %v1357, %v1639
      %v1768 = vsel %vm1512, %v1362, %v1640
      %v1769 = vsel %vm1513, %v1365, %v1641
      %v1770 = vsel %vm1514, %v1370, %v1642
      %v1771 = vsel %vm1515, %v1373, %v1643
      %v1772 = vsel %vm1516, %v1378, %v1644
      %v1773 = vsel %vm1517, %v1381, %v1645
      %v1774 = vsel %vm1518, %v1386, %v1646
      %v1775 = vsel %vm1519, %v1389, %v1647
      %v1776 = vpack.c.bf16 %v1649, %v1648
      %v1777 = vpack.c.bf16 %v1651, %v1650
      %v1778 = vpack.c.bf16 %v1653, %v1652
      %v1779 = vpack.c.bf16 %v1655, %v1654
      %v1780 = vpack.c.bf16 %v1657, %v1656
      %v1781 = vpack.c.bf16 %v1659, %v1658
      %v1782 = vpack.c.bf16 %v1661, %v1660
      %v1783 = vpack.c.bf16 %v1663, %v1662
      %v1784 = vpack.c.bf16 %v1665, %v1664
      %v1785 = vpack.c.bf16 %v1667, %v1666
      %v1786 = vpack.c.bf16 %v1669, %v1668
      %v1787 = vpack.c.bf16 %v1671, %v1670
      %v1788 = vpack.c.bf16 %v1673, %v1672
      %v1789 = vpack.c.bf16 %v1675, %v1674
      %v1790 = vpack.c.bf16 %v1677, %v1676
      %v1791 = vpack.c.bf16 %v1679, %v1678
      %v1792 = vpack.c.bf16 %v1681, %v1680
      %v1793 = vpack.c.bf16 %v1683, %v1682
      %v1794 = vpack.c.bf16 %v1685, %v1684
      %v1795 = vpack.c.bf16 %v1687, %v1686
      %v1796 = vpack.c.bf16 %v1689, %v1688
      %v1797 = vpack.c.bf16 %v1691, %v1690
      %v1798 = vpack.c.bf16 %v1693, %v1692
      %v1799 = vpack.c.bf16 %v1695, %v1694
      %v1800 = vpack.c.bf16 %v1697, %v1696
      %v1801 = vpack.c.bf16 %v1699, %v1698
      %v1802 = vpack.c.bf16 %v1701, %v1700
      %v1803 = vpack.c.bf16 %v1703, %v1702
      %v1804 = vpack.c.bf16 %v1705, %v1704
      %v1805 = vpack.c.bf16 %v1707, %v1706
      %v1806 = vpack.c.bf16 %v1709, %v1708
      %v1807 = vpack.c.bf16 %v1711, %v1710
      %v1808 = vpack.c.bf16 %v1713, %v1712
      %v1809 = vpack.c.bf16 %v1715, %v1714
      %v1810 = vpack.c.bf16 %v1717, %v1716
      %v1811 = vpack.c.bf16 %v1719, %v1718
      %v1812 = vpack.c.bf16 %v1721, %v1720
      %v1813 = vpack.c.bf16 %v1723, %v1722
      %v1814 = vpack.c.bf16 %v1725, %v1724
      %v1815 = vpack.c.bf16 %v1727, %v1726
      %v1816 = vpack.c.bf16 %v1729, %v1728
      %v1817 = vpack.c.bf16 %v1731, %v1730
      %v1818 = vpack.c.bf16 %v1733, %v1732
      %v1819 = vpack.c.bf16 %v1735, %v1734
      %v1820 = vpack.c.bf16 %v1737, %v1736
      %v1821 = vpack.c.bf16 %v1739, %v1738
      %v1822 = vpack.c.bf16 %v1741, %v1740
      %v1823 = vpack.c.bf16 %v1743, %v1742
      %v1824 = vpack.c.bf16 %v1745, %v1744
      %v1825 = vpack.c.bf16 %v1747, %v1746
      %v1826 = vpack.c.bf16 %v1749, %v1748
      %v1827 = vpack.c.bf16 %v1751, %v1750
      %v1828 = vpack.c.bf16 %v1753, %v1752
      %v1829 = vpack.c.bf16 %v1755, %v1754
      %v1830 = vpack.c.bf16 %v1757, %v1756
      %v1831 = vpack.c.bf16 %v1759, %v1758
      %v1832 = vpack.c.bf16 %v1761, %v1760
      %v1833 = vpack.c.bf16 %v1763, %v1762
      %v1834 = vpack.c.bf16 %v1765, %v1764
      %v1835 = vpack.c.bf16 %v1767, %v1766
      %v1836 = vpack.c.bf16 %v1769, %v1768
      %v1837 = vpack.c.bf16 %v1771, %v1770
      %v1838 = vpack.c.bf16 %v1773, %v1772
      %v1839 = vpack.c.bf16 %v1775, %v1774
      %v1904 = vunpack.c.l.b16 %v1776
      %v1905 = vunpack.c.h.b16 %v1776
      %v1906 = vunpack.c.l.b16 %v1777
      %v1907 = vunpack.c.h.b16 %v1777
      %v1908 = vunpack.c.l.b16 %v1778
      %v1909 = vunpack.c.h.b16 %v1778
      %v1910 = vunpack.c.l.b16 %v1779
      %v1911 = vunpack.c.h.b16 %v1779
      %v1912 = vunpack.c.l.b16 %v1780
      %v1913 = vunpack.c.h.b16 %v1780
      %v1914 = vunpack.c.l.b16 %v1781
      %v1915 = vunpack.c.h.b16 %v1781
      %v1916 = vunpack.c.l.b16 %v1782
      %v1917 = vunpack.c.h.b16 %v1782
      %v1918 = vunpack.c.l.b16 %v1783
      %v1919 = vunpack.c.h.b16 %v1783
      %v1920 = vunpack.c.l.b16 %v1784
      %v1921 = vunpack.c.h.b16 %v1784
      %v1922 = vunpack.c.l.b16 %v1785
      %v1923 = vunpack.c.h.b16 %v1785
      %v1924 = vunpack.c.l.b16 %v1786
      %v1925 = vunpack.c.h.b16 %v1786
      %v1926 = vunpack.c.l.b16 %v1787
      %v1927 = vunpack.c.h.b16 %v1787
      %v1928 = vunpack.c.l.b16 %v1788
      %v1929 = vunpack.c.h.b16 %v1788
      %v1930 = vunpack.c.l.b16 %v1789
      %v1931 = vunpack.c.h.b16 %v1789
      %v1932 = vunpack.c.l.b16 %v1790
      %v1933 = vunpack.c.h.b16 %v1790
      %v1934 = vunpack.c.l.b16 %v1791
      %v1935 = vunpack.c.h.b16 %v1791
      %v1936 = vunpack.c.l.b16 %v1792
      %v1937 = vunpack.c.h.b16 %v1792
      %v1938 = vunpack.c.l.b16 %v1793
      %v1939 = vunpack.c.h.b16 %v1793
      %v1940 = vunpack.c.l.b16 %v1794
      %v1941 = vunpack.c.h.b16 %v1794
      %v1942 = vunpack.c.l.b16 %v1795
      %v1943 = vunpack.c.h.b16 %v1795
      %v1944 = vunpack.c.l.b16 %v1796
      %v1945 = vunpack.c.h.b16 %v1796
      %v1946 = vunpack.c.l.b16 %v1797
      %v1947 = vunpack.c.h.b16 %v1797
      %v1948 = vunpack.c.l.b16 %v1798
      %v1949 = vunpack.c.h.b16 %v1798
      %v1950 = vunpack.c.l.b16 %v1799
      %v1951 = vunpack.c.h.b16 %v1799
      %v1952 = vunpack.c.l.b16 %v1800
      %v1953 = vunpack.c.h.b16 %v1800
      %v1954 = vunpack.c.l.b16 %v1801
      %v1955 = vunpack.c.h.b16 %v1801
      %v1956 = vunpack.c.l.b16 %v1802
      %v1957 = vunpack.c.h.b16 %v1802
      %v1958 = vunpack.c.l.b16 %v1803
      %v1959 = vunpack.c.h.b16 %v1803
      %v1960 = vunpack.c.l.b16 %v1804
      %v1961 = vunpack.c.h.b16 %v1804
      %v1962 = vunpack.c.l.b16 %v1805
      %v1963 = vunpack.c.h.b16 %v1805
      %v1964 = vunpack.c.l.b16 %v1806
      %v1965 = vunpack.c.h.b16 %v1806
      %v1966 = vunpack.c.l.b16 %v1807
      %v1967 = vunpack.c.h.b16 %v1807
      %v1968 = vunpack.c.l.b16 %v1808
      %v1969 = vunpack.c.h.b16 %v1808
      %v1970 = vunpack.c.l.b16 %v1809
      %v1971 = vunpack.c.h.b16 %v1809
      %v1972 = vunpack.c.l.b16 %v1810
      %v1973 = vunpack.c.h.b16 %v1810
      %v1974 = vunpack.c.l.b16 %v1811
      %v1975 = vunpack.c.h.b16 %v1811
      %v1976 = vunpack.c.l.b16 %v1812
      %v1977 = vunpack.c.h.b16 %v1812
      %v1978 = vunpack.c.l.b16 %v1813
      %v1979 = vunpack.c.h.b16 %v1813
      %v1980 = vunpack.c.l.b16 %v1814
      %v1981 = vunpack.c.h.b16 %v1814
      %v1982 = vunpack.c.l.b16 %v1815
      %v1983 = vunpack.c.h.b16 %v1815
      %v1984 = vunpack.c.l.b16 %v1816
      %v1985 = vunpack.c.h.b16 %v1816
      %v1986 = vunpack.c.l.b16 %v1817
      %v1987 = vunpack.c.h.b16 %v1817
      %v1988 = vunpack.c.l.b16 %v1818
      %v1989 = vunpack.c.h.b16 %v1818
      %v1990 = vunpack.c.l.b16 %v1819
      %v1991 = vunpack.c.h.b16 %v1819
      %v1992 = vunpack.c.l.b16 %v1820
      %v1993 = vunpack.c.h.b16 %v1820
      %v1994 = vunpack.c.l.b16 %v1821
      %v1995 = vunpack.c.h.b16 %v1821
      %v1996 = vunpack.c.l.b16 %v1822
      %v1997 = vunpack.c.h.b16 %v1822
      %v1998 = vunpack.c.l.b16 %v1823
      %v1999 = vunpack.c.h.b16 %v1823
      %v2000 = vunpack.c.l.b16 %v1824
      %v2001 = vunpack.c.h.b16 %v1824
      %v2002 = vunpack.c.l.b16 %v1825
      %v2003 = vunpack.c.h.b16 %v1825
      %v2004 = vunpack.c.l.b16 %v1826
      %v2005 = vunpack.c.h.b16 %v1826
      %v2006 = vunpack.c.l.b16 %v1827
      %v2007 = vunpack.c.h.b16 %v1827
      %v2008 = vunpack.c.l.b16 %v1828
      %v2009 = vunpack.c.h.b16 %v1828
      %v2010 = vunpack.c.l.b16 %v1829
      %v2011 = vunpack.c.h.b16 %v1829
      %v2012 = vunpack.c.l.b16 %v1830
      %v2013 = vunpack.c.h.b16 %v1830
      %v2014 = vunpack.c.l.b16 %v1831
      %v2015 = vunpack.c.h.b16 %v1831
      %v2016 = vunpack.c.l.b16 %v1832
      %v2017 = vunpack.c.h.b16 %v1832
      %v2018 = vunpack.c.l.b16 %v1833
      %v2019 = vunpack.c.h.b16 %v1833
      %v2020 = vunpack.c.l.b16 %v1834
      %v2021 = vunpack.c.h.b16 %v1834
      %v2022 = vunpack.c.l.b16 %v1835
      %v2023 = vunpack.c.h.b16 %v1835
      %v2024 = vunpack.c.l.b16 %v1836
      %v2025 = vunpack.c.h.b16 %v1836
      %v2026 = vunpack.c.l.b16 %v1837
      %v2027 = vunpack.c.h.b16 %v1837
      %v2028 = vunpack.c.l.b16 %v1838
      %v2029 = vunpack.c.h.b16 %v1838
      %v2030 = vunpack.c.l.b16 %v1839
      %v2031 = vunpack.c.h.b16 %v1839
      %v2032 = vpack.c.b16 %v1904, %v1904
      %v2033 = vpack.c.b16 %v1905, %v1905
      %v2034 = vpack.c.b16 %v1906, %v1906
      %v2035 = vpack.c.b16 %v1907, %v1907
      %v2036 = vpack.c.b16 %v1908, %v1908
      %v2037 = vpack.c.b16 %v1909, %v1909
      %v2038 = vpack.c.b16 %v1910, %v1910
      %v2039 = vpack.c.b16 %v1911, %v1911
      %v2040 = vpack.c.b16 %v1912, %v1912
      %v2041 = vpack.c.b16 %v1913, %v1913
      %v2042 = vpack.c.b16 %v1914, %v1914
      %v2043 = vpack.c.b16 %v1915, %v1915
      %v2044 = vpack.c.b16 %v1916, %v1916
      %v2045 = vpack.c.b16 %v1917, %v1917
      %v2046 = vpack.c.b16 %v1918, %v1918
      %v2047 = vpack.c.b16 %v1919, %v1919
      %v2048 = vpack.c.b16 %v1920, %v1920
      %v2049 = vpack.c.b16 %v1921, %v1921
      %v2050 = vpack.c.b16 %v1922, %v1922
      %v2051 = vpack.c.b16 %v1923, %v1923
      %v2052 = vpack.c.b16 %v1924, %v1924
      %v2053 = vpack.c.b16 %v1925, %v1925
      %v2054 = vpack.c.b16 %v1926, %v1926
      %v2055 = vpack.c.b16 %v1927, %v1927
      %v2056 = vpack.c.b16 %v1928, %v1928
      %v2057 = vpack.c.b16 %v1929, %v1929
      %v2058 = vpack.c.b16 %v1930, %v1930
      %v2059 = vpack.c.b16 %v1931, %v1931
      %v2060 = vpack.c.b16 %v1932, %v1932
      %v2061 = vpack.c.b16 %v1933, %v1933
      %v2062 = vpack.c.b16 %v1934, %v1934
      %v2063 = vpack.c.b16 %v1935, %v1935
      %v2064 = vpack.c.b16 %v1936, %v1936
      %v2065 = vpack.c.b16 %v1937, %v1937
      %v2066 = vpack.c.b16 %v1938, %v1938
      %v2067 = vpack.c.b16 %v1939, %v1939
      %v2068 = vpack.c.b16 %v1940, %v1940
      %v2069 = vpack.c.b16 %v1941, %v1941
      %v2070 = vpack.c.b16 %v1942, %v1942
      %v2071 = vpack.c.b16 %v1943, %v1943
      %v2072 = vpack.c.b16 %v1944, %v1944
      %v2073 = vpack.c.b16 %v1945, %v1945
      %v2074 = vpack.c.b16 %v1946, %v1946
      %v2075 = vpack.c.b16 %v1947, %v1947
      %v2076 = vpack.c.b16 %v1948, %v1948
      %v2077 = vpack.c.b16 %v1949, %v1949
      %v2078 = vpack.c.b16 %v1950, %v1950
      %v2079 = vpack.c.b16 %v1951, %v1951
      %v2080 = vpack.c.b16 %v1952, %v1952
      %v2081 = vpack.c.b16 %v1953, %v1953
      %v2082 = vpack.c.b16 %v1954, %v1954
      %v2083 = vpack.c.b16 %v1955, %v1955
      %v2084 = vpack.c.b16 %v1956, %v1956
      %v2085 = vpack.c.b16 %v1957, %v1957
      %v2086 = vpack.c.b16 %v1958, %v1958
      %v2087 = vpack.c.b16 %v1959, %v1959
      %v2088 = vpack.c.b16 %v1960, %v1960
      %v2089 = vpack.c.b16 %v1961, %v1961
      %v2090 = vpack.c.b16 %v1962, %v1962
      %v2091 = vpack.c.b16 %v1963, %v1963
      %v2092 = vpack.c.b16 %v1964, %v1964
      %v2093 = vpack.c.b16 %v1965, %v1965
      %v2094 = vpack.c.b16 %v1966, %v1966
      %v2095 = vpack.c.b16 %v1967, %v1967
      %v2096 = vpack.c.b16 %v1968, %v1968
      %v2097 = vpack.c.b16 %v1969, %v1969
      %v2098 = vpack.c.b16 %v1970, %v1970
      %v2099 = vpack.c.b16 %v1971, %v1971
      %v2100 = vpack.c.b16 %v1972, %v1972
      %v2101 = vpack.c.b16 %v1973, %v1973
      %v2102 = vpack.c.b16 %v1974, %v1974
      %v2103 = vpack.c.b16 %v1975, %v1975
      %v2104 = vpack.c.b16 %v1976, %v1976
      %v2105 = vpack.c.b16 %v1977, %v1977
      %v2106 = vpack.c.b16 %v1978, %v1978
      %v2107 = vpack.c.b16 %v1979, %v1979
      %v2108 = vpack.c.b16 %v1980, %v1980
      %v2109 = vpack.c.b16 %v1981, %v1981
      %v2110 = vpack.c.b16 %v1982, %v1982
      %v2111 = vpack.c.b16 %v1983, %v1983
      %v2112 = vpack.c.b16 %v1984, %v1984
      %v2113 = vpack.c.b16 %v1985, %v1985
      %v2114 = vpack.c.b16 %v1986, %v1986
      %v2115 = vpack.c.b16 %v1987, %v1987
      %v2116 = vpack.c.b16 %v1988, %v1988
      %v2117 = vpack.c.b16 %v1989, %v1989
      %v2118 = vpack.c.b16 %v1990, %v1990
      %v2119 = vpack.c.b16 %v1991, %v1991
      %v2120 = vpack.c.b16 %v1992, %v1992
      %v2121 = vpack.c.b16 %v1993, %v1993
      %v2122 = vpack.c.b16 %v1994, %v1994
      %v2123 = vpack.c.b16 %v1995, %v1995
      %v2124 = vpack.c.b16 %v1996, %v1996
      %v2125 = vpack.c.b16 %v1997, %v1997
      %v2126 = vpack.c.b16 %v1998, %v1998
      %v2127 = vpack.c.b16 %v1999, %v1999
      %v2128 = vpack.c.b16 %v2000, %v2000
      %v2129 = vpack.c.b16 %v2001, %v2001
      %v2130 = vpack.c.b16 %v2002, %v2002
      %v2131 = vpack.c.b16 %v2003, %v2003
      %v2132 = vpack.c.b16 %v2004, %v2004
      %v2133 = vpack.c.b16 %v2005, %v2005
      %v2134 = vpack.c.b16 %v2006, %v2006
      %v2135 = vpack.c.b16 %v2007, %v2007
      %v2136 = vpack.c.b16 %v2008, %v2008
      %v2137 = vpack.c.b16 %v2009, %v2009
      %v2138 = vpack.c.b16 %v2010, %v2010
      %v2139 = vpack.c.b16 %v2011, %v2011
      %v2140 = vpack.c.b16 %v2012, %v2012
      %v2141 = vpack.c.b16 %v2013, %v2013
      %v2142 = vpack.c.b16 %v2014, %v2014
      %v2143 = vpack.c.b16 %v2015, %v2015
      %v2144 = vpack.c.b16 %v2016, %v2016
      %v2145 = vpack.c.b16 %v2017, %v2017
      %v2146 = vpack.c.b16 %v2018, %v2018
      %v2147 = vpack.c.b16 %v2019, %v2019
      %v2148 = vpack.c.b16 %v2020, %v2020
      %v2149 = vpack.c.b16 %v2021, %v2021
      %v2150 = vpack.c.b16 %v2022, %v2022
      %v2151 = vpack.c.b16 %v2023, %v2023
      %v2152 = vpack.c.b16 %v2024, %v2024
      %v2153 = vpack.c.b16 %v2025, %v2025
      %v2154 = vpack.c.b16 %v2026, %v2026
      %v2155 = vpack.c.b16 %v2027, %v2027
      %v2156 = vpack.c.b16 %v2028, %v2028
      %v2157 = vpack.c.b16 %v2029, %v2029
      %v2158 = vpack.c.b16 %v2030, %v2030
      %v2159 = vpack.c.b16 %v2031, %v2031
      %vm2288 = vcmask 125952
      %2289 = vst.msk [vmem:[%s172] sm:$0xf] %vm2288, %v2032
      %2290 = vst.msk [vmem:[%s172 + $0x4] sm:$0xf] %vm2288, %v2033
      %2291 = vst.msk [vmem:[%s172 + $0x8] sm:$0xf] %vm2288, %v2034
      %2292 = vst.msk [vmem:[%s172 + $0xc] sm:$0xf] %vm2288, %v2035
      %2293 = vst.msk [vmem:[%s172 + $0x10] sm:$0xf] %vm2288, %v2036
      %2294 = vst.msk [vmem:[%s172 + $0x14] sm:$0xf] %vm2288, %v2037
      %2295 = vst.msk [vmem:[%s172 + $0x18] sm:$0xf] %vm2288, %v2038
      %2296 = vst.msk [vmem:[%s172 + $0x1c] sm:$0xf] %vm2288, %v2039
      %2297 = vst.msk [vmem:[%s172 + $0x20] sm:$0xf] %vm2288, %v2040
      %2298 = vst.msk [vmem:[%s172 + $0x24] sm:$0xf] %vm2288, %v2041
      %2299 = vst.msk [vmem:[%s172 + $0x28] sm:$0xf] %vm2288, %v2042
      %2300 = vst.msk [vmem:[%s172 + $0x2c] sm:$0xf] %vm2288, %v2043
      %2301 = vst.msk [vmem:[%s172 + $0x30] sm:$0xf] %vm2288, %v2044
      %2302 = vst.msk [vmem:[%s172 + $0x34] sm:$0xf] %vm2288, %v2045
      %2303 = vst.msk [vmem:[%s172 + $0x38] sm:$0xf] %vm2288, %v2046
      %2304 = vst.msk [vmem:[%s172 + $0x3c] sm:$0xf] %vm2288, %v2047
      %2305 = vst.msk [vmem:[%s172 + $0x40] sm:$0xf] %vm2288, %v2048
      %2306 = vst.msk [vmem:[%s172 + $0x44] sm:$0xf] %vm2288, %v2049
      %2307 = vst.msk [vmem:[%s172 + $0x48] sm:$0xf] %vm2288, %v2050
      %2308 = vst.msk [vmem:[%s172 + $0x4c] sm:$0xf] %vm2288, %v2051
      %2309 = vst.msk [vmem:[%s172 + $0x50] sm:$0xf] %vm2288, %v2052
      %2310 = vst.msk [vmem:[%s172 + $0x54] sm:$0xf] %vm2288, %v2053
      %2311 = vst.msk [vmem:[%s172 + $0x58] sm:$0xf] %vm2288, %v2054
      %2312 = vst.msk [vmem:[%s172 + $0x5c] sm:$0xf] %vm2288, %v2055
      %2313 = vst.msk [vmem:[%s172 + $0x60] sm:$0xf] %vm2288, %v2056
      %2314 = vst.msk [vmem:[%s172 + $0x64] sm:$0xf] %vm2288, %v2057
      %2315 = vst.msk [vmem:[%s172 + $0x68] sm:$0xf] %vm2288, %v2058
      %2316 = vst.msk [vmem:[%s172 + $0x6c] sm:$0xf] %vm2288, %v2059
      %2317 = vst.msk [vmem:[%s172 + $0x70] sm:$0xf] %vm2288, %v2060
      %2318 = vst.msk [vmem:[%s172 + $0x74] sm:$0xf] %vm2288, %v2061
      %2319 = vst.msk [vmem:[%s172 + $0x78] sm:$0xf] %vm2288, %v2062
      %2320 = vst.msk [vmem:[%s172 + $0x7c] sm:$0xf] %vm2288, %v2063
      %2321 = vst.msk [vmem:[%s172 + $0x80] sm:$0xf] %vm2288, %v2064
      %2322 = vst.msk [vmem:[%s172 + $0x84] sm:$0xf] %vm2288, %v2065
      %2323 = vst.msk [vmem:[%s172 + $0x88] sm:$0xf] %vm2288, %v2066
      %2324 = vst.msk [vmem:[%s172 + $0x8c] sm:$0xf] %vm2288, %v2067
      %2325 = vst.msk [vmem:[%s172 + $0x90] sm:$0xf] %vm2288, %v2068
      %2326 = vst.msk [vmem:[%s172 + $0x94] sm:$0xf] %vm2288, %v2069
      %2327 = vst.msk [vmem:[%s172 + $0x98] sm:$0xf] %vm2288, %v2070
      %2328 = vst.msk [vmem:[%s172 + $0x9c] sm:$0xf] %vm2288, %v2071
      %2329 = vst.msk [vmem:[%s172 + $0xa0] sm:$0xf] %vm2288, %v2072
      %2330 = vst.msk [vmem:[%s172 + $0xa4] sm:$0xf] %vm2288, %v2073
      %2331 = vst.msk [vmem:[%s172 + $0xa8] sm:$0xf] %vm2288, %v2074
      %2332 = vst.msk [vmem:[%s172 + $0xac] sm:$0xf] %vm2288, %v2075
      %2333 = vst.msk [vmem:[%s172 + $0xb0] sm:$0xf] %vm2288, %v2076
      %2334 = vst.msk [vmem:[%s172 + $0xb4] sm:$0xf] %vm2288, %v2077
      %2335 = vst.msk [vmem:[%s172 + $0xb8] sm:$0xf] %vm2288, %v2078
      %2336 = vst.msk [vmem:[%s172 + $0xbc] sm:$0xf] %vm2288, %v2079
      %2337 = vst.msk [vmem:[%s172 + $0xc0] sm:$0xf] %vm2288, %v2080
      %2338 = vst.msk [vmem:[%s172 + $0xc4] sm:$0xf] %vm2288, %v2081
      %2339 = vst.msk [vmem:[%s172 + $0xc8] sm:$0xf] %vm2288, %v2082
      %2340 = vst.msk [vmem:[%s172 + $0xcc] sm:$0xf] %vm2288, %v2083
      %2341 = vst.msk [vmem:[%s172 + $0xd0] sm:$0xf] %vm2288, %v2084
      %2342 = vst.msk [vmem:[%s172 + $0xd4] sm:$0xf] %vm2288, %v2085
      %2343 = vst.msk [vmem:[%s172 + $0xd8] sm:$0xf] %vm2288, %v2086
      %2344 = vst.msk [vmem:[%s172 + $0xdc] sm:$0xf] %vm2288, %v2087
      %2345 = vst.msk [vmem:[%s172 + $0xe0] sm:$0xf] %vm2288, %v2088
      %2346 = vst.msk [vmem:[%s172 + $0xe4] sm:$0xf] %vm2288, %v2089
      %2347 = vst.msk [vmem:[%s172 + $0xe8] sm:$0xf] %vm2288, %v2090
      %2348 = vst.msk [vmem:[%s172 + $0xec] sm:$0xf] %vm2288, %v2091
      %2349 = vst.msk [vmem:[%s172 + $0xf0] sm:$0xf] %vm2288, %v2092
      %2350 = vst.msk [vmem:[%s172 + $0xf4] sm:$0xf] %vm2288, %v2093
      %2351 = vst.msk [vmem:[%s172 + $0xf8] sm:$0xf] %vm2288, %v2094
      %2352 = vst.msk [vmem:[%s172 + $0xfc] sm:$0xf] %vm2288, %v2095
      %2353 = vst.msk [vmem:[%s172 + $0x100] sm:$0xf] %vm2288, %v2096
      %2354 = vst.msk [vmem:[%s172 + $0x104] sm:$0xf] %vm2288, %v2097
      %2355 = vst.msk [vmem:[%s172 + $0x108] sm:$0xf] %vm2288, %v2098
      %2356 = vst.msk [vmem:[%s172 + $0x10c] sm:$0xf] %vm2288, %v2099
      %2357 = vst.msk [vmem:[%s172 + $0x110] sm:$0xf] %vm2288, %v2100
      %2358 = vst.msk [vmem:[%s172 + $0x114] sm:$0xf] %vm2288, %v2101
      %2359 = vst.msk [vmem:[%s172 + $0x118] sm:$0xf] %vm2288, %v2102
      %2360 = vst.msk [vmem:[%s172 + $0x11c] sm:$0xf] %vm2288, %v2103
      %2361 = vst.msk [vmem:[%s172 + $0x120] sm:$0xf] %vm2288, %v2104
      %2362 = vst.msk [vmem:[%s172 + $0x124] sm:$0xf] %vm2288, %v2105
      %2363 = vst.msk [vmem:[%s172 + $0x128] sm:$0xf] %vm2288, %v2106
      %2364 = vst.msk [vmem:[%s172 + $0x12c] sm:$0xf] %vm2288, %v2107
      %2365 = vst.msk [vmem:[%s172 + $0x130] sm:$0xf] %vm2288, %v2108
      %2366 = vst.msk [vmem:[%s172 + $0x134] sm:$0xf] %vm2288, %v2109
      %2367 = vst.msk [vmem:[%s172 + $0x138] sm:$0xf] %vm2288, %v2110
      %2368 = vst.msk [vmem:[%s172 + $0x13c] sm:$0xf] %vm2288, %v2111
      %2369 = vst.msk [vmem:[%s172 + $0x140] sm:$0xf] %vm2288, %v2112
      %2370 = vst.msk [vmem:[%s172 + $0x144] sm:$0xf] %vm2288, %v2113
      %2371 = vst.msk [vmem:[%s172 + $0x148] sm:$0xf] %vm2288, %v2114
      %2372 = vst.msk [vmem:[%s172 + $0x14c] sm:$0xf] %vm2288, %v2115
      %2373 = vst.msk [vmem:[%s172 + $0x150] sm:$0xf] %vm2288, %v2116
      %2374 = vst.msk [vmem:[%s172 + $0x154] sm:$0xf] %vm2288, %v2117
      %2375 = vst.msk [vmem:[%s172 + $0x158] sm:$0xf] %vm2288, %v2118
      %2376 = vst.msk [vmem:[%s172 + $0x15c] sm:$0xf] %vm2288, %v2119
      %2377 = vst.msk [vmem:[%s172 + $0x160] sm:$0xf] %vm2288, %v2120
      %2378 = vst.msk [vmem:[%s172 + $0x164] sm:$0xf] %vm2288, %v2121
      %2379 = vst.msk [vmem:[%s172 + $0x168] sm:$0xf] %vm2288, %v2122
      %2380 = vst.msk [vmem:[%s172 + $0x16c] sm:$0xf] %vm2288, %v2123
      %2381 = vst.msk [vmem:[%s172 + $0x170] sm:$0xf] %vm2288, %v2124
      %2382 = vst.msk [vmem:[%s172 + $0x174] sm:$0xf] %vm2288, %v2125
      %2383 = vst.msk [vmem:[%s172 + $0x178] sm:$0xf] %vm2288, %v2126
      %2384 = vst.msk [vmem:[%s172 + $0x17c] sm:$0xf] %vm2288, %v2127
      %2385 = vst.msk [vmem:[%s172 + $0x180] sm:$0xf] %vm2288, %v2128
      %2386 = vst.msk [vmem:[%s172 + $0x184] sm:$0xf] %vm2288, %v2129
      %2387 = vst.msk [vmem:[%s172 + $0x188] sm:$0xf] %vm2288, %v2130
      %2388 = vst.msk [vmem:[%s172 + $0x18c] sm:$0xf] %vm2288, %v2131
      %2389 = vst.msk [vmem:[%s172 + $0x190] sm:$0xf] %vm2288, %v2132
      %2390 = vst.msk [vmem:[%s172 + $0x194] sm:$0xf] %vm2288, %v2133
      %2391 = vst.msk [vmem:[%s172 + $0x198] sm:$0xf] %vm2288, %v2134
      %2392 = vst.msk [vmem:[%s172 + $0x19c] sm:$0xf] %vm2288, %v2135
      %2393 = vst.msk [vmem:[%s172 + $0x1a0] sm:$0xf] %vm2288, %v2136
      %2394 = vst.msk [vmem:[%s172 + $0x1a4] sm:$0xf] %vm2288, %v2137
      %2395 = vst.msk [vmem:[%s172 + $0x1a8] sm:$0xf] %vm2288, %v2138
      %2396 = vst.msk [vmem:[%s172 + $0x1ac] sm:$0xf] %vm2288, %v2139
      %2397 = vst.msk [vmem:[%s172 + $0x1b0] sm:$0xf] %vm2288, %v2140
      %2398 = vst.msk [vmem:[%s172 + $0x1b4] sm:$0xf] %vm2288, %v2141
      %2399 = vst.msk [vmem:[%s172 + $0x1b8] sm:$0xf] %vm2288, %v2142
      %2400 = vst.msk [vmem:[%s172 + $0x1bc] sm:$0xf] %vm2288, %v2143
      %2401 = vst.msk [vmem:[%s172 + $0x1c0] sm:$0xf] %vm2288, %v2144
      %2402 = vst.msk [vmem:[%s172 + $0x1c4] sm:$0xf] %vm2288, %v2145
      %2403 = vst.msk [vmem:[%s172 + $0x1c8] sm:$0xf] %vm2288, %v2146
      %2404 = vst.msk [vmem:[%s172 + $0x1cc] sm:$0xf] %vm2288, %v2147
      %2405 = vst.msk [vmem:[%s172 + $0x1d0] sm:$0xf] %vm2288, %v2148
      %2406 = vst.msk [vmem:[%s172 + $0x1d4] sm:$0xf] %vm2288, %v2149
      %2407 = vst.msk [vmem:[%s172 + $0x1d8] sm:$0xf] %vm2288, %v2150
      %2408 = vst.msk [vmem:[%s172 + $0x1dc] sm:$0xf] %vm2288, %v2151
      %2409 = vst.msk [vmem:[%s172 + $0x1e0] sm:$0xf] %vm2288, %v2152
      %2410 = vst.msk [vmem:[%s172 + $0x1e4] sm:$0xf] %vm2288, %v2153
      %2411 = vst.msk [vmem:[%s172 + $0x1e8] sm:$0xf] %vm2288, %v2154
      %2412 = vst.msk [vmem:[%s172 + $0x1ec] sm:$0xf] %vm2288, %v2155
      %2413 = vst.msk [vmem:[%s172 + $0x1f0] sm:$0xf] %vm2288, %v2156
      %2414 = vst.msk [vmem:[%s172 + $0x1f4] sm:$0xf] %vm2288, %v2157
      %2415 = vst.msk [vmem:[%s172 + $0x1f8] sm:$0xf] %vm2288, %v2158
      %2416 = vst.msk [vmem:[%s172 + $0x1fc] sm:$0xf] %vm2288, %v2159
      %s2417 = smul.u32 128, %s14
      %p2418 = scmp.lt.s32.totalorder %s2417, 255
      %s2419 = scalar_select %p2418, %s2417, 255
      %s2420 = smul.addr %s2419, 4
      %s2421 = scalar_lea.vmem %s3, %s2420
      // Predicated region
      $region33: #{dnet_forward.4} parent=31 // pred_check
        %p2422 = pneg %p100
      $region34: #{dnet_forward.4} parent=31 // pred_check_branch
        %2424 = sbr.rel (%p2422) target = $region36
      $region35: #{dnet_forward.4} parent=31 // pred_region
        %s2425 = smul.u32 128, %s14
      $region36: #{dnet_forward.4} parent=31 // pred_fallthru
        _
    $region32: #{dnet_forward.4} parent=5 // pred_fallthru
      _
    %p2426 = scmp.le.s32.totalorder 2, %s9
    // Predicated region
    $region37: #{dnet_forward.4} parent=5 // pred_check
      %p2427 = pneg %p2426
    $region38: #{dnet_forward.4} parent=5 // pred_check_branch
      %2429 = sbr.rel (%p2427) target = $region40
    $region39: #{dnet_forward.4} parent=5 // pred_region
      %s2430 = ssub.s32 %s9, 2
      // Predicated region
      $region41: #{dnet_forward.4} parent=39 // pred_check
        %p2431 = pneg %p106
      $region42: #{dnet_forward.4} parent=39 // pred_check_branch
        %2433 = sbr.rel (%p2431) target = $region44
      $region43: #{dnet_forward.4} parent=39 // pred_region
        %s2434 = smul.u32 128, %s15
        %p2435 = scmp.lt.s32.totalorder %s2434, 255
        %s2436 = scalar_select %p2435, %s2434, 255
        %s2437 = smul.addr %s2436, 4
        %s2438 = scalar_lea.vmem %s3, %s2437
      $region44: #{dnet_forward.4} parent=39 // pred_fallthru
        _
    $region40: #{dnet_forward.4} parent=5 // pred_fallthru
      _
  $region6: #{dnet_forward.4} parent=0 // loop_footer
    %s13 = sadd.s32 1, %s9
  $region7: #{dnet_forward.4} parent=0 // loop_footer_branch
    %8 = sbr.rel target = $region3
  $region8: #{dnet_forward.4} parent=0 // loop_exit
    _

// kernel: dnet_forward.5
$region0: #{dnet_forward.5}
  #allocation0 [shape = 'u32[]', space=smem, size = 0x4, offset = 0x4, fixed_abs, tag = 'smem constant byte address 0x4 - core index']
  #allocation1 [shape = 'u32[144,128]{1,0:T(1,128)}', space=vmem, size = 0x12000, scoped, tag = 'internal scratch']
  %s0 = inlined_call_operand.vmem [shape: bf16[512,256], index: 0, kind: input, shape index: {}]
  %s1 = inlined_call_operand.vmem [shape: bf16[256,32], index: 1, kind: input, shape index: {}]
  %s2 = inlined_call_operand.vmem [shape: f32[1,32], index: 2, kind: input, shape index: {}]
  %s3 = inlined_call_operand.vmem [shape: f32[1,32], index: 3, kind: input, shape index: {}]
  %s4 = inlined_call_operand.vmem [shape: f32[1,32], index: 4, kind: input, shape index: {}]
  %s5 = inlined_call_operand.vmem [shape: bf16[512,32], index: 5, kind: output, shape index: {}]
  %s6 = sld [smem:[#allocation0]]
  $region30: #{dnet_forward.5} parent=0
    _
  %s8 = ssub.s32 1, %s6
  %s9 = scalar_select 0, %s8, %s6
  // Predicated region
  $region2: #{dnet_forward.5} parent=0 // pred_check
    _
  $region3: #{dnet_forward.5} parent=0 // pred_check_branch
    %11 = sbr.rel (0) target = $region5
  $region4: #{dnet_forward.5} parent=0 // pred_region
    _
  $region5: #{dnet_forward.5} parent=0 // pred_fallthru
    _
  // Predicated region
  $region6: #{dnet_forward.5} parent=0 // pred_check
    _
  $region7: #{dnet_forward.5} parent=0 // pred_check_branch
    %13 = sbr.rel (0) target = $region9
  $region8: #{dnet_forward.5} parent=0 // pred_region
    _
  $region9: #{dnet_forward.5} parent=0 // pred_fallthru
    _
  // Predicated region
  $region10: #{dnet_forward.5} parent=0 // pred_check
    _
  $region11: #{dnet_forward.5} parent=0 // pred_check_branch
    %15 = sbr.rel (0) target = $region13
  $region12: #{dnet_forward.5} parent=0 // pred_region
    _
  $region13: #{dnet_forward.5} parent=0 // pred_fallthru
    _
  // Predicated region
  $region14: #{dnet_forward.5} parent=0 // pred_check
    _
  $region15: #{dnet_forward.5} parent=0 // pred_check_branch
    %17 = sbr.rel (0) target = $region17
  $region16: #{dnet_forward.5} parent=0 // pred_region
    _
  $region17: #{dnet_forward.5} parent=0 // pred_fallthru
    _
  // Predicated region
  $region18: #{dnet_forward.5} parent=0 // pred_check
    _
  $region19: #{dnet_forward.5} parent=0 // pred_check_branch
    %19 = sbr.rel (0) target = $region21
  $region20: #{dnet_forward.5} parent=0 // pred_region
    _
  $region21: #{dnet_forward.5} parent=0 // pred_fallthru
    _
  %v21 = vld [vmem:[%s0] sm:$0xff]
  %v22 = vld [vmem:[%s0 + $0x8] sm:$0xff]
  %v23 = vld [vmem:[%s0 + $0x10] sm:$0xff]
  %v24 = vld [vmem:[%s0 + $0x18] sm:$0xff]
  %v25 = vld [vmem:[%s0 + $0x20] sm:$0xff]
  %v26 = vld [vmem:[%s0 + $0x28] sm:$0xff]
  %v27 = vld [vmem:[%s0 + $0x30] sm:$0xff]
  %v28 = vld [vmem:[%s0 + $0x38] sm:$0xff]
  %v29 = vld [vmem:[%s0 + $0x40] sm:$0xff]
  %v30 = vld [vmem:[%s0 + $0x48] sm:$0xff]
  %v31 = vld [vmem:[%s0 + $0x50] sm:$0xff]
  %v32 = vld [vmem:[%s0 + $0x58] sm:$0xff]
  %v33 = vld [vmem:[%s0 + $0x60] sm:$0xff]
  %v34 = vld [vmem:[%s0 + $0x68] sm:$0xff]
  %v35 = vld [vmem:[%s0 + $0x70] sm:$0xff]
  %v36 = vld [vmem:[%s0 + $0x78] sm:$0xff]
  %v37 = vld [vmem:[%s0 + $0x80] sm:$0xff]
  %v38 = vld [vmem:[%s0 + $0x88] sm:$0xff]
  %v39 = vld [vmem:[%s0 + $0x90] sm:$0xff]
  %v40 = vld [vmem:[%s0 + $0x98] sm:$0xff]
  %v41 = vld [vmem:[%s0 + $0xa0] sm:$0xff]
  %v42 = vld [vmem:[%s0 + $0xa8] sm:$0xff]
  %v43 = vld [vmem:[%s0 + $0xb0] sm:$0xff]
  %v44 = vld [vmem:[%s0 + $0xb8] sm:$0xff]
  %v45 = vld [vmem:[%s0 + $0xc0] sm:$0xff]
  %v46 = vld [vmem:[%s0 + $0xc8] sm:$0xff]
  %v47 = vld [vmem:[%s0 + $0xd0] sm:$0xff]
  %v48 = vld [vmem:[%s0 + $0xd8] sm:$0xff]
  %v49 = vld [vmem:[%s0 + $0xe0] sm:$0xff]
  %v50 = vld [vmem:[%s0 + $0xe8] sm:$0xff]
  %v51 = vld [vmem:[%s0 + $0xf0] sm:$0xff]
  %v52 = vld [vmem:[%s0 + $0xf8] sm:$0xff]
  %v53 = vld [vmem:[%s0 + $0x100] sm:$0xff]
  %v54 = vld [vmem:[%s0 + $0x108] sm:$0xff]
  %v55 = vld [vmem:[%s0 + $0x110] sm:$0xff]
  %v56 = vld [vmem:[%s0 + $0x118] sm:$0xff]
  %v57 = vld [vmem:[%s0 + $0x120] sm:$0xff]
  %v58 = vld [vmem:[%s0 + $0x128] sm:$0xff]
  %v59 = vld [vmem:[%s0 + $0x130] sm:$0xff]
  %v60 = vld [vmem:[%s0 + $0x138] sm:$0xff]
  %v61 = vld [vmem:[%s0 + $0x140] sm:$0xff]
  %v62 = vld [vmem:[%s0 + $0x148] sm:$0xff]
  %v63 = vld [vmem:[%s0 + $0x150] sm:$0xff]
  %v64 = vld [vmem:[%s0 + $0x158] sm:$0xff]
  %v65 = vld [vmem:[%s0 + $0x160] sm:$0xff]
  %v66 = vld [vmem:[%s0 + $0x168] sm:$0xff]
  %v67 = vld [vmem:[%s0 + $0x170] sm:$0xff]
  %v68 = vld [vmem:[%s0 + $0x178] sm:$0xff]
  %v69 = vld [vmem:[%s0 + $0x180] sm:$0xff]
  %v70 = vld [vmem:[%s0 + $0x188] sm:$0xff]
  %v71 = vld [vmem:[%s0 + $0x190] sm:$0xff]
  %v72 = vld [vmem:[%s0 + $0x198] sm:$0xff]
  %v73 = vld [vmem:[%s0 + $0x1a0] sm:$0xff]
  %v74 = vld [vmem:[%s0 + $0x1a8] sm:$0xff]
  %v75 = vld [vmem:[%s0 + $0x1b0] sm:$0xff]
  %v76 = vld [vmem:[%s0 + $0x1b8] sm:$0xff]
  %v77 = vld [vmem:[%s0 + $0x1c0] sm:$0xff]
  %v78 = vld [vmem:[%s0 + $0x1c8] sm:$0xff]
  %v79 = vld [vmem:[%s0 + $0x1d0] sm:$0xff]
  %v80 = vld [vmem:[%s0 + $0x1d8] sm:$0xff]
  %v81 = vld [vmem:[%s0 + $0x1e0] sm:$0xff]
  %v82 = vld [vmem:[%s0 + $0x1e8] sm:$0xff]
  %v83 = vld [vmem:[%s0 + $0x1f0] sm:$0xff]
  %v84 = vld [vmem:[%s0 + $0x1f8] sm:$0xff]
  %v85 = vld [vmem:[%s1] sm:$0xf]
  %v86 = vld [vmem:[%s1 + $0x4] sm:$0xf]
  %v87 = vld [vmem:[%s1 + $0x8] sm:$0xf]
  %v88 = vld [vmem:[%s1 + $0xc] sm:$0xf]
  %v89 = vld [vmem:[%s1 + $0x10] sm:$0xf]
  %v90 = vld [vmem:[%s1 + $0x14] sm:$0xf]
  %v91 = vld [vmem:[%s1 + $0x18] sm:$0xf]
  %v92 = vld [vmem:[%s1 + $0x1c] sm:$0xf]
  %v93 = vld [vmem:[%s1 + $0x20] sm:$0xf]
  %v94 = vld [vmem:[%s1 + $0x24] sm:$0xf]
  %v95 = vld [vmem:[%s1 + $0x28] sm:$0xf]
  %v96 = vld [vmem:[%s1 + $0x2c] sm:$0xf]
  %v97 = vld [vmem:[%s1 + $0x30] sm:$0xf]
  %v98 = vld [vmem:[%s1 + $0x34] sm:$0xf]
  %v99 = vld [vmem:[%s1 + $0x38] sm:$0xf]
  %v100 = vld [vmem:[%s1 + $0x3c] sm:$0xf]
  %v101 = vld [vmem:[%s1 + $0x40] sm:$0xf]
  %v102 = vld [vmem:[%s1 + $0x44] sm:$0xf]
  %v103 = vld [vmem:[%s1 + $0x48] sm:$0xf]
  %v104 = vld [vmem:[%s1 + $0x4c] sm:$0xf]
  %v105 = vld [vmem:[%s1 + $0x50] sm:$0xf]
  %v106 = vld [vmem:[%s1 + $0x54] sm:$0xf]
  %v107 = vld [vmem:[%s1 + $0x58] sm:$0xf]
  %v108 = vld [vmem:[%s1 + $0x5c] sm:$0xf]
  %v109 = vld [vmem:[%s1 + $0x60] sm:$0xf]
  %v110 = vld [vmem:[%s1 + $0x64] sm:$0xf]
  %v111 = vld [vmem:[%s1 + $0x68] sm:$0xf]
  %v112 = vld [vmem:[%s1 + $0x6c] sm:$0xf]
  %v113 = vld [vmem:[%s1 + $0x70] sm:$0xf]
  %v114 = vld [vmem:[%s1 + $0x74] sm:$0xf]
  %v115 = vld [vmem:[%s1 + $0x78] sm:$0xf]
  %v116 = vld [vmem:[%s1 + $0x7c] sm:$0xf]
  %v117 = vld [vmem:[%s2] sm:$0x1]
  %v119 = vlaneseq
  %v120 = vshrl.u32 %v119, 7
  %v121 = vsub.s32 0, %v120
  %v122 = vrot.slane %v117, %v121
  %v188 = vunpack.c.l.b16 %v21
  %v189 = vunpack.c.h.b16 %v21
  %v190 = vunpack.c.l.b16 %v22
  %v191 = vunpack.c.h.b16 %v22
  %v192 = vunpack.c.l.b16 %v23
  %v193 = vunpack.c.h.b16 %v23
  %v194 = vunpack.c.l.b16 %v24
  %v195 = vunpack.c.h.b16 %v24
  %v196 = vunpack.c.l.b16 %v25
  %v197 = vunpack.c.h.b16 %v25
  %v198 = vunpack.c.l.b16 %v26
  %v199 = vunpack.c.h.b16 %v26
  %v200 = vunpack.c.l.b16 %v27
  %v201 = vunpack.c.h.b16 %v27
  %v202 = vunpack.c.l.b16 %v28
  %v203 = vunpack.c.h.b16 %v28
  %v204 = vunpack.c.l.b16 %v29
  %v205 = vunpack.c.h.b16 %v29
  %v206 = vunpack.c.l.b16 %v30
  %v207 = vunpack.c.h.b16 %v30
  %v208 = vunpack.c.l.b16 %v31
  %v209 = vunpack.c.h.b16 %v31
  %v210 = vunpack.c.l.b16 %v32
  %v211 = vunpack.c.h.b16 %v32
  %v212 = vunpack.c.l.b16 %v33
  %v213 = vunpack.c.h.b16 %v33
  %v214 = vunpack.c.l.b16 %v34
  %v215 = vunpack.c.h.b16 %v34
  %v216 = vunpack.c.l.b16 %v35
  %v217 = vunpack.c.h.b16 %v35
  %v218 = vunpack.c.l.b16 %v36
  %v219 = vunpack.c.h.b16 %v36
  %v220 = vunpack.c.l.b16 %v37
  %v221 = vunpack.c.h.b16 %v37
  %v222 = vunpack.c.l.b16 %v38
  %v223 = vunpack.c.h.b16 %v38
  %v224 = vunpack.c.l.b16 %v39
  %v225 = vunpack.c.h.b16 %v39
  %v226 = vunpack.c.l.b16 %v40
  %v227 = vunpack.c.h.b16 %v40
  %v228 = vunpack.c.l.b16 %v41
  %v229 = vunpack.c.h.b16 %v41
  %v230 = vunpack.c.l.b16 %v42
  %v231 = vunpack.c.h.b16 %v42
  %v232 = vunpack.c.l.b16 %v43
  %v233 = vunpack.c.h.b16 %v43
  %v234 = vunpack.c.l.b16 %v44
  %v235 = vunpack.c.h.b16 %v44
  %v236 = vunpack.c.l.b16 %v45
  %v237 = vunpack.c.h.b16 %v45
  %v238 = vunpack.c.l.b16 %v46
  %v239 = vunpack.c.h.b16 %v46
  %v240 = vunpack.c.l.b16 %v47
  %v241 = vunpack.c.h.b16 %v47
  %v242 = vunpack.c.l.b16 %v48
  %v243 = vunpack.c.h.b16 %v48
  %v244 = vunpack.c.l.b16 %v49
  %v245 = vunpack.c.h.b16 %v49
  %v246 = vunpack.c.l.b16 %v50
  %v247 = vunpack.c.h.b16 %v50
  %v248 = vunpack.c.l.b16 %v51
  %v249 = vunpack.c.h.b16 %v51
  %v250 = vunpack.c.l.b16 %v52
  %v251 = vunpack.c.h.b16 %v52
  %v252 = vunpack.c.l.b16 %v53
  %v253 = vunpack.c.h.b16 %v53
  %v254 = vunpack.c.l.b16 %v54
  %v255 = vunpack.c.h.b16 %v54
  %v256 = vunpack.c.l.b16 %v55
  %v257 = vunpack.c.h.b16 %v55
  %v258 = vunpack.c.l.b16 %v56
  %v259 = vunpack.c.h.b16 %v56
  %v260 = vunpack.c.l.b16 %v57
  %v261 = vunpack.c.h.b16 %v57
  %v262 = vunpack.c.l.b16 %v58
  %v263 = vunpack.c.h.b16 %v58
  %v264 = vunpack.c.l.b16 %v59
  %v265 = vunpack.c.h.b16 %v59
  %v266 = vunpack.c.l.b16 %v60
  %v267 = vunpack.c.h.b16 %v60
  %v268 = vunpack.c.l.b16 %v61
  %v269 = vunpack.c.h.b16 %v61
  %v270 = vunpack.c.l.b16 %v62
  %v271 = vunpack.c.h.b16 %v62
  %v272 = vunpack.c.l.b16 %v63
  %v273 = vunpack.c.h.b16 %v63
  %v274 = vunpack.c.l.b16 %v64
  %v275 = vunpack.c.h.b16 %v64
  %v276 = vunpack.c.l.b16 %v65
  %v277 = vunpack.c.h.b16 %v65
  %v278 = vunpack.c.l.b16 %v66
  %v279 = vunpack.c.h.b16 %v66
  %v280 = vunpack.c.l.b16 %v67
  %v281 = vunpack.c.h.b16 %v67
  %v282 = vunpack.c.l.b16 %v68
  %v283 = vunpack.c.h.b16 %v68
  %v284 = vunpack.c.l.b16 %v69
  %v285 = vunpack.c.h.b16 %v69
  %v286 = vunpack.c.l.b16 %v70
  %v287 = vunpack.c.h.b16 %v70
  %v288 = vunpack.c.l.b16 %v71
  %v289 = vunpack.c.h.b16 %v71
  %v290 = vunpack.c.l.b16 %v72
  %v291 = vunpack.c.h.b16 %v72
  %v292 = vunpack.c.l.b16 %v73
  %v293 = vunpack.c.h.b16 %v73
  %v294 = vunpack.c.l.b16 %v74
  %v295 = vunpack.c.h.b16 %v74
  %v296 = vunpack.c.l.b16 %v75
  %v297 = vunpack.c.h.b16 %v75
  %v298 = vunpack.c.l.b16 %v76
  %v299 = vunpack.c.h.b16 %v76
  %v300 = vunpack.c.l.b16 %v77
  %v301 = vunpack.c.h.b16 %v77
  %v302 = vunpack.c.l.b16 %v78
  %v303 = vunpack.c.h.b16 %v78
  %v304 = vunpack.c.l.b16 %v79
  %v305 = vunpack.c.h.b16 %v79
  %v306 = vunpack.c.l.b16 %v80
  %v307 = vunpack.c.h.b16 %v80
  %v308 = vunpack.c.l.b16 %v81
  %v309 = vunpack.c.h.b16 %v81
  %v310 = vunpack.c.l.b16 %v82
  %v311 = vunpack.c.h.b16 %v82
  %v312 = vunpack.c.l.b16 %v83
  %v313 = vunpack.c.h.b16 %v83
  %v314 = vunpack.c.l.b16 %v84
  %v315 = vunpack.c.h.b16 %v84
  %v316 = vpack.c.b16 %v190, %v188
  %v317 = vpack.c.b16 %v191, %v189
  %v318 = vpack.c.b16 %v194, %v192
  %v319 = vpack.c.b16 %v195, %v193
  %v320 = vpack.c.b16 %v198, %v196
  %v321 = vpack.c.b16 %v199, %v197
  %v322 = vpack.c.b16 %v202, %v200
  %v323 = vpack.c.b16 %v203, %v201
  %v324 = vpack.c.b16 %v206, %v204
  %v325 = vpack.c.b16 %v207, %v205
  %v326 = vpack.c.b16 %v210, %v208
  %v327 = vpack.c.b16 %v211, %v209
  %v328 = vpack.c.b16 %v214, %v212
  %v329 = vpack.c.b16 %v215, %v213
  %v330 = vpack.c.b16 %v218, %v216
  %v331 = vpack.c.b16 %v219, %v217
  %v332 = vpack.c.b16 %v222, %v220
  %v333 = vpack.c.b16 %v223, %v221
  %v334 = vpack.c.b16 %v226, %v224
  %v335 = vpack.c.b16 %v227, %v225
  %v336 = vpack.c.b16 %v230, %v228
  %v337 = vpack.c.b16 %v231, %v229
  %v338 = vpack.c.b16 %v234, %v232
  %v339 = vpack.c.b16 %v235, %v233
  %v340 = vpack.c.b16 %v238, %v236
  %v341 = vpack.c.b16 %v239, %v237
  %v342 = vpack.c.b16 %v242, %v240
  %v343 = vpack.c.b16 %v243, %v241
  %v344 = vpack.c.b16 %v246, %v244
  %v345 = vpack.c.b16 %v247, %v245
  %v346 = vpack.c.b16 %v250, %v248
  %v347 = vpack.c.b16 %v251, %v249
  %v348 = vpack.c.b16 %v254, %v252
  %v349 = vpack.c.b16 %v255, %v253
  %v350 = vpack.c.b16 %v258, %v256
  %v351 = vpack.c.b16 %v259, %v257
  %v352 = vpack.c.b16 %v262, %v260
  %v353 = vpack.c.b16 %v263, %v261
  %v354 = vpack.c.b16 %v266, %v264
  %v355 = vpack.c.b16 %v267, %v265
  %v356 = vpack.c.b16 %v270, %v268
  %v357 = vpack.c.b16 %v271, %v269
  %v358 = vpack.c.b16 %v274, %v272
  %v359 = vpack.c.b16 %v275, %v273
  %v360 = vpack.c.b16 %v278, %v276
  %v361 = vpack.c.b16 %v279, %v277
  %v362 = vpack.c.b16 %v282, %v280
  %v363 = vpack.c.b16 %v283, %v281
  %v364 = vpack.c.b16 %v286, %v284
  %v365 = vpack.c.b16 %v287, %v285
  %v366 = vpack.c.b16 %v290, %v288
  %v367 = vpack.c.b16 %v291, %v289
  %v368 = vpack.c.b16 %v294, %v292
  %v369 = vpack.c.b16 %v295, %v293
  %v370 = vpack.c.b16 %v298, %v296
  %v371 = vpack.c.b16 %v299, %v297
  %v372 = vpack.c.b16 %v302, %v300
  %v373 = vpack.c.b16 %v303, %v301
  %v374 = vpack.c.b16 %v306, %v304
  %v375 = vpack.c.b16 %v307, %v305
  %v376 = vpack.c.b16 %v310, %v308
  %v377 = vpack.c.b16 %v311, %v309
  %v378 = vpack.c.b16 %v314, %v312
  %v379 = vpack.c.b16 %v315, %v313
  %v476 = vunpack.c.l.b16 %v85
  %v477 = vunpack.c.l.b16 %v86
  %v478 = vunpack.c.l.b16 %v87
  %v479 = vunpack.c.l.b16 %v88
  %v480 = vunpack.c.l.b16 %v89
  %v481 = vunpack.c.l.b16 %v90
  %v482 = vunpack.c.l.b16 %v91
  %v483 = vunpack.c.l.b16 %v92
  %v484 = vunpack.c.l.b16 %v93
  %v485 = vunpack.c.l.b16 %v94
  %v486 = vunpack.c.l.b16 %v95
  %v487 = vunpack.c.l.b16 %v96
  %v488 = vunpack.c.l.b16 %v97
  %v489 = vunpack.c.l.b16 %v98
  %v490 = vunpack.c.l.b16 %v99
  %v491 = vunpack.c.l.b16 %v100
  %v492 = vunpack.c.l.b16 %v101
  %v493 = vunpack.c.l.b16 %v102
  %v494 = vunpack.c.l.b16 %v103
  %v495 = vunpack.c.l.b16 %v104
  %v496 = vunpack.c.l.b16 %v105
  %v497 = vunpack.c.l.b16 %v106
  %v498 = vunpack.c.l.b16 %v107
  %v499 = vunpack.c.l.b16 %v108
  %v500 = vunpack.c.l.b16 %v109
  %v501 = vunpack.c.l.b16 %v110
  %v502 = vunpack.c.l.b16 %v111
  %v503 = vunpack.c.l.b16 %v112
  %v504 = vunpack.c.l.b16 %v113
  %v505 = vunpack.c.l.b16 %v114
  %v506 = vunpack.c.l.b16 %v115
  %v507 = vunpack.c.l.b16 %v116
  %v508 = vpack.c.b16 %v477, %v476
  %v509 = vpack.c.b16 %v479, %v478
  %v510 = vpack.c.b16 %v481, %v480
  %v511 = vpack.c.b16 %v483, %v482
  %v512 = vpack.c.b16 %v485, %v484
  %v513 = vpack.c.b16 %v487, %v486
  %v514 = vpack.c.b16 %v489, %v488
  %v515 = vpack.c.b16 %v491, %v490
  %v516 = vpack.c.b16 %v493, %v492
  %v517 = vpack.c.b16 %v495, %v494
  %v518 = vpack.c.b16 %v497, %v496
  %v519 = vpack.c.b16 %v499, %v498
  %v520 = vpack.c.b16 %v501, %v500
  %v521 = vpack.c.b16 %v503, %v502
  %v522 = vpack.c.b16 %v505, %v504
  %v523 = vpack.c.b16 %v507, %v506
  %540 = vmatprep.subr.bf16.mxu0 0
  %541 = vmatpush1.bf16.msra.mxu0 %v508
  %542 = vmatprep.subr.bf16.mxu0 0
  %543 = vmatpush1.bf16.msra.mxu0 %v509
  %544 = vmatprep.subr.bf16.mxu0 0
  %545 = vmatpush1.bf16.msra.mxu0 %v510
  %546 = vmatprep.subr.bf16.mxu0 0
  %547 = vmatpush1.bf16.msra.mxu0 %v511
  %548 = vmatprep.subr.bf16.mxu0 0
  %549 = vmatpush1.bf16.msra.mxu0 %v512
  %550 = vmatprep.subr.bf16.mxu0 0
  %551 = vmatpush1.bf16.msra.mxu0 %v513
  %552 = vmatprep.subr.bf16.mxu0 0
  %553 = vmatpush1.bf16.msra.mxu0 %v514
  %554 = vmatprep.subr.bf16.mxu0 0
  %555 = vmatpush1.bf16.msra.mxu0 %v515
  %556 = vmatprep.subr.bf16.mxu0 0
  %557 = vmatpush1.bf16.msra.mxu0 %v516
  %558 = vmatprep.subr.bf16.mxu0 0
  %559 = vmatpush1.bf16.msra.mxu0 %v517
  %560 = vmatprep.subr.bf16.mxu0 0
  %561 = vmatpush1.bf16.msra.mxu0 %v518
  %562 = vmatprep.subr.bf16.mxu0 0
  %563 = vmatpush1.bf16.msra.mxu0 %v519
  %564 = vmatprep.subr.bf16.mxu0 0
  %565 = vmatpush1.bf16.msra.mxu0 %v520
  %566 = vmatprep.subr.bf16.mxu0 0
  %567 = vmatpush1.bf16.msra.mxu0 %v521
  %568 = vmatprep.subr.bf16.mxu0 0
  %569 = vmatpush1.bf16.msra.mxu0 %v522
  %570 = vmatprep.subr.bf16.mxu0 0
  %571 = vmatpush1.bf16.msra.mxu0 %v523
  %572 = vmatprep.mubr.bf16.mxu0 %v317
  %573 = vmatmul.mubr.bf16.gmra.mrb[0].mxu0 %v316
  %v574 = vpop.f32.mrb[0].mxu0
  %v575 = vadd.f32 %v122, %v574
  %v576 = vpop.f32.mrb[0].mxu0
  %v577 = vpop.f32.mrb[0].mxu0
  %v578 = vadd.f32 %v122, %v577
  %v579 = vpop.f32.mrb[0].mxu0
  %580 = vmatprep.mubr.bf16.mxu0 %v319
  %581 = vmatmul.mubr.bf16.gmra.mrb[0].mxu0 %v318
  %v582 = vpop.f32.mrb[0].mxu0
  %v583 = vadd.f32 %v122, %v582
  %v584 = vpop.f32.mrb[0].mxu0
  %v585 = vpop.f32.mrb[0].mxu0
  %v586 = vadd.f32 %v122, %v585
  %v587 = vpop.f32.mrb[0].mxu0
  %588 = vmatprep.mubr.bf16.mxu0 %v321
  %589 = vmatmul.mubr.bf16.gmra.mrb[0].mxu0 %v320
  %v590 = vpop.f32.mrb[0].mxu0
  %v591 = vadd.f32 %v122, %v590
  %v592 = vpop.f32.mrb[0].mxu0
  %v593 = vpop.f32.mrb[0].mxu0
  %v594 = vadd.f32 %v122, %v593
  %v595 = vpop.f32.mrb[0].mxu0
  %596 = vmatprep.mubr.bf16.mxu0 %v323
  %597 = vmatmul.mubr.bf16.gmra.mrb[0].mxu0 %v322
  %v598 = vpop.f32.mrb[0].mxu0
  %v599 = vadd.f32 %v122, %v598
  %v600 = vpop.f32.mrb[0].mxu0
  %v601 = vpop.f32.mrb[0].mxu0
  %v602 = vadd.f32 %v122, %v601
  %v603 = vpop.f32.mrb[0].mxu0
  %604 = vmatprep.mubr.bf16.mxu0 %v325
  %605 = vmatmul.mubr.bf16.gmra.mrb[0].mxu0 %v324
  %v606 = vpop.f32.mrb[0].mxu0
  %v607 = vadd.f32 %v122, %v606
  %v608 = vpop.f32.mrb[0].mxu0
  %v609 = vpop.f32.mrb[0].mxu0
  %v610 = vadd.f32 %v122, %v609
  %v611 = vpop.f32.mrb[0].mxu0
  %612 = vmatprep.mubr.bf16.mxu0 %v327
  %613 = vmatmul.mubr.bf16.gmra.mrb[0].mxu0 %v326
  %v614 = vpop.f32.mrb[0].mxu0
  %v615 = vadd.f32 %v122, %v614
  %v616 = vpop.f32.mrb[0].mxu0
  %v617 = vpop.f32.mrb[0].mxu0
  %v618 = vadd.f32 %v122, %v617
  %v619 = vpop.f32.mrb[0].mxu0
  %620 = vmatprep.mubr.bf16.mxu0 %v329
  %621 = vmatmul.mubr.bf16.gmra.mrb[0].mxu0 %v328
  %v622 = vpop.f32.mrb[0].mxu0
  %v623 = vadd.f32 %v122, %v622
  %v624 = vpop.f32.mrb[0].mxu0
  %v625 = vpop.f32.mrb[0].mxu0
  %v626 = vadd.f32 %v122, %v625
  %v627 = vpop.f32.mrb[0].mxu0
  %628 = vmatprep.mubr.bf16.mxu0 %v331
  %629 = vmatmul.mubr.bf16.gmra.mrb[0].mxu0 %v330
  %v630 = vpop.f32.mrb[0].mxu0
  %v631 = vadd.f32 %v122, %v630
  %v632 = vpop.f32.mrb[0].mxu0
  %v633 = vpop.f32.mrb[0].mxu0
  %v634 = vadd.f32 %v122, %v633
  %v635 = vpop.f32.mrb[0].mxu0
  %636 = vmatprep.mubr.bf16.mxu0 %v333
  %637 = vmatmul.mubr.bf16.gmra.mrb[0].mxu0 %v332
  %v638 = vpop.f32.mrb[0].mxu0
  %v639 = vadd.f32 %v122, %v638
  %v640 = vpop.f32.mrb[0].mxu0
  %v641 = vpop.f32.mrb[0].mxu0
  %v642 = vadd.f32 %v122, %v641
  %v643 = vpop.f32.mrb[0].mxu0
  %644 = vmatprep.mubr.bf16.mxu0 %v335
  %645 = vmatmul.mubr.bf16.gmra.mrb[0].mxu0 %v334
  %v646 = vpop.f32.mrb[0].mxu0
  %v647 = vadd.f32 %v122, %v646
  %v648 = vpop.f32.mrb[0].mxu0
  %v649 = vpop.f32.mrb[0].mxu0
  %v650 = vadd.f32 %v122, %v649
  %v651 = vpop.f32.mrb[0].mxu0
  %652 = vmatprep.mubr.bf16.mxu0 %v337
  %653 = vmatmul.mubr.bf16.gmra.mrb[0].mxu0 %v336
  %v654 = vpop.f32.mrb[0].mxu0
  %v655 = vadd.f32 %v122, %v654
  %v656 = vpop.f32.mrb[0].mxu0
  %v657 = vpop.f32.mrb[0].mxu0
  %v658 = vadd.f32 %v122, %v657
  %v659 = vpop.f32.mrb[0].mxu0
  %660 = vmatprep.mubr.bf16.mxu0 %v339
  %661 = vmatmul.mubr.bf16.gmra.mrb[0].mxu0 %v338
  %v662 = vpop.f32.mrb[0].mxu0
  %v663 = vadd.f32 %v122, %v662
  %v664 = vpop.f32.mrb[0].mxu0
  %v665 = vpop.f32.mrb[0].mxu0
  %v666 = vadd.f32 %v122, %v665
  %v667 = vpop.f32.mrb[0].mxu0
  %668 = vmatprep.mubr.bf16.mxu0 %v341
  %669 = vmatmul.mubr.bf16.gmra.mrb[0].mxu0 %v340
  %v670 = vpop.f32.mrb[0].mxu0
  %v671 = vadd.f32 %v122, %v670
  %v672 = vpop.f32.mrb[0].mxu0
  %v673 = vpop.f32.mrb[0].mxu0
  %v674 = vadd.f32 %v122, %v673
  %v675 = vpop.f32.mrb[0].mxu0
  %676 = vmatprep.mubr.bf16.mxu0 %v343
  %677 = vmatmul.mubr.bf16.gmra.mrb[0].mxu0 %v342
  %v678 = vpop.f32.mrb[0].mxu0
  %v679 = vadd.f32 %v122, %v678
  %v680 = vpop.f32.mrb[0].mxu0
  %v681 = vpop.f32.mrb[0].mxu0
  %v682 = vadd.f32 %v122, %v681
  %v683 = vpop.f32.mrb[0].mxu0
  %684 = vmatprep.mubr.bf16.mxu0 %v345
  %685 = vmatmul.mubr.bf16.gmra.mrb[0].mxu0 %v344
  %v686 = vpop.f32.mrb[0].mxu0
  %v687 = vadd.f32 %v122, %v686
  %v688 = vpop.f32.mrb[0].mxu0
  %v689 = vpop.f32.mrb[0].mxu0
  %v690 = vadd.f32 %v122, %v689
  %v691 = vpop.f32.mrb[0].mxu0
  %692 = vmatprep.mubr.bf16.mxu0 %v347
  %693 = vmatmul.mubr.bf16.gmra.mrb[0].mxu0 %v346
  %v694 = vpop.f32.mrb[0].mxu0
  %v695 = vadd.f32 %v122, %v694
  %v696 = vpop.f32.mrb[0].mxu0
  %v697 = vpop.f32.mrb[0].mxu0
  %v698 = vadd.f32 %v122, %v697
  %v699 = vpop.f32.mrb[0].mxu0
  %700 = vmatprep.mubr.bf16.mxu0 %v349
  %701 = vmatmul.mubr.bf16.gmra.mrb[0].mxu0 %v348
  %v702 = vpop.f32.mrb[0].mxu0
  %v703 = vadd.f32 %v122, %v702
  %v704 = vpop.f32.mrb[0].mxu0
  %v705 = vpop.f32.mrb[0].mxu0
  %v706 = vadd.f32 %v122, %v705
  %v707 = vpop.f32.mrb[0].mxu0
  %708 = vmatprep.mubr.bf16.mxu0 %v351
  %709 = vmatmul.mubr.bf16.gmra.mrb[0].mxu0 %v350
  %v710 = vpop.f32.mrb[0].mxu0
  %v711 = vadd.f32 %v122, %v710
  %v712 = vpop.f32.mrb[0].mxu0
  %v713 = vpop.f32.mrb[0].mxu0
  %v714 = vadd.f32 %v122, %v713
  %v715 = vpop.f32.mrb[0].mxu0
  %716 = vmatprep.mubr.bf16.mxu0 %v353
  %717 = vmatmul.mubr.bf16.gmra.mrb[0].mxu0 %v352
  %v718 = vpop.f32.mrb[0].mxu0
  %v719 = vadd.f32 %v122, %v718
  %v720 = vpop.f32.mrb[0].mxu0
  %v721 = vpop.f32.mrb[0].mxu0
  %v722 = vadd.f32 %v122, %v721
  %v723 = vpop.f32.mrb[0].mxu0
  %724 = vmatprep.mubr.bf16.mxu0 %v355
  %725 = vmatmul.mubr.bf16.gmra.mrb[0].mxu0 %v354
  %v726 = vpop.f32.mrb[0].mxu0
  %v727 = vadd.f32 %v122, %v726
  %v728 = vpop.f32.mrb[0].mxu0
  %v729 = vpop.f32.mrb[0].mxu0
  %v730 = vadd.f32 %v122, %v729
  %v731 = vpop.f32.mrb[0].mxu0
  %732 = vmatprep.mubr.bf16.mxu0 %v357
  %733 = vmatmul.mubr.bf16.gmra.mrb[0].mxu0 %v356
  %v734 = vpop.f32.mrb[0].mxu0
  %v735 = vadd.f32 %v122, %v734
  %v736 = vpop.f32.mrb[0].mxu0
  %v737 = vpop.f32.mrb[0].mxu0
  %v738 = vadd.f32 %v122, %v737
  %v739 = vpop.f32.mrb[0].mxu0
  %740 = vmatprep.mubr.bf16.mxu0 %v359
  %741 = vmatmul.mubr.bf16.gmra.mrb[0].mxu0 %v358
  %v742 = vpop.f32.mrb[0].mxu0
  %v743 = vadd.f32 %v122, %v742
  %v744 = vpop.f32.mrb[0].mxu0
  %v745 = vpop.f32.mrb[0].mxu0
  %v746 = vadd.f32 %v122, %v745
  %v747 = vpop.f32.mrb[0].mxu0
  %748 = vmatprep.mubr.bf16.mxu0 %v361
  %749 = vmatmul.mubr.bf16.gmra.mrb[0].mxu0 %v360
  %v750 = vpop.f32.mrb[0].mxu0
  %v751 = vadd.f32 %v122, %v750
  %v752 = vpop.f32.mrb[0].mxu0
  %v753 = vpop.f32.mrb[0].mxu0
  %v754 = vadd.f32 %v122, %v753
  %v755 = vpop.f32.mrb[0].mxu0
  %756 = vmatprep.mubr.bf16.mxu0 %v363
  %757 = vmatmul.mubr.bf16.gmra.mrb[0].mxu0 %v362
  %v758 = vpop.f32.mrb[0].mxu0
  %v759 = vadd.f32 %v122, %v758
  %v760 = vpop.f32.mrb[0].mxu0
  %v761 = vpop.f32.mrb[0].mxu0
  %v762 = vadd.f32 %v122, %v761
  %v763 = vpop.f32.mrb[0].mxu0
  %764 = vmatprep.mubr.bf16.mxu0 %v365
  %765 = vmatmul.mubr.bf16.gmra.mrb[0].mxu0 %v364
  %v766 = vpop.f32.mrb[0].mxu0
  %v767 = vadd.f32 %v122, %v766
  %v768 = vpop.f32.mrb[0].mxu0
  %v769 = vpop.f32.mrb[0].mxu0
  %v770 = vadd.f32 %v122, %v769
  %v771 = vpop.f32.mrb[0].mxu0
  %772 = vmatprep.mubr.bf16.mxu0 %v367
  %773 = vmatmul.mubr.bf16.gmra.mrb[0].mxu0 %v366
  %v774 = vpop.f32.mrb[0].mxu0
  %v775 = vadd.f32 %v122, %v774
  %v776 = vpop.f32.mrb[0].mxu0
  %v777 = vpop.f32.mrb[0].mxu0
  %v778 = vadd.f32 %v122, %v777
  %v779 = vpop.f32.mrb[0].mxu0
  %780 = vmatprep.mubr.bf16.mxu0 %v369
  %781 = vmatmul.mubr.bf16.gmra.mrb[0].mxu0 %v368
  %v782 = vpop.f32.mrb[0].mxu0
  %v783 = vadd.f32 %v122, %v782
  %v784 = vpop.f32.mrb[0].mxu0
  %v785 = vpop.f32.mrb[0].mxu0
  %v786 = vadd.f32 %v122, %v785
  %v787 = vpop.f32.mrb[0].mxu0
  %788 = vmatprep.mubr.bf16.mxu0 %v371
  %789 = vmatmul.mubr.bf16.gmra.mrb[0].mxu0 %v370
  %v790 = vpop.f32.mrb[0].mxu0
  %v791 = vadd.f32 %v122, %v790
  %v792 = vpop.f32.mrb[0].mxu0
  %v793 = vpop.f32.mrb[0].mxu0
  %v794 = vadd.f32 %v122, %v793
  %v795 = vpop.f32.mrb[0].mxu0
  %796 = vmatprep.mubr.bf16.mxu0 %v373
  %797 = vmatmul.mubr.bf16.gmra.mrb[0].mxu0 %v372
  %v798 = vpop.f32.mrb[0].mxu0
  %v799 = vadd.f32 %v122, %v798
  %v800 = vpop.f32.mrb[0].mxu0
  %v801 = vpop.f32.mrb[0].mxu0
  %v802 = vadd.f32 %v122, %v801
  %v803 = vpop.f32.mrb[0].mxu0
  %804 = vmatprep.mubr.bf16.mxu0 %v375
  %805 = vmatmul.mubr.bf16.gmra.mrb[0].mxu0 %v374
  %v806 = vpop.f32.mrb[0].mxu0
  %v807 = vadd.f32 %v122, %v806
  %v808 = vpop.f32.mrb[0].mxu0
  %v809 = vpop.f32.mrb[0].mxu0
  %v810 = vadd.f32 %v122, %v809
  %v811 = vpop.f32.mrb[0].mxu0
  %812 = vmatprep.mubr.bf16.mxu0 %v377
  %813 = vmatmul.mubr.bf16.gmra.mrb[0].mxu0 %v376
  %v814 = vpop.f32.mrb[0].mxu0
  %v815 = vadd.f32 %v122, %v814
  %v816 = vpop.f32.mrb[0].mxu0
  %v817 = vpop.f32.mrb[0].mxu0
  %v818 = vadd.f32 %v122, %v817
  %v819 = vpop.f32.mrb[0].mxu0
  %820 = vmatprep.mubr.bf16.mxu0 %v379
  %821 = vmatmul.mubr.bf16.gmra.mrb[0].mxu0 %v378
  %v822 = vpop.f32.mrb[0].mxu0
  %v823 = vadd.f32 %v122, %v822
  %v824 = vpop.f32.mrb[0].mxu0
  %v825 = vpop.f32.mrb[0].mxu0
  %v826 = vadd.f32 %v122, %v825
  %v827 = vpop.f32.mrb[0].mxu0
  %828 = vdwg.mxu0
  %vm829 = vcmask 261120
  %v830 = vsel %vm829, %v575, 0.0
  %v831 = vsel %vm829, %v578, 0.0
  %v832 = vadd.f32 %v830, %v831
  %v833 = vsel %vm829, %v583, 0.0
  %v834 = vadd.f32 %v832, %v833
  %v835 = vsel %vm829, %v586, 0.0
  %v836 = vadd.f32 %v834, %v835
  %v837 = vsel %vm829, %v591, 0.0
  %v838 = vadd.f32 %v836, %v837
  %v839 = vsel %vm829, %v594, 0.0
  %v840 = vadd.f32 %v838, %v839
  %v841 = vsel %vm829, %v599, 0.0
  %v842 = vadd.f32 %v840, %v841
  %v843 = vsel %vm829, %v602, 0.0
  %v844 = vadd.f32 %v842, %v843
  %v845 = vsel %vm829, %v607, 0.0
  %v846 = vadd.f32 %v844, %v845
  %v847 = vsel %vm829, %v610, 0.0
  %v848 = vadd.f32 %v846, %v847
  %v849 = vsel %vm829, %v615, 0.0
  %v850 = vadd.f32 %v848, %v849
  %v851 = vsel %vm829, %v618, 0.0
  %v852 = vadd.f32 %v850, %v851
  %v853 = vsel %vm829, %v623, 0.0
  %v854 = vadd.f32 %v852, %v853
  %v855 = vsel %vm829, %v626, 0.0
  %v856 = vadd.f32 %v854, %v855
  %v857 = vsel %vm829, %v631, 0.0
  %v858 = vadd.f32 %v856, %v857
  %v859 = vsel %vm829, %v634, 0.0
  %v860 = vadd.f32 %v858, %v859
  %v861 = vsel %vm829, %v639, 0.0
  %v862 = vadd.f32 %v860, %v861
  %v863 = vsel %vm829, %v642, 0.0
  %v864 = vadd.f32 %v862, %v863
  %v865 = vsel %vm829, %v647, 0.0
  %v866 = vadd.f32 %v864, %v865
  %v867 = vsel %vm829, %v650, 0.0
  %v868 = vadd.f32 %v866, %v867
  %v869 = vsel %vm829, %v655, 0.0
  %v870 = vadd.f32 %v868, %v869
  %v871 = vsel %vm829, %v658, 0.0
  %v872 = vadd.f32 %v870, %v871
  %v873 = vsel %vm829, %v663, 0.0
  %v874 = vadd.f32 %v872, %v873
  %v875 = vsel %vm829, %v666, 0.0
  %v876 = vadd.f32 %v874, %v875
  %v877 = vsel %vm829, %v671, 0.0
  %v878 = vadd.f32 %v876, %v877
  %v879 = vsel %vm829, %v674, 0.0
  %v880 = vadd.f32 %v878, %v879
  %v881 = vsel %vm829, %v679, 0.0
  %v882 = vadd.f32 %v880, %v881
  %v883 = vsel %vm829, %v682, 0.0
  %v884 = vadd.f32 %v882, %v883
  %v885 = vsel %vm829, %v687, 0.0
  %v886 = vadd.f32 %v884, %v885
  %v887 = vsel %vm829, %v690, 0.0
  %v888 = vadd.f32 %v886, %v887
  %v889 = vsel %vm829, %v695, 0.0
  %v890 = vadd.f32 %v888, %v889
  %v891 = vsel %vm829, %v698, 0.0
  %v892 = vadd.f32 %v890, %v891
  %v893 = vsel %vm829, %v703, 0.0
  %v894 = vadd.f32 %v892, %v893
  %v895 = vsel %vm829, %v706, 0.0
  %v896 = vadd.f32 %v894, %v895
  %v897 = vsel %vm829, %v711, 0.0
  %v898 = vadd.f32 %v896, %v897
  %v899 = vsel %vm829, %v714, 0.0
  %v900 = vadd.f32 %v898, %v899
  %v901 = vsel %vm829, %v719, 0.0
  %v902 = vadd.f32 %v900, %v901
  %v903 = vsel %vm829, %v722, 0.0
  %v904 = vadd.f32 %v902, %v903
  %v905 = vsel %vm829, %v727, 0.0
  %v906 = vadd.f32 %v904, %v905
  %v907 = vsel %vm829, %v730, 0.0
  %v908 = vadd.f32 %v906, %v907
  %v909 = vsel %vm829, %v735, 0.0
  %v910 = vadd.f32 %v908, %v909
  %v911 = vsel %vm829, %v738, 0.0
  %v912 = vadd.f32 %v910, %v911
  %v913 = vsel %vm829, %v743, 0.0
  %v914 = vadd.f32 %v912, %v913
  %v915 = vsel %vm829, %v746, 0.0
  %v916 = vadd.f32 %v914, %v915
  %v917 = vsel %vm829, %v751, 0.0
  %v918 = vadd.f32 %v916, %v917
  %v919 = vsel %vm829, %v754, 0.0
  %v920 = vadd.f32 %v918, %v919
  %v921 = vsel %vm829, %v759, 0.0
  %v922 = vadd.f32 %v920, %v921
  %v923 = vsel %vm829, %v762, 0.0
  %v924 = vadd.f32 %v922, %v923
  %v925 = vsel %vm829, %v767, 0.0
  %v926 = vadd.f32 %v924, %v925
  %v927 = vsel %vm829, %v770, 0.0
  %v928 = vadd.f32 %v926, %v927
  %v929 = vsel %vm829, %v775, 0.0
  %v930 = vadd.f32 %v928, %v929
  %v931 = vsel %vm829, %v778, 0.0
  %v932 = vadd.f32 %v930, %v931
  %v933 = vsel %vm829, %v783, 0.0
  %v934 = vadd.f32 %v932, %v933
  %v935 = vsel %vm829, %v786, 0.0
  %v936 = vadd.f32 %v934, %v935
  %v937 = vsel %vm829, %v791, 0.0
  %v938 = vadd.f32 %v936, %v937
  %v939 = vsel %vm829, %v794, 0.0
  %v940 = vadd.f32 %v938, %v939
  %v941 = vsel %vm829, %v799, 0.0
  %v942 = vadd.f32 %v940, %v941
  %v943 = vsel %vm829, %v802, 0.0
  %v944 = vadd.f32 %v942, %v943
  %v945 = vsel %vm829, %v807, 0.0
  %v946 = vadd.f32 %v944, %v945
  %v947 = vsel %vm829, %v810, 0.0
  %v948 = vadd.f32 %v946, %v947
  %v949 = vsel %vm829, %v815, 0.0
  %v950 = vadd.f32 %v948, %v949
  %v951 = vsel %vm829, %v818, 0.0
  %v952 = vadd.f32 %v950, %v951
  %v953 = vsel %vm829, %v823, 0.0
  %v954 = vadd.f32 %v952, %v953
  %v955 = vsel %vm829, %v826, 0.0
  %v956 = vadd.f32 %v954, %v955
  %v957 = vrot.slane %v956, 4
  %v958 = vadd.f32 %v956, %v957
  %v959 = vrot.slane %v958, 2
  %v960 = vadd.f32 %v958, %v959
  %v961 = vrot.slane %v960, 1
  %v962 = vadd.f32 %v960, %v961
  %v963 = vmul.f32 %v962, 0.001953125
  %v964 = vsub.f32 %v575, %v963
  %v965 = vsub.f32 %v578, %v963
  %v966 = vsub.f32 %v583, %v963
  %v967 = vsub.f32 %v586, %v963
  %v968 = vsub.f32 %v591, %v963
  %v969 = vsub.f32 %v594, %v963
  %v970 = vsub.f32 %v599, %v963
  %v971 = vsub.f32 %v602, %v963
  %v972 = vsub.f32 %v607, %v963
  %v973 = vsub.f32 %v610, %v963
  %v974 = vsub.f32 %v615, %v963
  %v975 = vsub.f32 %v618, %v963
  %v976 = vsub.f32 %v623, %v963
  %v977 = vsub.f32 %v626, %v963
  %v978 = vsub.f32 %v631, %v963
  %v979 = vsub.f32 %v634, %v963
  %v980 = vsub.f32 %v639, %v963
  %v981 = vsub.f32 %v642, %v963
  %v982 = vsub.f32 %v647, %v963
  %v983 = vsub.f32 %v650, %v963
  %v984 = vsub.f32 %v655, %v963
  %v985 = vsub.f32 %v658, %v963
  %v986 = vsub.f32 %v663, %v963
  %v987 = vsub.f32 %v666, %v963
  %v988 = vsub.f32 %v671, %v963
  %v989 = vsub.f32 %v674, %v963
  %v990 = vsub.f32 %v679, %v963
  %v991 = vsub.f32 %v682, %v963
  %v992 = vsub.f32 %v687, %v963
  %v993 = vsub.f32 %v690, %v963
  %v994 = vsub.f32 %v695, %v963
  %v995 = vsub.f32 %v698, %v963
  %v996 = vsub.f32 %v703, %v963
  %v997 = vsub.f32 %v706, %v963
  %v998 = vsub.f32 %v711, %v963
  %v999 = vsub.f32 %v714, %v963
  %v1000 = vsub.f32 %v719, %v963
  %v1001 = vsub.f32 %v722, %v963
  %v1002 = vsub.f32 %v727, %v963
  %v1003 = vsub.f32 %v730, %v963
  %v1004 = vsub.f32 %v735, %v963
  %v1005 = vsub.f32 %v738, %v963
  %v1006 = vsub.f32 %v743, %v963
  %v1007 = vsub.f32 %v746, %v963
  %v1008 = vsub.f32 %v751, %v963
  %v1009 = vsub.f32 %v754, %v963
  %v1010 = vsub.f32 %v759, %v963
  %v1011 = vsub.f32 %v762, %v963
  %v1012 = vsub.f32 %v767, %v963
  %v1013 = vsub.f32 %v770, %v963
  %v1014 = vsub.f32 %v775, %v963
  %v1015 = vsub.f32 %v778, %v963
  %v1016 = vsub.f32 %v783, %v963
  %v1017 = vsub.f32 %v786, %v963
  %v1018 = vsub.f32 %v791, %v963
  %v1019 = vsub.f32 %v794, %v963
  %v1020 = vsub.f32 %v799, %v963
  %v1021 = vsub.f32 %v802, %v963
  %v1022 = vsub.f32 %v807, %v963
  %v1023 = vsub.f32 %v810, %v963
  %v1024 = vsub.f32 %v815, %v963
  %v1025 = vsub.f32 %v818, %v963
  %v1026 = vsub.f32 %v823, %v963
  %v1027 = vsub.f32 %v826, %v963
  %v1028 = vmul.f32 %v964, %v964
  %v1029 = vmul.f32 %v965, %v965
  %v1030 = vmul.f32 %v966, %v966
  %v1031 = vmul.f32 %v967, %v967
  %v1032 = vmul.f32 %v968, %v968
  %v1033 = vmul.f32 %v969, %v969
  %v1034 = vmul.f32 %v970, %v970
  %v1035 = vmul.f32 %v971, %v971
  %v1036 = vmul.f32 %v972, %v972
  %v1037 = vmul.f32 %v973, %v973
  %v1038 = vmul.f32 %v974, %v974
  %v1039 = vmul.f32 %v975, %v975
  %v1040 = vmul.f32 %v976, %v976
  %v1041 = vmul.f32 %v977, %v977
  %v1042 = vmul.f32 %v978, %v978
  %v1043 = vmul.f32 %v979, %v979
  %v1044 = vmul.f32 %v980, %v980
  %v1045 = vmul.f32 %v981, %v981
  %v1046 = vmul.f32 %v982, %v982
  %v1047 = vmul.f32 %v983, %v983
  %v1048 = vmul.f32 %v984, %v984
  %v1049 = vmul.f32 %v985, %v985
  %v1050 = vmul.f32 %v986, %v986
  %v1051 = vmul.f32 %v987, %v987
  %v1052 = vmul.f32 %v988, %v988
  %v1053 = vmul.f32 %v989, %v989
  %v1054 = vmul.f32 %v990, %v990
  %v1055 = vmul.f32 %v991, %v991
  %v1056 = vmul.f32 %v992, %v992
  %v1057 = vmul.f32 %v993, %v993
  %v1058 = vmul.f32 %v994, %v994
  %v1059 = vmul.f32 %v995, %v995
  %v1060 = vmul.f32 %v996, %v996
  %v1061 = vmul.f32 %v997, %v997
  %v1062 = vmul.f32 %v998, %v998
  %v1063 = vmul.f32 %v999, %v999
  %v1064 = vmul.f32 %v1000, %v1000
  %v1065 = vmul.f32 %v1001, %v1001
  %v1066 = vmul.f32 %v1002, %v1002
  %v1067 = vmul.f32 %v1003, %v1003
  %v1068 = vmul.f32 %v1004, %v1004
  %v1069 = vmul.f32 %v1005, %v1005
  %v1070 = vmul.f32 %v1006, %v1006
  %v1071 = vmul.f32 %v1007, %v1007
  %v1072 = vmul.f32 %v1008, %v1008
  %v1073 = vmul.f32 %v1009, %v1009
  %v1074 = vmul.f32 %v1010, %v1010
  %v1075 = vmul.f32 %v1011, %v1011
  %v1076 = vmul.f32 %v1012, %v1012
  %v1077 = vmul.f32 %v1013, %v1013
  %v1078 = vmul.f32 %v1014, %v1014
  %v1079 = vmul.f32 %v1015, %v1015
  %v1080 = vmul.f32 %v1016, %v1016
  %v1081 = vmul.f32 %v1017, %v1017
  %v1082 = vmul.f32 %v1018, %v1018
  %v1083 = vmul.f32 %v1019, %v1019
  %v1084 = vmul.f32 %v1020, %v1020
  %v1085 = vmul.f32 %v1021, %v1021
  %v1086 = vmul.f32 %v1022, %v1022
  %v1087 = vmul.f32 %v1023, %v1023
  %v1088 = vmul.f32 %v1024, %v1024
  %v1089 = vmul.f32 %v1025, %v1025
  %v1090 = vmul.f32 %v1026, %v1026
  %v1091 = vmul.f32 %v1027, %v1027
  %v1092 = vsel %vm829, %v1028, 0.0
  %v1093 = vsel %vm829, %v1029, 0.0
  %v1094 = vadd.f32 %v1092, %v1093
  %v1095 = vsel %vm829, %v1030, 0.0
  %v1096 = vadd.f32 %v1094, %v1095
  %v1097 = vsel %vm829, %v1031, 0.0
  %v1098 = vadd.f32 %v1096, %v1097
  %v1099 = vsel %vm829, %v1032, 0.0
  %v1100 = vadd.f32 %v1098, %v1099
  %v1101 = vsel %vm829, %v1033, 0.0
  %v1102 = vadd.f32 %v1100, %v1101
  %v1103 = vsel %vm829, %v1034, 0.0
  %v1104 = vadd.f32 %v1102, %v1103
  %v1105 = vsel %vm829, %v1035, 0.0
  %v1106 = vadd.f32 %v1104, %v1105
  %v1107 = vsel %vm829, %v1036, 0.0
  %v1108 = vadd.f32 %v1106, %v1107
  %v1109 = vsel %vm829, %v1037, 0.0
  %v1110 = vadd.f32 %v1108, %v1109
  %v1111 = vsel %vm829, %v1038, 0.0
  %v1112 = vadd.f32 %v1110, %v1111
  %v1113 = vsel %vm829, %v1039, 0.0
  %v1114 = vadd.f32 %v1112, %v1113
  %v1115 = vsel %vm829, %v1040, 0.0
  %v1116 = vadd.f32 %v1114, %v1115
  %v1117 = vsel %vm829, %v1041, 0.0
  %v1118 = vadd.f32 %v1116, %v1117
  %v1119 = vsel %vm829, %v1042, 0.0
  %v1120 = vadd.f32 %v1118, %v1119
  %v1121 = vsel %vm829, %v1043, 0.0
  %v1122 = vadd.f32 %v1120, %v1121
  %v1123 = vsel %vm829, %v1044, 0.0
  %v1124 = vadd.f32 %v1122, %v1123
  %v1125 = vsel %vm829, %v1045, 0.0
  %v1126 = vadd.f32 %v1124, %v1125
  %v1127 = vsel %vm829, %v1046, 0.0
  %v1128 = vadd.f32 %v1126, %v1127
  %v1129 = vsel %vm829, %v1047, 0.0
  %v1130 = vadd.f32 %v1128, %v1129
  %v1131 = vsel %vm829, %v1048, 0.0
  %v1132 = vadd.f32 %v1130, %v1131
  %v1133 = vsel %vm829, %v1049, 0.0
  %v1134 = vadd.f32 %v1132, %v1133
  %v1135 = vsel %vm829, %v1050, 0.0
  %v1136 = vadd.f32 %v1134, %v1135
  %v1137 = vsel %vm829, %v1051, 0.0
  %v1138 = vadd.f32 %v1136, %v1137
  %v1139 = vsel %vm829, %v1052, 0.0
  %v1140 = vadd.f32 %v1138, %v1139
  %v1141 = vsel %vm829, %v1053, 0.0
  %v1142 = vadd.f32 %v1140, %v1141
  %v1143 = vsel %vm829, %v1054, 0.0
  %v1144 = vadd.f32 %v1142, %v1143
  %v1145 = vsel %vm829, %v1055, 0.0
  %v1146 = vadd.f32 %v1144, %v1145
  %v1147 = vsel %vm829, %v1056, 0.0
  %v1148 = vadd.f32 %v1146, %v1147
  %v1149 = vsel %vm829, %v1057, 0.0
  %v1150 = vadd.f32 %v1148, %v1149
  %v1151 = vsel %vm829, %v1058, 0.0
  %v1152 = vadd.f32 %v1150, %v1151
  %v1153 = vsel %vm829, %v1059, 0.0
  %v1154 = vadd.f32 %v1152, %v1153
  %v1155 = vsel %vm829, %v1060, 0.0
  %v1156 = vadd.f32 %v1154, %v1155
  %v1157 = vsel %vm829, %v1061, 0.0
  %v1158 = vadd.f32 %v1156, %v1157
  %v1159 = vsel %vm829, %v1062, 0.0
  %v1160 = vadd.f32 %v1158, %v1159
  %v1161 = vsel %vm829, %v1063, 0.0
  %v1162 = vadd.f32 %v1160, %v1161
  %v1163 = vsel %vm829, %v1064, 0.0
  %v1164 = vadd.f32 %v1162, %v1163
  %v1165 = vsel %vm829, %v1065, 0.0
  %v1166 = vadd.f32 %v1164, %v1165
  %v1167 = vsel %vm829, %v1066, 0.0
  %v1168 = vadd.f32 %v1166, %v1167
  %v1169 = vsel %vm829, %v1067, 0.0
  %v1170 = vadd.f32 %v1168, %v1169
  %v1171 = vsel %vm829, %v1068, 0.0
  %v1172 = vadd.f32 %v1170, %v1171
  %v1173 = vsel %vm829, %v1069, 0.0
  %v1174 = vadd.f32 %v1172, %v1173
  %v1175 = vsel %vm829, %v1070, 0.0
  %v1176 = vadd.f32 %v1174, %v1175
  %v1177 = vsel %vm829, %v1071, 0.0
  %v1178 = vadd.f32 %v1176, %v1177
  %v1179 = vsel %vm829, %v1072, 0.0
  %v1180 = vadd.f32 %v1178, %v1179
  %v1181 = vsel %vm829, %v1073, 0.0
  %v1182 = vadd.f32 %v1180, %v1181
  %v1183 = vsel %vm829, %v1074, 0.0
  %v1184 = vadd.f32 %v1182, %v1183
  %v1185 = vsel %vm829, %v1075, 0.0
  %v1186 = vadd.f32 %v1184, %v1185
  %v1187 = vsel %vm829, %v1076, 0.0
  %v1188 = vadd.f32 %v1186, %v1187
  %v1189 = vsel %vm829, %v1077, 0.0
  %v1190 = vadd.f32 %v1188, %v1189
  %v1191 = vsel %vm829, %v1078, 0.0
  %v1192 = vadd.f32 %v1190, %v1191
  %v1193 = vsel %vm829, %v1079, 0.0
  %v1194 = vadd.f32 %v1192, %v1193
  %v1195 = vsel %vm829, %v1080, 0.0
  %v1196 = vadd.f32 %v1194, %v1195
  %v1197 = vsel %vm829, %v1081, 0.0
  %v1198 = vadd.f32 %v1196, %v1197
  %v1199 = vsel %vm829, %v1082, 0.0
  %v1200 = vadd.f32 %v1198, %v1199
  %v1201 = vsel %vm829, %v1083, 0.0
  %v1202 = vadd.f32 %v1200, %v1201
  %v1203 = vsel %vm829, %v1084, 0.0
  %v1204 = vadd.f32 %v1202, %v1203
  %v1205 = vsel %vm829, %v1085, 0.0
  %v1206 = vadd.f32 %v1204, %v1205
  %v1207 = vsel %vm829, %v1086, 0.0
  %v1208 = vadd.f32 %v1206, %v1207
  %v1209 = vsel %vm829, %v1087, 0.0
  %v1210 = vadd.f32 %v1208, %v1209
  %v1211 = vsel %vm829, %v1088, 0.0
  %v1212 = vadd.f32 %v1210, %v1211
  %v1213 = vsel %vm829, %v1089, 0.0
  %v1214 = vadd.f32 %v1212, %v1213
  %v1215 = vsel %vm829, %v1090, 0.0
  %v1216 = vadd.f32 %v1214, %v1215
  %v1217 = vsel %vm829, %v1091, 0.0
  %v1218 = vadd.f32 %v1216, %v1217
  %v1219 = vrot.slane %v1218, 4
  %v1220 = vadd.f32 %v1218, %v1219
  %v1221 = vrot.slane %v1220, 2
  %v1222 = vadd.f32 %v1220, %v1221
  %v1223 = vrot.slane %v1222, 1
  %v1224 = vadd.f32 %v1222, %v1223
  %v1225 = vmul.f32 %v1224, 0.001953125
  %v1226 = vld [vmem:[%s3] sm:$0x1]
  %v1227 = vadd.f32 %v1225, 1e-05
  %v1228 = vrsqrt.pop %v1227
  %v1229 = vmul.f32 %v1226, %v1228
  %v1231 = vlaneseq
  %v1232 = vshrl.u32 %v1231, 7
  %v1233 = vsub.s32 0, %v1232
  %v1234 = vrot.slane %v1229, %v1233
  %v1236 = vmul.f32 %v964, %v1234
  %v1237 = vmul.f32 %v965, %v1234
  %v1238 = vmul.f32 %v966, %v1234
  %v1239 = vmul.f32 %v967, %v1234
  %v1240 = vmul.f32 %v968, %v1234
  %v1241 = vmul.f32 %v969, %v1234
  %v1242 = vmul.f32 %v970, %v1234
  %v1243 = vmul.f32 %v971, %v1234
  %v1244 = vmul.f32 %v972, %v1234
  %v1245 = vmul.f32 %v973, %v1234
  %v1246 = vmul.f32 %v974, %v1234
  %v1247 = vmul.f32 %v975, %v1234
  %v1248 = vmul.f32 %v976, %v1234
  %v1249 = vmul.f32 %v977, %v1234
  %v1250 = vmul.f32 %v978, %v1234
  %v1251 = vmul.f32 %v979, %v1234
  %v1252 = vmul.f32 %v980, %v1234
  %v1253 = vmul.f32 %v981, %v1234
  %v1254 = vmul.f32 %v982, %v1234
  %v1255 = vmul.f32 %v983, %v1234
  %v1256 = vmul.f32 %v984, %v1234
  %v1257 = vmul.f32 %v985, %v1234
  %v1258 = vmul.f32 %v986, %v1234
  %v1259 = vmul.f32 %v987, %v1234
  %v1260 = vmul.f32 %v988, %v1234
  %v1261 = vmul.f32 %v989, %v1234
  %v1262 = vmul.f32 %v990, %v1234
  %v1263 = vmul.f32 %v991, %v1234
  %v1264 = vmul.f32 %v992, %v1234
  %v1265 = vmul.f32 %v993, %v1234
  %v1266 = vmul.f32 %v994, %v1234
  %v1267 = vmul.f32 %v995, %v1234
  %v1268 = vmul.f32 %v996, %v1234
  %v1269 = vmul.f32 %v997, %v1234
  %v1270 = vmul.f32 %v998, %v1234
  %v1271 = vmul.f32 %v999, %v1234
  %v1272 = vmul.f32 %v1000, %v1234
  %v1273 = vmul.f32 %v1001, %v1234
  %v1274 = vmul.f32 %v1002, %v1234
  %v1275 = vmul.f32 %v1003, %v1234
  %v1276 = vmul.f32 %v1004, %v1234
  %v1277 = vmul.f32 %v1005, %v1234
  %v1278 = vmul.f32 %v1006, %v1234
  %v1279 = vmul.f32 %v1007, %v1234
  %v1280 = vmul.f32 %v1008, %v1234
  %v1281 = vmul.f32 %v1009, %v1234
  %v1282 = vmul.f32 %v1010, %v1234
  %v1283 = vmul.f32 %v1011, %v1234
  %v1284 = vmul.f32 %v1012, %v1234
  %v1285 = vmul.f32 %v1013, %v1234
  %v1286 = vmul.f32 %v1014, %v1234
  %v1287 = vmul.f32 %v1015, %v1234
  %v1288 = vmul.f32 %v1016, %v1234
  %v1289 = vmul.f32 %v1017, %v1234
  %v1290 = vmul.f32 %v1018, %v1234
  %v1291 = vmul.f32 %v1019, %v1234
  %v1292 = vmul.f32 %v1020, %v1234
  %v1293 = vmul.f32 %v1021, %v1234
  %v1294 = vmul.f32 %v1022, %v1234
  %v1295 = vmul.f32 %v1023, %v1234
  %v1296 = vmul.f32 %v1024, %v1234
  %v1297 = vmul.f32 %v1025, %v1234
  %v1298 = vmul.f32 %v1026, %v1234
  %v1299 = vmul.f32 %v1027, %v1234
  %v1300 = vld [vmem:[%s4] sm:$0x1]
  %v1302 = vlaneseq
  %v1303 = vshrl.u32 %v1302, 7
  %v1304 = vsub.s32 0, %v1303
  %v1305 = vrot.slane %v1300, %v1304
  %v1307 = vadd.f32 %v1236, %v1305
  %v1308 = vadd.f32 %v1237, %v1305
  %v1309 = vadd.f32 %v1238, %v1305
  %v1310 = vadd.f32 %v1239, %v1305
  %v1311 = vadd.f32 %v1240, %v1305
  %v1312 = vadd.f32 %v1241, %v1305
  %v1313 = vadd.f32 %v1242, %v1305
  %v1314 = vadd.f32 %v1243, %v1305
  %v1315 = vadd.f32 %v1244, %v1305
  %v1316 = vadd.f32 %v1245, %v1305
  %v1317 = vadd.f32 %v1246, %v1305
  %v1318 = vadd.f32 %v1247, %v1305
  %v1319 = vadd.f32 %v1248, %v1305
  %v1320 = vadd.f32 %v1249, %v1305
  %v1321 = vadd.f32 %v1250, %v1305
  %v1322 = vadd.f32 %v1251, %v1305
  %v1323 = vadd.f32 %v1252, %v1305
  %v1324 = vadd.f32 %v1253, %v1305
  %v1325 = vadd.f32 %v1254, %v1305
  %v1326 = vadd.f32 %v1255, %v1305
  %v1327 = vadd.f32 %v1256, %v1305
  %v1328 = vadd.f32 %v1257, %v1305
  %v1329 = vadd.f32 %v1258, %v1305
  %v1330 = vadd.f32 %v1259, %v1305
  %v1331 = vadd.f32 %v1260, %v1305
  %v1332 = vadd.f32 %v1261, %v1305
  %v1333 = vadd.f32 %v1262, %v1305
  %v1334 = vadd.f32 %v1263, %v1305
  %v1335 = vadd.f32 %v1264, %v1305
  %v1336 = vadd.f32 %v1265, %v1305
  %v1337 = vadd.f32 %v1266, %v1305
  %v1338 = vadd.f32 %v1267, %v1305
  %v1339 = vadd.f32 %v1268, %v1305
  %v1340 = vadd.f32 %v1269, %v1305
  %v1341 = vadd.f32 %v1270, %v1305
  %v1342 = vadd.f32 %v1271, %v1305
  %v1343 = vadd.f32 %v1272, %v1305
  %v1344 = vadd.f32 %v1273, %v1305
  %v1345 = vadd.f32 %v1274, %v1305
  %v1346 = vadd.f32 %v1275, %v1305
  %v1347 = vadd.f32 %v1276, %v1305
  %v1348 = vadd.f32 %v1277, %v1305
  %v1349 = vadd.f32 %v1278, %v1305
  %v1350 = vadd.f32 %v1279, %v1305
  %v1351 = vadd.f32 %v1280, %v1305
  %v1352 = vadd.f32 %v1281, %v1305
  %v1353 = vadd.f32 %v1282, %v1305
  %v1354 = vadd.f32 %v1283, %v1305
  %v1355 = vadd.f32 %v1284, %v1305
  %v1356 = vadd.f32 %v1285, %v1305
  %v1357 = vadd.f32 %v1286, %v1305
  %v1358 = vadd.f32 %v1287, %v1305
  %v1359 = vadd.f32 %v1288, %v1305
  %v1360 = vadd.f32 %v1289, %v1305
  %v1361 = vadd.f32 %v1290, %v1305
  %v1362 = vadd.f32 %v1291, %v1305
  %v1363 = vadd.f32 %v1292, %v1305
  %v1364 = vadd.f32 %v1293, %v1305
  %v1365 = vadd.f32 %v1294, %v1305
  %v1366 = vadd.f32 %v1295, %v1305
  %v1367 = vadd.f32 %v1296, %v1305
  %v1368 = vadd.f32 %v1297, %v1305
  %v1369 = vadd.f32 %v1298, %v1305
  %v1370 = vadd.f32 %v1299, %v1305
  %vm1371 = vcmp.ge.f32.partialorder %v1307, 0.0
  %vm1372 = vcmp.ge.f32.partialorder %v1308, 0.0
  %vm1373 = vcmp.ge.f32.partialorder %v1309, 0.0
  %vm1374 = vcmp.ge.f32.partialorder %v1310, 0.0
  %vm1375 = vcmp.ge.f32.partialorder %v1311, 0.0
  %vm1376 = vcmp.ge.f32.partialorder %v1312, 0.0
  %vm1377 = vcmp.ge.f32.partialorder %v1313, 0.0
  %vm1378 = vcmp.ge.f32.partialorder %v1314, 0.0
  %vm1379 = vcmp.ge.f32.partialorder %v1315, 0.0
  %vm1380 = vcmp.ge.f32.partialorder %v1316, 0.0
  %vm1381 = vcmp.ge.f32.partialorder %v1317, 0.0
  %vm1382 = vcmp.ge.f32.partialorder %v1318, 0.0
  %vm1383 = vcmp.ge.f32.partialorder %v1319, 0.0
  %vm1384 = vcmp.ge.f32.partialorder %v1320, 0.0
  %vm1385 = vcmp.ge.f32.partialorder %v1321, 0.0
  %vm1386 = vcmp.ge.f32.partialorder %v1322, 0.0
  %vm1387 = vcmp.ge.f32.partialorder %v1323, 0.0
  %vm1388 = vcmp.ge.f32.partialorder %v1324, 0.0
  %vm1389 = vcmp.ge.f32.partialorder %v1325, 0.0
  %vm1390 = vcmp.ge.f32.partialorder %v1326, 0.0
  %vm1391 = vcmp.ge.f32.partialorder %v1327, 0.0
  %vm1392 = vcmp.ge.f32.partialorder %v1328, 0.0
  %vm1393 = vcmp.ge.f32.partialorder %v1329, 0.0
  %vm1394 = vcmp.ge.f32.partialorder %v1330, 0.0
  %vm1395 = vcmp.ge.f32.partialorder %v1331, 0.0
  %vm1396 = vcmp.ge.f32.partialorder %v1332, 0.0
  %vm1397 = vcmp.ge.f32.partialorder %v1333, 0.0
  %vm1398 = vcmp.ge.f32.partialorder %v1334, 0.0
  %vm1399 = vcmp.ge.f32.partialorder %v1335, 0.0
  %vm1400 = vcmp.ge.f32.partialorder %v1336, 0.0
  %vm1401 = vcmp.ge.f32.partialorder %v1337, 0.0
  %vm1402 = vcmp.ge.f32.partialorder %v1338, 0.0
  %vm1403 = vcmp.ge.f32.partialorder %v1339, 0.0
  %vm1404 = vcmp.ge.f32.partialorder %v1340, 0.0
  %vm1405 = vcmp.ge.f32.partialorder %v1341, 0.0
  %vm1406 = vcmp.ge.f32.partialorder %v1342, 0.0
  %vm1407 = vcmp.ge.f32.partialorder %v1343, 0.0
  %vm1408 = vcmp.ge.f32.partialorder %v1344, 0.0
  %vm1409 = vcmp.ge.f32.partialorder %v1345, 0.0
  %vm1410 = vcmp.ge.f32.partialorder %v1346, 0.0
  %vm1411 = vcmp.ge.f32.partialorder %v1347, 0.0
  %vm1412 = vcmp.ge.f32.partialorder %v1348, 0.0
  %vm1413 = vcmp.ge.f32.partialorder %v1349, 0.0
  %vm1414 = vcmp.ge.f32.partialorder %v1350, 0.0
  %vm1415 = vcmp.ge.f32.partialorder %v1351, 0.0
  %vm1416 = vcmp.ge.f32.partialorder %v1352, 0.0
  %vm1417 = vcmp.ge.f32.partialorder %v1353, 0.0
  %vm1418 = vcmp.ge.f32.partialorder %v1354, 0.0
  %vm1419 = vcmp.ge.f32.partialorder %v1355, 0.0
  %vm1420 = vcmp.ge.f32.partialorder %v1356, 0.0
  %vm1421 = vcmp.ge.f32.partialorder %v1357, 0.0
  %vm1422 = vcmp.ge.f32.partialorder %v1358, 0.0
  %vm1423 = vcmp.ge.f32.partialorder %v1359, 0.0
  %vm1424 = vcmp.ge.f32.partialorder %v1360, 0.0
  %vm1425 = vcmp.ge.f32.partialorder %v1361, 0.0
  %vm1426 = vcmp.ge.f32.partialorder %v1362, 0.0
  %vm1427 = vcmp.ge.f32.partialorder %v1363, 0.0
  %vm1428 = vcmp.ge.f32.partialorder %v1364, 0.0
  %vm1429 = vcmp.ge.f32.partialorder %v1365, 0.0
  %vm1430 = vcmp.ge.f32.partialorder %v1366, 0.0
  %vm1431 = vcmp.ge.f32.partialorder %v1367, 0.0
  %vm1432 = vcmp.ge.f32.partialorder %v1368, 0.0
  %vm1433 = vcmp.ge.f32.partialorder %v1369, 0.0
  %vm1434 = vcmp.ge.f32.partialorder %v1370, 0.0
  %v1435 = vmul.f32 %v1307, 0.2
  %v1436 = vmul.f32 %v1308, 0.2
  %v1437 = vmul.f32 %v1309, 0.2
  %v1438 = vmul.f32 %v1310, 0.2
  %v1439 = vmul.f32 %v1311, 0.2
  %v1440 = vmul.f32 %v1312, 0.2
  %v1441 = vmul.f32 %v1313, 0.2
  %v1442 = vmul.f32 %v1314, 0.2
  %v1443 = vmul.f32 %v1315, 0.2
  %v1444 = vmul.f32 %v1316, 0.2
  %v1445 = vmul.f32 %v1317, 0.2
  %v1446 = vmul.f32 %v1318, 0.2
  %v1447 = vmul.f32 %v1319, 0.2
  %v1448 = vmul.f32 %v1320, 0.2
  %v1449 = vmul.f32 %v1321, 0.2
  %v1450 = vmul.f32 %v1322, 0.2
  %v1451 = vmul.f32 %v1323, 0.2
  %v1452 = vmul.f32 %v1324, 0.2
  %v1453 = vmul.f32 %v1325, 0.2
  %v1454 = vmul.f32 %v1326, 0.2
  %v1455 = vmul.f32 %v1327, 0.2
  %v1456 = vmul.f32 %v1328, 0.2
  %v1457 = vmul.f32 %v1329, 0.2
  %v1458 = vmul.f32 %v1330, 0.2
  %v1459 = vmul.f32 %v1331, 0.2
  %v1460 = vmul.f32 %v1332, 0.2
  %v1461 = vmul.f32 %v1333, 0.2
  %v1462 = vmul.f32 %v1334, 0.2
  %v1463 = vmul.f32 %v1335, 0.2
  %v1464 = vmul.f32 %v1336, 0.2
  %v1465 = vmul.f32 %v1337, 0.2
  %v1466 = vmul.f32 %v1338, 0.2
  %v1467 = vmul.f32 %v1339, 0.2
  %v1468 = vmul.f32 %v1340, 0.2
  %v1469 = vmul.f32 %v1341, 0.2
  %v1470 = vmul.f32 %v1342, 0.2
  %v1471 = vmul.f32 %v1343, 0.2
  %v1472 = vmul.f32 %v1344, 0.2
  %v1473 = vmul.f32 %v1345, 0.2
  %v1474 = vmul.f32 %v1346, 0.2
  %v1475 = vmul.f32 %v1347, 0.2
  %v1476 = vmul.f32 %v1348, 0.2
  %v1477 = vmul.f32 %v1349, 0.2
  %v1478 = vmul.f32 %v1350, 0.2
  %v1479 = vmul.f32 %v1351, 0.2
  %v1480 = vmul.f32 %v1352, 0.2
  %v1481 = vmul.f32 %v1353, 0.2
  %v1482 = vmul.f32 %v1354, 0.2
  %v1483 = vmul.f32 %v1355, 0.2
  %v1484 = vmul.f32 %v1356, 0.2
  %v1485 = vmul.f32 %v1357, 0.2
  %v1486 = vmul.f32 %v1358, 0.2
  %v1487 = vmul.f32 %v1359, 0.2
  %v1488 = vmul.f32 %v1360, 0.2
  %v1489 = vmul.f32 %v1361, 0.2
  %v1490 = vmul.f32 %v1362, 0.2
  %v1491 = vmul.f32 %v1363, 0.2
  %v1492 = vmul.f32 %v1364, 0.2
  %v1493 = vmul.f32 %v1365, 0.2
  %v1494 = vmul.f32 %v1366, 0.2
  %v1495 = vmul.f32 %v1367, 0.2
  %v1496 = vmul.f32 %v1368, 0.2
  %v1497 = vmul.f32 %v1369, 0.2
  %v1498 = vmul.f32 %v1370, 0.2
  %v1499 = vsel %vm1371, %v1307, %v1435
  %v1500 = vsel %vm1372, %v1308, %v1436
  %v1501 = vsel %vm1373, %v1309, %v1437
  %v1502 = vsel %vm1374, %v1310, %v1438
  %v1503 = vsel %vm1375, %v1311, %v1439
  %v1504 = vsel %vm1376, %v1312, %v1440
  %v1505 = vsel %vm1377, %v1313, %v1441
  %v1506 = vsel %vm1378, %v1314, %v1442
  %v1507 = vsel %vm1379, %v1315, %v1443
  %v1508 = vsel %vm1380, %v1316, %v1444
  %v1509 = vsel %vm1381, %v1317, %v1445
  %v1510 = vsel %vm1382, %v1318, %v1446
  %v1511 = vsel %vm1383, %v1319, %v1447
  %v1512 = vsel %vm1384, %v1320, %v1448
  %v1513 = vsel %vm1385, %v1321, %v1449
  %v1514 = vsel %vm1386, %v1322, %v1450
  %v1515 = vsel %vm1387, %v1323, %v1451
  %v1516 = vsel %vm1388, %v1324, %v1452
  %v1517 = vsel %vm1389, %v1325, %v1453
  %v1518 = vsel %vm1390, %v1326, %v1454
  %v1519 = vsel %vm1391, %v1327, %v1455
  %v1520 = vsel %vm1392, %v1328, %v1456
  %v1521 = vsel %vm1393, %v1329, %v1457
  %v1522 = vsel %vm1394, %v1330, %v1458
  %v1523 = vsel %vm1395, %v1331, %v1459
  %v1524 = vsel %vm1396, %v1332, %v1460
  %v1525 = vsel %vm1397, %v1333, %v1461
  %v1526 = vsel %vm1398, %v1334, %v1462
  %v1527 = vsel %vm1399, %v1335, %v1463
  %v1528 = vsel %vm1400, %v1336, %v1464
  %v1529 = vsel %vm1401, %v1337, %v1465
  %v1530 = vsel %vm1402, %v1338, %v1466
  %v1531 = vsel %vm1403, %v1339, %v1467
  %v1532 = vsel %vm1404, %v1340, %v1468
  %v1533 = vsel %vm1405, %v1341, %v1469
  %v1534 = vsel %vm1406, %v1342, %v1470
  %v1535 = vsel %vm1407, %v1343, %v1471
  %v1536 = vsel %vm1408, %v1344, %v1472
  %v1537 = vsel %vm1409, %v1345, %v1473
  %v1538 = vsel %vm1410, %v1346, %v1474
  %v1539 = vsel %vm1411, %v1347, %v1475
  %v1540 = vsel %vm1412, %v1348, %v1476
  %v1541 = vsel %vm1413, %v1349, %v1477
  %v1542 = vsel %vm1414, %v1350, %v1478
  %v1543 = vsel %vm1415, %v1351, %v1479
  %v1544 = vsel %vm1416, %v1352, %v1480
  %v1545 = vsel %vm1417, %v1353, %v1481
  %v1546 = vsel %vm1418, %v1354, %v1482
  %v1547 = vsel %vm1419, %v1355, %v1483
  %v1548 = vsel %vm1420, %v1356, %v1484
  %v1549 = vsel %vm1421, %v1357, %v1485
  %v1550 = vsel %vm1422, %v1358, %v1486
  %v1551 = vsel %vm1423, %v1359, %v1487
  %v1552 = vsel %vm1424, %v1360, %v1488
  %v1553 = vsel %vm1425, %v1361, %v1489
  %v1554 = vsel %vm1426, %v1362, %v1490
  %v1555 = vsel %vm1427, %v1363, %v1491
  %v1556 = vsel %vm1428, %v1364, %v1492
  %v1557 = vsel %vm1429, %v1365, %v1493
  %v1558 = vsel %vm1430, %v1366, %v1494
  %v1559 = vsel %vm1431, %v1367, %v1495
  %v1560 = vsel %vm1432, %v1368, %v1496
  %v1561 = vsel %vm1433, %v1369, %v1497
  %v1562 = vsel %vm1434, %v1370, %v1498
  %v1563 = vpack.c.bf16 %v1500, %v1499
  %v1564 = vpack.c.bf16 %v1502, %v1501
  %v1565 = vpack.c.bf16 %v1504, %v1503
  %v1566 = vpack.c.bf16 %v1506, %v1505
  %v1567 = vpack.c.bf16 %v1508, %v1507
  %v1568 = vpack.c.bf16 %v1510, %v1509
  %v1569 = vpack.c.bf16 %v1512, %v1511
  %v1570 = vpack.c.bf16 %v1514, %v1513
  %v1571 = vpack.c.bf16 %v1516, %v1515
  %v1572 = vpack.c.bf16 %v1518, %v1517
  %v1573 = vpack.c.bf16 %v1520, %v1519
  %v1574 = vpack.c.bf16 %v1522, %v1521
  %v1575 = vpack.c.bf16 %v1524, %v1523
  %v1576 = vpack.c.bf16 %v1526, %v1525
  %v1577 = vpack.c.bf16 %v1528, %v1527
  %v1578 = vpack.c.bf16 %v1530, %v1529
  %v1579 = vpack.c.bf16 %v1532, %v1531
  %v1580 = vpack.c.bf16 %v1534, %v1533
  %v1581 = vpack.c.bf16 %v1536, %v1535
  %v1582 = vpack.c.bf16 %v1538, %v1537
  %v1583 = vpack.c.bf16 %v1540, %v1539
  %v1584 = vpack.c.bf16 %v1542, %v1541
  %v1585 = vpack.c.bf16 %v1544, %v1543
  %v1586 = vpack.c.bf16 %v1546, %v1545
  %v1587 = vpack.c.bf16 %v1548, %v1547
  %v1588 = vpack.c.bf16 %v1550, %v1549
  %v1589 = vpack.c.bf16 %v1552, %v1551
  %v1590 = vpack.c.bf16 %v1554, %v1553
  %v1591 = vpack.c.bf16 %v1556, %v1555
  %v1592 = vpack.c.bf16 %v1558, %v1557
  %v1593 = vpack.c.bf16 %v1560, %v1559
  %v1594 = vpack.c.bf16 %v1562, %v1561
  %v1627 = vunpack.c.l.b16 %v1563
  %v1628 = vunpack.c.h.b16 %v1563
  %v1629 = vunpack.c.l.b16 %v1564
  %v1630 = vunpack.c.h.b16 %v1564
  %v1631 = vunpack.c.l.b16 %v1565
  %v1632 = vunpack.c.h.b16 %v1565
  %v1633 = vunpack.c.l.b16 %v1566
  %v1634 = vunpack.c.h.b16 %v1566
  %v1635 = vunpack.c.l.b16 %v1567
  %v1636 = vunpack.c.h.b16 %v1567
  %v1637 = vunpack.c.l.b16 %v1568
  %v1638 = vunpack.c.h.b16 %v1568
  %v1639 = vunpack.c.l.b16 %v1569
  %v1640 = vunpack.c.h.b16 %v1569
  %v1641 = vunpack.c.l.b16 %v1570
  %v1642 = vunpack.c.h.b16 %v1570
  %v1643 = vunpack.c.l.b16 %v1571
  %v1644 = vunpack.c.h.b16 %v1571
  %v1645 = vunpack.c.l.b16 %v1572
  %v1646 = vunpack.c.h.b16 %v1572
  %v1647 = vunpack.c.l.b16 %v1573
  %v1648 = vunpack.c.h.b16 %v1573
  %v1649 = vunpack.c.l.b16 %v1574
  %v1650 = vunpack.c.h.b16 %v1574
  %v1651 = vunpack.c.l.b16 %v1575
  %v1652 = vunpack.c.h.b16 %v1575
  %v1653 = vunpack.c.l.b16 %v1576
  %v1654 = vunpack.c.h.b16 %v1576
  %v1655 = vunpack.c.l.b16 %v1577
  %v1656 = vunpack.c.h.b16 %v1577
  %v1657 = vunpack.c.l.b16 %v1578
  %v1658 = vunpack.c.h.b16 %v1578
  %v1659 = vunpack.c.l.b16 %v1579
  %v1660 = vunpack.c.h.b16 %v1579
  %v1661 = vunpack.c.l.b16 %v1580
  %v1662 = vunpack.c.h.b16 %v1580
  %v1663 = vunpack.c.l.b16 %v1581
  %v1664 = vunpack.c.h.b16 %v1581
  %v1665 = vunpack.c.l.b16 %v1582
  %v1666 = vunpack.c.h.b16 %v1582
  %v1667 = vunpack.c.l.b16 %v1583
  %v1668 = vunpack.c.h.b16 %v1583
  %v1669 = vunpack.c.l.b16 %v1584
  %v1670 = vunpack.c.h.b16 %v1584
  %v1671 = vunpack.c.l.b16 %v1585
  %v1672 = vunpack.c.h.b16 %v1585
  %v1673 = vunpack.c.l.b16 %v1586
  %v1674 = vunpack.c.h.b16 %v1586
  %v1675 = vunpack.c.l.b16 %v1587
  %v1676 = vunpack.c.h.b16 %v1587
  %v1677 = vunpack.c.l.b16 %v1588
  %v1678 = vunpack.c.h.b16 %v1588
  %v1679 = vunpack.c.l.b16 %v1589
  %v1680 = vunpack.c.h.b16 %v1589
  %v1681 = vunpack.c.l.b16 %v1590
  %v1682 = vunpack.c.h.b16 %v1590
  %v1683 = vunpack.c.l.b16 %v1591
  %v1684 = vunpack.c.h.b16 %v1591
  %v1685 = vunpack.c.l.b16 %v1592
  %v1686 = vunpack.c.h.b16 %v1592
  %v1687 = vunpack.c.l.b16 %v1593
  %v1688 = vunpack.c.h.b16 %v1593
  %v1689 = vunpack.c.l.b16 %v1594
  %v1690 = vunpack.c.h.b16 %v1594
  %v1691 = vpack.c.b16 %v1627, %v1627
  %v1692 = vpack.c.b16 %v1628, %v1628
  %v1693 = vpack.c.b16 %v1629, %v1629
  %v1694 = vpack.c.b16 %v1630, %v1630
  %v1695 = vpack.c.b16 %v1631, %v1631
  %v1696 = vpack.c.b16 %v1632, %v1632
  %v1697 = vpack.c.b16 %v1633, %v1633
  %v1698 = vpack.c.b16 %v1634, %v1634
  %v1699 = vpack.c.b16 %v1635, %v1635
  %v1700 = vpack.c.b16 %v1636, %v1636
  %v1701 = vpack.c.b16 %v1637, %v1637
  %v1702 = vpack.c.b16 %v1638, %v1638
  %v1703 = vpack.c.b16 %v1639, %v1639
  %v1704 = vpack.c.b16 %v1640, %v1640
  %v1705 = vpack.c.b16 %v1641, %v1641
  %v1706 = vpack.c.b16 %v1642, %v1642
  %v1707 = vpack.c.b16 %v1643, %v1643
  %v1708 = vpack.c.b16 %v1644, %v1644
  %v1709 = vpack.c.b16 %v1645, %v1645
  %v1710 = vpack.c.b16 %v1646, %v1646
  %v1711 = vpack.c.b16 %v1647, %v1647
  %v1712 = vpack.c.b16 %v1648, %v1648
  %v1713 = vpack.c.b16 %v1649, %v1649
  %v1714 = vpack.c.b16 %v1650, %v1650
  %v1715 = vpack.c.b16 %v1651, %v1651
  %v1716 = vpack.c.b16 %v1652, %v1652
  %v1717 = vpack.c.b16 %v1653, %v1653
  %v1718 = vpack.c.b16 %v1654, %v1654
  %v1719 = vpack.c.b16 %v1655, %v1655
  %v1720 = vpack.c.b16 %v1656, %v1656
  %v1721 = vpack.c.b16 %v1657, %v1657
  %v1722 = vpack.c.b16 %v1658, %v1658
  %v1723 = vpack.c.b16 %v1659, %v1659
  %v1724 = vpack.c.b16 %v1660, %v1660
  %v1725 = vpack.c.b16 %v1661, %v1661
  %v1726 = vpack.c.b16 %v1662, %v1662
  %v1727 = vpack.c.b16 %v1663, %v1663
  %v1728 = vpack.c.b16 %v1664, %v1664
  %v1729 = vpack.c.b16 %v1665, %v1665
  %v1730 = vpack.c.b16 %v1666, %v1666
  %v1731 = vpack.c.b16 %v1667, %v1667
  %v1732 = vpack.c.b16 %v1668, %v1668
  %v1733 = vpack.c.b16 %v1669, %v1669
  %v1734 = vpack.c.b16 %v1670, %v1670
  %v1735 = vpack.c.b16 %v1671, %v1671
  %v1736 = vpack.c.b16 %v1672, %v1672
  %v1737 = vpack.c.b16 %v1673, %v1673
  %v1738 = vpack.c.b16 %v1674, %v1674
  %v1739 = vpack.c.b16 %v1675, %v1675
  %v1740 = vpack.c.b16 %v1676, %v1676
  %v1741 = vpack.c.b16 %v1677, %v1677
  %v1742 = vpack.c.b16 %v1678, %v1678
  %v1743 = vpack.c.b16 %v1679, %v1679
  %v1744 = vpack.c.b16 %v1680, %v1680
  %v1745 = vpack.c.b16 %v1681, %v1681
  %v1746 = vpack.c.b16 %v1682, %v1682
  %v1747 = vpack.c.b16 %v1683, %v1683
  %v1748 = vpack.c.b16 %v1684, %v1684
  %v1749 = vpack.c.b16 %v1685, %v1685
  %v1750 = vpack.c.b16 %v1686, %v1686
  %v1751 = vpack.c.b16 %v1687, %v1687
  %v1752 = vpack.c.b16 %v1688, %v1688
  %v1753 = vpack.c.b16 %v1689, %v1689
  %v1754 = vpack.c.b16 %v1690, %v1690
  %vm1819 = vcmask 257024
  %1820 = vst.msk [vmem:[%s5] sm:$0xf] %vm1819, %v1691
  %1821 = vst.msk [vmem:[%s5 + $0x4] sm:$0xf] %vm1819, %v1692
  %1822 = vst.msk [vmem:[%s5 + $0x8] sm:$0xf] %vm1819, %v1693
  %1823 = vst.msk [vmem:[%s5 + $0xc] sm:$0xf] %vm1819, %v1694
  %1824 = vst.msk [vmem:[%s5 + $0x10] sm:$0xf] %vm1819, %v1695
  %1825 = vst.msk [vmem:[%s5 + $0x14] sm:$0xf] %vm1819, %v1696
  %1826 = vst.msk [vmem:[%s5 + $0x18] sm:$0xf] %vm1819, %v1697
  %1827 = vst.msk [vmem:[%s5 + $0x1c] sm:$0xf] %vm1819, %v1698
  %1828 = vst.msk [vmem:[%s5 + $0x20] sm:$0xf] %vm1819, %v1699
  %1829 = vst.msk [vmem:[%s5 + $0x24] sm:$0xf] %vm1819, %v1700
  %1830 = vst.msk [vmem:[%s5 + $0x28] sm:$0xf] %vm1819, %v1701
  %1831 = vst.msk [vmem:[%s5 + $0x2c] sm:$0xf] %vm1819, %v1702
  %1832 = vst.msk [vmem:[%s5 + $0x30] sm:$0xf] %vm1819, %v1703
  %1833 = vst.msk [vmem:[%s5 + $0x34] sm:$0xf] %vm1819, %v1704
  %1834 = vst.msk [vmem:[%s5 + $0x38] sm:$0xf] %vm1819, %v1705
  %1835 = vst.msk [vmem:[%s5 + $0x3c] sm:$0xf] %vm1819, %v1706
  %1836 = vst.msk [vmem:[%s5 + $0x40] sm:$0xf] %vm1819, %v1707
  %1837 = vst.msk [vmem:[%s5 + $0x44] sm:$0xf] %vm1819, %v1708
  %1838 = vst.msk [vmem:[%s5 + $0x48] sm:$0xf] %vm1819, %v1709
  %1839 = vst.msk [vmem:[%s5 + $0x4c] sm:$0xf] %vm1819, %v1710
  %1840 = vst.msk [vmem:[%s5 + $0x50] sm:$0xf] %vm1819, %v1711
  %1841 = vst.msk [vmem:[%s5 + $0x54] sm:$0xf] %vm1819, %v1712
  %1842 = vst.msk [vmem:[%s5 + $0x58] sm:$0xf] %vm1819, %v1713
  %1843 = vst.msk [vmem:[%s5 + $0x5c] sm:$0xf] %vm1819, %v1714
  %1844 = vst.msk [vmem:[%s5 + $0x60] sm:$0xf] %vm1819, %v1715
  %1845 = vst.msk [vmem:[%s5 + $0x64] sm:$0xf] %vm1819, %v1716
  %1846 = vst.msk [vmem:[%s5 + $0x68] sm:$0xf] %vm1819, %v1717
  %1847 = vst.msk [vmem:[%s5 + $0x6c] sm:$0xf] %vm1819, %v1718
  %1848 = vst.msk [vmem:[%s5 + $0x70] sm:$0xf] %vm1819, %v1719
  %1849 = vst.msk [vmem:[%s5 + $0x74] sm:$0xf] %vm1819, %v1720
  %1850 = vst.msk [vmem:[%s5 + $0x78] sm:$0xf] %vm1819, %v1721
  %1851 = vst.msk [vmem:[%s5 + $0x7c] sm:$0xf] %vm1819, %v1722
  %1852 = vst.msk [vmem:[%s5 + $0x80] sm:$0xf] %vm1819, %v1723
  %1853 = vst.msk [vmem:[%s5 + $0x84] sm:$0xf] %vm1819, %v1724
  %1854 = vst.msk [vmem:[%s5 + $0x88] sm:$0xf] %vm1819, %v1725
  %1855 = vst.msk [vmem:[%s5 + $0x8c] sm:$0xf] %vm1819, %v1726
  %1856 = vst.msk [vmem:[%s5 + $0x90] sm:$0xf] %vm1819, %v1727
  %1857 = vst.msk [vmem:[%s5 + $0x94] sm:$0xf] %vm1819, %v1728
  %1858 = vst.msk [vmem:[%s5 + $0x98] sm:$0xf] %vm1819, %v1729
  %1859 = vst.msk [vmem:[%s5 + $0x9c] sm:$0xf] %vm1819, %v1730
  %1860 = vst.msk [vmem:[%s5 + $0xa0] sm:$0xf] %vm1819, %v1731
  %1861 = vst.msk [vmem:[%s5 + $0xa4] sm:$0xf] %vm1819, %v1732
  %1862 = vst.msk [vmem:[%s5 + $0xa8] sm:$0xf] %vm1819, %v1733
  %1863 = vst.msk [vmem:[%s5 + $0xac] sm:$0xf] %vm1819, %v1734
  %1864 = vst.msk [vmem:[%s5 + $0xb0] sm:$0xf] %vm1819, %v1735
  %1865 = vst.msk [vmem:[%s5 + $0xb4] sm:$0xf] %vm1819, %v1736
  %1866 = vst.msk [vmem:[%s5 + $0xb8] sm:$0xf] %vm1819, %v1737
  %1867 = vst.msk [vmem:[%s5 + $0xbc] sm:$0xf] %vm1819, %v1738
  %1868 = vst.msk [vmem:[%s5 + $0xc0] sm:$0xf] %vm1819, %v1739
  %1869 = vst.msk [vmem:[%s5 + $0xc4] sm:$0xf] %vm1819, %v1740
  %1870 = vst.msk [vmem:[%s5 + $0xc8] sm:$0xf] %vm1819, %v1741
  %1871 = vst.msk [vmem:[%s5 + $0xcc] sm:$0xf] %vm1819, %v1742
  %1872 = vst.msk [vmem:[%s5 + $0xd0] sm:$0xf] %vm1819, %v1743
  %1873 = vst.msk [vmem:[%s5 + $0xd4] sm:$0xf] %vm1819, %v1744
  %1874 = vst.msk [vmem:[%s5 + $0xd8] sm:$0xf] %vm1819, %v1745
  %1875 = vst.msk [vmem:[%s5 + $0xdc] sm:$0xf] %vm1819, %v1746
  %1876 = vst.msk [vmem:[%s5 + $0xe0] sm:$0xf] %vm1819, %v1747
  %1877 = vst.msk [vmem:[%s5 + $0xe4] sm:$0xf] %vm1819, %v1748
  %1878 = vst.msk [vmem:[%s5 + $0xe8] sm:$0xf] %vm1819, %v1749
  %1879 = vst.msk [vmem:[%s5 + $0xec] sm:$0xf] %vm1819, %v1750
  %1880 = vst.msk [vmem:[%s5 + $0xf0] sm:$0xf] %vm1819, %v1751
  %1881 = vst.msk [vmem:[%s5 + $0xf4] sm:$0xf] %vm1819, %v1752
  %1882 = vst.msk [vmem:[%s5 + $0xf8] sm:$0xf] %vm1819, %v1753
  %1883 = vst.msk [vmem:[%s5 + $0xfc] sm:$0xf] %vm1819, %v1754
  // Predicated region
  $region22: #{dnet_forward.5} parent=0 // pred_check
    _
  $region23: #{dnet_forward.5} parent=0 // pred_check_branch
    %1885 = sbr.rel (0) target = $region25
  $region24: #{dnet_forward.5} parent=0 // pred_region
    _
  $region25: #{dnet_forward.5} parent=0 // pred_fallthru
    _
  // Predicated region
  $region26: #{dnet_forward.5} parent=0 // pred_check
    _
  $region27: #{dnet_forward.5} parent=0 // pred_check_branch
    %1887 = sbr.rel (0) target = $region29
  $region28: #{dnet_forward.5} parent=0 // pred_region
    _
  $region29: #{dnet_forward.5} parent=0 // pred_fallthru
    _

// kernel: dnet_forward.6
$region0: #{dnet_forward.6}
  #allocation0 [shape = 'u32[]', space=smem, size = 0x4, offset = 0x4, fixed_abs, tag = 'smem constant byte address 0x4 - core index']
  #allocation1 [shape = 'u32[144,128]{1,0:T(1,128)}', space=vmem, size = 0x12000, scoped, tag = 'internal scratch']
  %s0 = inlined_call_operand.vmem [shape: bf16[128,512], index: 0, kind: input, shape index: {}]
  %s1 = inlined_call_operand.vmem [shape: bf16[512,64], index: 1, kind: input, shape index: {}]
  %s2 = inlined_call_operand.vmem [shape: f32[1,64], index: 2, kind: input, shape index: {}]
  %s3 = inlined_call_operand.vmem [shape: f32[1,64], index: 3, kind: input, shape index: {}]
  %s4 = inlined_call_operand.vmem [shape: f32[1,64], index: 4, kind: input, shape index: {}]
  %s5 = inlined_call_operand.vmem [shape: bf16[128,64], index: 5, kind: output, shape index: {}]
  %s6 = sld [smem:[#allocation0]]
  $region30: #{dnet_forward.6} parent=0
    _
  %s8 = ssub.s32 1, %s6
  %s9 = scalar_select 0, %s8, %s6
  // Predicated region
  $region2: #{dnet_forward.6} parent=0 // pred_check
    _
  $region3: #{dnet_forward.6} parent=0 // pred_check_branch
    %11 = sbr.rel (0) target = $region5
  $region4: #{dnet_forward.6} parent=0 // pred_region
    _
  $region5: #{dnet_forward.6} parent=0 // pred_fallthru
    _
  // Predicated region
  $region6: #{dnet_forward.6} parent=0 // pred_check
    _
  $region7: #{dnet_forward.6} parent=0 // pred_check_branch
    %13 = sbr.rel (0) target = $region9
  $region8: #{dnet_forward.6} parent=0 // pred_region
    _
  $region9: #{dnet_forward.6} parent=0 // pred_fallthru
    _
  // Predicated region
  $region10: #{dnet_forward.6} parent=0 // pred_check
    _
  $region11: #{dnet_forward.6} parent=0 // pred_check_branch
    %15 = sbr.rel (0) target = $region13
  $region12: #{dnet_forward.6} parent=0 // pred_region
    _
  $region13: #{dnet_forward.6} parent=0 // pred_fallthru
    _
  // Predicated region
  $region14: #{dnet_forward.6} parent=0 // pred_check
    _
  $region15: #{dnet_forward.6} parent=0 // pred_check_branch
    %17 = sbr.rel (0) target = $region17
  $region16: #{dnet_forward.6} parent=0 // pred_region
    _
  $region17: #{dnet_forward.6} parent=0 // pred_fallthru
    _
  // Predicated region
  $region18: #{dnet_forward.6} parent=0 // pred_check
    _
  $region19: #{dnet_forward.6} parent=0 // pred_check_branch
    %19 = sbr.rel (0) target = $region21
  $region20: #{dnet_forward.6} parent=0 // pred_region
    _
  $region21: #{dnet_forward.6} parent=0 // pred_fallthru
    _
  %v21 = vld [vmem:[%s0] sm:$0xff]
  %v22 = vld [vmem:[%s0 + $0x8] sm:$0xff]
  %v23 = vld [vmem:[%s0 + $0x10] sm:$0xff]
  %v24 = vld [vmem:[%s0 + $0x18] sm:$0xff]
  %v25 = vld [vmem:[%s0 + $0x20] sm:$0xff]
  %v26 = vld [vmem:[%s0 + $0x28] sm:$0xff]
  %v27 = vld [vmem:[%s0 + $0x30] sm:$0xff]
  %v28 = vld [vmem:[%s0 + $0x38] sm:$0xff]
  %v29 = vld [vmem:[%s0 + $0x40] sm:$0xff]
  %v30 = vld [vmem:[%s0 + $0x48] sm:$0xff]
  %v31 = vld [vmem:[%s0 + $0x50] sm:$0xff]
  %v32 = vld [vmem:[%s0 + $0x58] sm:$0xff]
  %v33 = vld [vmem:[%s0 + $0x60] sm:$0xff]
  %v34 = vld [vmem:[%s0 + $0x68] sm:$0xff]
  %v35 = vld [vmem:[%s0 + $0x70] sm:$0xff]
  %v36 = vld [vmem:[%s0 + $0x78] sm:$0xff]
  %v37 = vld [vmem:[%s0 + $0x80] sm:$0xff]
  %v38 = vld [vmem:[%s0 + $0x88] sm:$0xff]
  %v39 = vld [vmem:[%s0 + $0x90] sm:$0xff]
  %v40 = vld [vmem:[%s0 + $0x98] sm:$0xff]
  %v41 = vld [vmem:[%s0 + $0xa0] sm:$0xff]
  %v42 = vld [vmem:[%s0 + $0xa8] sm:$0xff]
  %v43 = vld [vmem:[%s0 + $0xb0] sm:$0xff]
  %v44 = vld [vmem:[%s0 + $0xb8] sm:$0xff]
  %v45 = vld [vmem:[%s0 + $0xc0] sm:$0xff]
  %v46 = vld [vmem:[%s0 + $0xc8] sm:$0xff]
  %v47 = vld [vmem:[%s0 + $0xd0] sm:$0xff]
  %v48 = vld [vmem:[%s0 + $0xd8] sm:$0xff]
  %v49 = vld [vmem:[%s0 + $0xe0] sm:$0xff]
  %v50 = vld [vmem:[%s0 + $0xe8] sm:$0xff]
  %v51 = vld [vmem:[%s0 + $0xf0] sm:$0xff]
  %v52 = vld [vmem:[%s0 + $0xf8] sm:$0xff]
  %v53 = vld [vmem:[%s1] sm:$0xf]
  %v54 = vld [vmem:[%s1 + $0x4] sm:$0xf]
  %v55 = vld [vmem:[%s1 + $0x8] sm:$0xf]
  %v56 = vld [vmem:[%s1 + $0xc] sm:$0xf]
  %v57 = vld [vmem:[%s1 + $0x10] sm:$0xf]
  %v58 = vld [vmem:[%s1 + $0x14] sm:$0xf]
  %v59 = vld [vmem:[%s1 + $0x18] sm:$0xf]
  %v60 = vld [vmem:[%s1 + $0x1c] sm:$0xf]
  %v61 = vld [vmem:[%s1 + $0x20] sm:$0xf]
  %v62 = vld [vmem:[%s1 + $0x24] sm:$0xf]
  %v63 = vld [vmem:[%s1 + $0x28] sm:$0xf]
  %v64 = vld [vmem:[%s1 + $0x2c] sm:$0xf]
  %v65 = vld [vmem:[%s1 + $0x30] sm:$0xf]
  %v66 = vld [vmem:[%s1 + $0x34] sm:$0xf]
  %v67 = vld [vmem:[%s1 + $0x38] sm:$0xf]
  %v68 = vld [vmem:[%s1 + $0x3c] sm:$0xf]
  %v69 = vld [vmem:[%s1 + $0x40] sm:$0xf]
  %v70 = vld [vmem:[%s1 + $0x44] sm:$0xf]
  %v71 = vld [vmem:[%s1 + $0x48] sm:$0xf]
  %v72 = vld [vmem:[%s1 + $0x4c] sm:$0xf]
  %v73 = vld [vmem:[%s1 + $0x50] sm:$0xf]
  %v74 = vld [vmem:[%s1 + $0x54] sm:$0xf]
  %v75 = vld [vmem:[%s1 + $0x58] sm:$0xf]
  %v76 = vld [vmem:[%s1 + $0x5c] sm:$0xf]
  %v77 = vld [vmem:[%s1 + $0x60] sm:$0xf]
  %v78 = vld [vmem:[%s1 + $0x64] sm:$0xf]
  %v79 = vld [vmem:[%s1 + $0x68] sm:$0xf]
  %v80 = vld [vmem:[%s1 + $0x6c] sm:$0xf]
  %v81 = vld [vmem:[%s1 + $0x70] sm:$0xf]
  %v82 = vld [vmem:[%s1 + $0x74] sm:$0xf]
  %v83 = vld [vmem:[%s1 + $0x78] sm:$0xf]
  %v84 = vld [vmem:[%s1 + $0x7c] sm:$0xf]
  %v85 = vld [vmem:[%s1 + $0x80] sm:$0xf]
  %v86 = vld [vmem:[%s1 + $0x84] sm:$0xf]
  %v87 = vld [vmem:[%s1 + $0x88] sm:$0xf]
  %v88 = vld [vmem:[%s1 + $0x8c] sm:$0xf]
  %v89 = vld [vmem:[%s1 + $0x90] sm:$0xf]
  %v90 = vld [vmem:[%s1 + $0x94] sm:$0xf]
  %v91 = vld [vmem:[%s1 + $0x98] sm:$0xf]
  %v92 = vld [vmem:[%s1 + $0x9c] sm:$0xf]
  %v93 = vld [vmem:[%s1 + $0xa0] sm:$0xf]
  %v94 = vld [vmem:[%s1 + $0xa4] sm:$0xf]
  %v95 = vld [vmem:[%s1 + $0xa8] sm:$0xf]
  %v96 = vld [vmem:[%s1 + $0xac] sm:$0xf]
  %v97 = vld [vmem:[%s1 + $0xb0] sm:$0xf]
  %v98 = vld [vmem:[%s1 + $0xb4] sm:$0xf]
  %v99 = vld [vmem:[%s1 + $0xb8] sm:$0xf]
  %v100 = vld [vmem:[%s1 + $0xbc] sm:$0xf]
  %v101 = vld [vmem:[%s1 + $0xc0] sm:$0xf]
  %v102 = vld [vmem:[%s1 + $0xc4] sm:$0xf]
  %v103 = vld [vmem:[%s1 + $0xc8] sm:$0xf]
  %v104 = vld [vmem:[%s1 + $0xcc] sm:$0xf]
  %v105 = vld [vmem:[%s1 + $0xd0] sm:$0xf]
  %v106 = vld [vmem:[%s1 + $0xd4] sm:$0xf]
  %v107 = vld [vmem:[%s1 + $0xd8] sm:$0xf]
  %v108 = vld [vmem:[%s1 + $0xdc] sm:$0xf]
  %v109 = vld [vmem:[%s1 + $0xe0] sm:$0xf]
  %v110 = vld [vmem:[%s1 + $0xe4] sm:$0xf]
  %v111 = vld [vmem:[%s1 + $0xe8] sm:$0xf]
  %v112 = vld [vmem:[%s1 + $0xec] sm:$0xf]
  %v113 = vld [vmem:[%s1 + $0xf0] sm:$0xf]
  %v114 = vld [vmem:[%s1 + $0xf4] sm:$0xf]
  %v115 = vld [vmem:[%s1 + $0xf8] sm:$0xf]
  %v116 = vld [vmem:[%s1 + $0xfc] sm:$0xf]
  %v117 = vld [vmem:[%s2] sm:$0x1]
  %v119 = vlaneseq
  %v120 = vshrl.u32 %v119, 7
  %v121 = vsub.s32 0, %v120
  %v122 = vrot.slane %v117, %v121
  %v156 = vunpack.c.l.b16 %v21
  %v157 = vunpack.c.h.b16 %v21
  %v158 = vunpack.c.l.b16 %v22
  %v159 = vunpack.c.h.b16 %v22
  %v160 = vunpack.c.l.b16 %v23
  %v161 = vunpack.c.h.b16 %v23
  %v162 = vunpack.c.l.b16 %v24
  %v163 = vunpack.c.h.b16 %v24
  %v164 = vunpack.c.l.b16 %v25
  %v165 = vunpack.c.h.b16 %v25
  %v166 = vunpack.c.l.b16 %v26
  %v167 = vunpack.c.h.b16 %v26
  %v168 = vunpack.c.l.b16 %v27
  %v169 = vunpack.c.h.b16 %v27
  %v170 = vunpack.c.l.b16 %v28
  %v171 = vunpack.c.h.b16 %v28
  %v172 = vunpack.c.l.b16 %v29
  %v173 = vunpack.c.h.b16 %v29
  %v174 = vunpack.c.l.b16 %v30
  %v175 = vunpack.c.h.b16 %v30
  %v176 = vunpack.c.l.b16 %v31
  %v177 = vunpack.c.h.b16 %v31
  %v178 = vunpack.c.l.b16 %v32
  %v179 = vunpack.c.h.b16 %v32
  %v180 = vunpack.c.l.b16 %v33
  %v181 = vunpack.c.h.b16 %v33
  %v182 = vunpack.c.l.b16 %v34
  %v183 = vunpack.c.h.b16 %v34
  %v184 = vunpack.c.l.b16 %v35
  %v185 = vunpack.c.h.b16 %v35
  %v186 = vunpack.c.l.b16 %v36
  %v187 = vunpack.c.h.b16 %v36
  %v188 = vunpack.c.l.b16 %v37
  %v189 = vunpack.c.h.b16 %v37
  %v190 = vunpack.c.l.b16 %v38
  %v191 = vunpack.c.h.b16 %v38
  %v192 = vunpack.c.l.b16 %v39
  %v193 = vunpack.c.h.b16 %v39
  %v194 = vunpack.c.l.b16 %v40
  %v195 = vunpack.c.h.b16 %v40
  %v196 = vunpack.c.l.b16 %v41
  %v197 = vunpack.c.h.b16 %v41
  %v198 = vunpack.c.l.b16 %v42
  %v199 = vunpack.c.h.b16 %v42
  %v200 = vunpack.c.l.b16 %v43
  %v201 = vunpack.c.h.b16 %v43
  %v202 = vunpack.c.l.b16 %v44
  %v203 = vunpack.c.h.b16 %v44
  %v204 = vunpack.c.l.b16 %v45
  %v205 = vunpack.c.h.b16 %v45
  %v206 = vunpack.c.l.b16 %v46
  %v207 = vunpack.c.h.b16 %v46
  %v208 = vunpack.c.l.b16 %v47
  %v209 = vunpack.c.h.b16 %v47
  %v210 = vunpack.c.l.b16 %v48
  %v211 = vunpack.c.h.b16 %v48
  %v212 = vunpack.c.l.b16 %v49
  %v213 = vunpack.c.h.b16 %v49
  %v214 = vunpack.c.l.b16 %v50
  %v215 = vunpack.c.h.b16 %v50
  %v216 = vunpack.c.l.b16 %v51
  %v217 = vunpack.c.h.b16 %v51
  %v218 = vunpack.c.l.b16 %v52
  %v219 = vunpack.c.h.b16 %v52
  %v220 = vpack.c.b16 %v160, %v156
  %v221 = vpack.c.b16 %v161, %v157
  %v222 = vpack.c.b16 %v162, %v158
  %v223 = vpack.c.b16 %v163, %v159
  %v224 = vpack.c.b16 %v168, %v164
  %v225 = vpack.c.b16 %v169, %v165
  %v226 = vpack.c.b16 %v170, %v166
  %v227 = vpack.c.b16 %v171, %v167
  %v228 = vpack.c.b16 %v176, %v172
  %v229 = vpack.c.b16 %v177, %v173
  %v230 = vpack.c.b16 %v178, %v174
  %v231 = vpack.c.b16 %v179, %v175
  %v232 = vpack.c.b16 %v184, %v180
  %v233 = vpack.c.b16 %v185, %v181
  %v234 = vpack.c.b16 %v186, %v182
  %v235 = vpack.c.b16 %v187, %v183
  %v236 = vpack.c.b16 %v192, %v188
  %v237 = vpack.c.b16 %v193, %v189
  %v238 = vpack.c.b16 %v194, %v190
  %v239 = vpack.c.b16 %v195, %v191
  %v240 = vpack.c.b16 %v200, %v196
  %v241 = vpack.c.b16 %v201, %v197
  %v242 = vpack.c.b16 %v202, %v198
  %v243 = vpack.c.b16 %v203, %v199
  %v244 = vpack.c.b16 %v208, %v204
  %v245 = vpack.c.b16 %v209, %v205
  %v246 = vpack.c.b16 %v210, %v206
  %v247 = vpack.c.b16 %v211, %v207
  %v248 = vpack.c.b16 %v216, %v212
  %v249 = vpack.c.b16 %v217, %v213
  %v250 = vpack.c.b16 %v218, %v214
  %v251 = vpack.c.b16 %v219, %v215
  %v348 = vunpack.c.l.b16 %v53
  %v349 = vunpack.c.l.b16 %v54
  %v350 = vunpack.c.l.b16 %v55
  %v351 = vunpack.c.l.b16 %v56
  %v352 = vunpack.c.l.b16 %v57
  %v353 = vunpack.c.l.b16 %v58
  %v354 = vunpack.c.l.b16 %v59
  %v355 = vunpack.c.l.b16 %v60
  %v356 = vunpack.c.l.b16 %v61
  %v357 = vunpack.c.l.b16 %v62
  %v358 = vunpack.c.l.b16 %v63
  %v359 = vunpack.c.l.b16 %v64
  %v360 = vunpack.c.l.b16 %v65
  %v361 = vunpack.c.l.b16 %v66
  %v362 = vunpack.c.l.b16 %v67
  %v363 = vunpack.c.l.b16 %v68
  %v364 = vunpack.c.l.b16 %v69
  %v365 = vunpack.c.l.b16 %v70
  %v366 = vunpack.c.l.b16 %v71
  %v367 = vunpack.c.l.b16 %v72
  %v368 = vunpack.c.l.b16 %v73
  %v369 = vunpack.c.l.b16 %v74
  %v370 = vunpack.c.l.b16 %v75
  %v371 = vunpack.c.l.b16 %v76
  %v372 = vunpack.c.l.b16 %v77
  %v373 = vunpack.c.l.b16 %v78
  %v374 = vunpack.c.l.b16 %v79
  %v375 = vunpack.c.l.b16 %v80
  %v376 = vunpack.c.l.b16 %v81
  %v377 = vunpack.c.l.b16 %v82
  %v378 = vunpack.c.l.b16 %v83
  %v379 = vunpack.c.l.b16 %v84
  %v380 = vunpack.c.l.b16 %v85
  %v381 = vunpack.c.l.b16 %v86
  %v382 = vunpack.c.l.b16 %v87
  %v383 = vunpack.c.l.b16 %v88
  %v384 = vunpack.c.l.b16 %v89
  %v385 = vunpack.c.l.b16 %v90
  %v386 = vunpack.c.l.b16 %v91
  %v387 = vunpack.c.l.b16 %v92
  %v388 = vunpack.c.l.b16 %v93
  %v389 = vunpack.c.l.b16 %v94
  %v390 = vunpack.c.l.b16 %v95
  %v391 = vunpack.c.l.b16 %v96
  %v392 = vunpack.c.l.b16 %v97
  %v393 = vunpack.c.l.b16 %v98
  %v394 = vunpack.c.l.b16 %v99
  %v395 = vunpack.c.l.b16 %v100
  %v396 = vunpack.c.l.b16 %v101
  %v397 = vunpack.c.l.b16 %v102
  %v398 = vunpack.c.l.b16 %v103
  %v399 = vunpack.c.l.b16 %v104
  %v400 = vunpack.c.l.b16 %v105
  %v401 = vunpack.c.l.b16 %v106
  %v402 = vunpack.c.l.b16 %v107
  %v403 = vunpack.c.l.b16 %v108
  %v404 = vunpack.c.l.b16 %v109
  %v405 = vunpack.c.l.b16 %v110
  %v406 = vunpack.c.l.b16 %v111
  %v407 = vunpack.c.l.b16 %v112
  %v408 = vunpack.c.l.b16 %v113
  %v409 = vunpack.c.l.b16 %v114
  %v410 = vunpack.c.l.b16 %v115
  %v411 = vunpack.c.l.b16 %v116
  %v412 = vpack.c.b16 %v349, %v348
  %v413 = vpack.c.b16 %v351, %v350
  %v414 = vpack.c.b16 %v353, %v352
  %v415 = vpack.c.b16 %v355, %v354
  %v416 = vpack.c.b16 %v357, %v356
  %v417 = vpack.c.b16 %v359, %v358
  %v418 = vpack.c.b16 %v361, %v360
  %v419 = vpack.c.b16 %v363, %v362
  %v420 = vpack.c.b16 %v365, %v364
  %v421 = vpack.c.b16 %v367, %v366
  %v422 = vpack.c.b16 %v369, %v368
  %v423 = vpack.c.b16 %v371, %v370
  %v424 = vpack.c.b16 %v373, %v372
  %v425 = vpack.c.b16 %v375, %v374
  %v426 = vpack.c.b16 %v377, %v376
  %v427 = vpack.c.b16 %v379, %v378
  %v428 = vpack.c.b16 %v381, %v380
  %v429 = vpack.c.b16 %v383, %v382
  %v430 = vpack.c.b16 %v385, %v384
  %v431 = vpack.c.b16 %v387, %v386
  %v432 = vpack.c.b16 %v389, %v388
  %v433 = vpack.c.b16 %v391, %v390
  %v434 = vpack.c.b16 %v393, %v392
  %v435 = vpack.c.b16 %v395, %v394
  %v436 = vpack.c.b16 %v397, %v396
  %v437 = vpack.c.b16 %v399, %v398
  %v438 = vpack.c.b16 %v401, %v400
  %v439 = vpack.c.b16 %v403, %v402
  %v440 = vpack.c.b16 %v405, %v404
  %v441 = vpack.c.b16 %v407, %v406
  %v442 = vpack.c.b16 %v409, %v408
  %v443 = vpack.c.b16 %v411, %v410
  %476 = vmatprep.subr.bf16.mxu0 0
  %477 = vmatpush1.bf16.msra.mxu0 %v412
  %478 = vmatprep.subr.bf16.mxu0 0
  %479 = vmatpush1.bf16.msra.mxu0 %v413
  %480 = vmatprep.subr.bf16.mxu0 0
  %481 = vmatpush1.bf16.msra.mxu0 %v414
  %482 = vmatprep.subr.bf16.mxu0 0
  %483 = vmatpush1.bf16.msra.mxu0 %v415
  %484 = vmatprep.subr.bf16.mxu0 0
  %485 = vmatpush1.bf16.msra.mxu0 %v416
  %486 = vmatprep.subr.bf16.mxu0 0
  %487 = vmatpush1.bf16.msra.mxu0 %v417
  %488 = vmatprep.subr.bf16.mxu0 0
  %489 = vmatpush1.bf16.msra.mxu0 %v418
  %490 = vmatprep.subr.bf16.mxu0 0
  %491 = vmatpush1.bf16.msra.mxu0 %v419
  %492 = vmatprep.subr.bf16.mxu0 0
  %493 = vmatpush1.bf16.msra.mxu0 %v420
  %494 = vmatprep.subr.bf16.mxu0 0
  %495 = vmatpush1.bf16.msra.mxu0 %v421
  %496 = vmatprep.subr.bf16.mxu0 0
  %497 = vmatpush1.bf16.msra.mxu0 %v422
  %498 = vmatprep.subr.bf16.mxu0 0
  %499 = vmatpush1.bf16.msra.mxu0 %v423
  %500 = vmatprep.subr.bf16.mxu0 0
  %501 = vmatpush1.bf16.msra.mxu0 %v424
  %502 = vmatprep.subr.bf16.mxu0 0
  %503 = vmatpush1.bf16.msra.mxu0 %v425
  %504 = vmatprep.subr.bf16.mxu0 0
  %505 = vmatpush1.bf16.msra.mxu0 %v426
  %506 = vmatprep.subr.bf16.mxu0 0
  %507 = vmatpush1.bf16.msra.mxu0 %v427
  %508 = vmatprep.mubr.bf16.mxu0 %v221
  %509 = vmatmul.mubr.bf16.gmra.mrb[0].mxu0 %v220
  %v510 = vpop.f32.mrb[0].mxu0
  %v511 = vadd.f32 %v122, %v510
  %v512 = vpop.f32.mrb[0].mxu0
  %v513 = vpop.f32.mrb[0].mxu0
  %v514 = vadd.f32 %v122, %v513
  %v515 = vpop.f32.mrb[0].mxu0
  %516 = vmatprep.mubr.bf16.mxu0 %v225
  %517 = vmatmul.mubr.bf16.gmra.mrb[0].mxu0 %v224
  %v518 = vpop.f32.mrb[0].mxu0
  %v519 = vadd.f32 %v122, %v518
  %v520 = vpop.f32.mrb[0].mxu0
  %v521 = vpop.f32.mrb[0].mxu0
  %v522 = vadd.f32 %v122, %v521
  %v523 = vpop.f32.mrb[0].mxu0
  %524 = vmatprep.mubr.bf16.mxu0 %v229
  %525 = vmatmul.mubr.bf16.gmra.mrb[0].mxu0 %v228
  %v526 = vpop.f32.mrb[0].mxu0
  %v527 = vadd.f32 %v122, %v526
  %v528 = vpop.f32.mrb[0].mxu0
  %v529 = vpop.f32.mrb[0].mxu0
  %v530 = vadd.f32 %v122, %v529
  %v531 = vpop.f32.mrb[0].mxu0
  %532 = vmatprep.mubr.bf16.mxu0 %v233
  %533 = vmatmul.mubr.bf16.gmra.mrb[0].mxu0 %v232
  %v534 = vpop.f32.mrb[0].mxu0
  %v535 = vadd.f32 %v122, %v534
  %v536 = vpop.f32.mrb[0].mxu0
  %v537 = vpop.f32.mrb[0].mxu0
  %v538 = vadd.f32 %v122, %v537
  %v539 = vpop.f32.mrb[0].mxu0
  %540 = vmatprep.mubr.bf16.mxu0 %v237
  %541 = vmatmul.mubr.bf16.gmra.mrb[0].mxu0 %v236
  %v542 = vpop.f32.mrb[0].mxu0
  %v543 = vadd.f32 %v122, %v542
  %v544 = vpop.f32.mrb[0].mxu0
  %v545 = vpop.f32.mrb[0].mxu0
  %v546 = vadd.f32 %v122, %v545
  %v547 = vpop.f32.mrb[0].mxu0
  %548 = vmatprep.mubr.bf16.mxu0 %v241
  %549 = vmatmul.mubr.bf16.gmra.mrb[0].mxu0 %v240
  %v550 = vpop.f32.mrb[0].mxu0
  %v551 = vadd.f32 %v122, %v550
  %v552 = vpop.f32.mrb[0].mxu0
  %v553 = vpop.f32.mrb[0].mxu0
  %v554 = vadd.f32 %v122, %v553
  %v555 = vpop.f32.mrb[0].mxu0
  %556 = vmatprep.mubr.bf16.mxu0 %v245
  %557 = vmatmul.mubr.bf16.gmra.mrb[0].mxu0 %v244
  %v558 = vpop.f32.mrb[0].mxu0
  %v559 = vadd.f32 %v122, %v558
  %v560 = vpop.f32.mrb[0].mxu0
  %v561 = vpop.f32.mrb[0].mxu0
  %v562 = vadd.f32 %v122, %v561
  %v563 = vpop.f32.mrb[0].mxu0
  %564 = vmatprep.mubr.bf16.mxu0 %v249
  %565 = vmatmul.mubr.bf16.gmra.mrb[0].mxu0 %v248
  %v566 = vpop.f32.mrb[0].mxu0
  %v567 = vadd.f32 %v122, %v566
  %v568 = vpop.f32.mrb[0].mxu0
  %v569 = vpop.f32.mrb[0].mxu0
  %v570 = vadd.f32 %v122, %v569
  %v571 = vpop.f32.mrb[0].mxu0
  %572 = vdwg.mxu0
  %573 = vmatprep.subr.bf16.mxu0 0
  %574 = vmatpush1.bf16.msra.mxu0 %v428
  %575 = vmatprep.subr.bf16.mxu0 0
  %576 = vmatpush1.bf16.msra.mxu0 %v429
  %577 = vmatprep.subr.bf16.mxu0 0
  %578 = vmatpush1.bf16.msra.mxu0 %v430
  %579 = vmatprep.subr.bf16.mxu0 0
  %580 = vmatpush1.bf16.msra.mxu0 %v431
  %581 = vmatprep.subr.bf16.mxu0 0
  %582 = vmatpush1.bf16.msra.mxu0 %v432
  %583 = vmatprep.subr.bf16.mxu0 0
  %584 = vmatpush1.bf16.msra.mxu0 %v433
  %585 = vmatprep.subr.bf16.mxu0 0
  %586 = vmatpush1.bf16.msra.mxu0 %v434
  %587 = vmatprep.subr.bf16.mxu0 0
  %588 = vmatpush1.bf16.msra.mxu0 %v435
  %589 = vmatprep.subr.bf16.mxu0 0
  %590 = vmatpush1.bf16.msra.mxu0 %v436
  %591 = vmatprep.subr.bf16.mxu0 0
  %592 = vmatpush1.bf16.msra.mxu0 %v437
  %593 = vmatprep.subr.bf16.mxu0 0
  %594 = vmatpush1.bf16.msra.mxu0 %v438
  %595 = vmatprep.subr.bf16.mxu0 0
  %596 = vmatpush1.bf16.msra.mxu0 %v439
  %597 = vmatprep.subr.bf16.mxu0 0
  %598 = vmatpush1.bf16.msra.mxu0 %v440
  %599 = vmatprep.subr.bf16.mxu0 0
  %600 = vmatpush1.bf16.msra.mxu0 %v441
  %601 = vmatprep.subr.bf16.mxu0 0
  %602 = vmatpush1.bf16.msra.mxu0 %v442
  %603 = vmatprep.subr.bf16.mxu0 0
  %604 = vmatpush1.bf16.msra.mxu0 %v443
  %605 = vmatprep.mubr.bf16.mxu0 %v223
  %606 = vmatmul.mubr.bf16.gmra.mrb[0].mxu0 %v222
  %v607 = vpop.f32.mrb[0].mxu0
  %v608 = vadd.f32 %v511, %v607
  %v609 = vpop.f32.mrb[0].mxu0
  %v610 = vpop.f32.mrb[0].mxu0
  %v611 = vadd.f32 %v514, %v610
  %v612 = vpop.f32.mrb[0].mxu0
  %613 = vmatprep.mubr.bf16.mxu0 %v227
  %614 = vmatmul.mubr.bf16.gmra.mrb[0].mxu0 %v226
  %v615 = vpop.f32.mrb[0].mxu0
  %v616 = vadd.f32 %v519, %v615
  %v617 = vpop.f32.mrb[0].mxu0
  %v618 = vpop.f32.mrb[0].mxu0
  %v619 = vadd.f32 %v522, %v618
  %v620 = vpop.f32.mrb[0].mxu0
  %621 = vmatprep.mubr.bf16.mxu0 %v231
  %622 = vmatmul.mubr.bf16.gmra.mrb[0].mxu0 %v230
  %v623 = vpop.f32.mrb[0].mxu0
  %v624 = vadd.f32 %v527, %v623
  %v625 = vpop.f32.mrb[0].mxu0
  %v626 = vpop.f32.mrb[0].mxu0
  %v627 = vadd.f32 %v530, %v626
  %v628 = vpop.f32.mrb[0].mxu0
  %629 = vmatprep.mubr.bf16.mxu0 %v235
  %630 = vmatmul.mubr.bf16.gmra.mrb[0].mxu0 %v234
  %v631 = vpop.f32.mrb[0].mxu0
  %v632 = vadd.f32 %v535, %v631
  %v633 = vpop.f32.mrb[0].mxu0
  %v634 = vpop.f32.mrb[0].mxu0
  %v635 = vadd.f32 %v538, %v634
  %v636 = vpop.f32.mrb[0].mxu0
  %637 = vmatprep.mubr.bf16.mxu0 %v239
  %638 = vmatmul.mubr.bf16.gmra.mrb[0].mxu0 %v238
  %v639 = vpop.f32.mrb[0].mxu0
  %v640 = vadd.f32 %v543, %v639
  %v641 = vpop.f32.mrb[0].mxu0
  %v642 = vpop.f32.mrb[0].mxu0
  %v643 = vadd.f32 %v546, %v642
  %v644 = vpop.f32.mrb[0].mxu0
  %645 = vmatprep.mubr.bf16.mxu0 %v243
  %646 = vmatmul.mubr.bf16.gmra.mrb[0].mxu0 %v242
  %v647 = vpop.f32.mrb[0].mxu0
  %v648 = vadd.f32 %v551, %v647
  %v649 = vpop.f32.mrb[0].mxu0
  %v650 = vpop.f32.mrb[0].mxu0
  %v651 = vadd.f32 %v554, %v650
  %v652 = vpop.f32.mrb[0].mxu0
  %653 = vmatprep.mubr.bf16.mxu0 %v247
  %654 = vmatmul.mubr.bf16.gmra.mrb[0].mxu0 %v246
  %v655 = vpop.f32.mrb[0].mxu0
  %v656 = vadd.f32 %v559, %v655
  %v657 = vpop.f32.mrb[0].mxu0
  %v658 = vpop.f32.mrb[0].mxu0
  %v659 = vadd.f32 %v562, %v658
  %v660 = vpop.f32.mrb[0].mxu0
  %661 = vmatprep.mubr.bf16.mxu0 %v251
  %662 = vmatmul.mubr.bf16.gmra.mrb[0].mxu0 %v250
  %v663 = vpop.f32.mrb[0].mxu0
  %v664 = vadd.f32 %v567, %v663
  %v665 = vpop.f32.mrb[0].mxu0
  %v666 = vpop.f32.mrb[0].mxu0
  %v667 = vadd.f32 %v570, %v666
  %v668 = vpop.f32.mrb[0].mxu0
  %669 = vdwg.mxu0
  %vm670 = vcmask 523264
  %v671 = vsel %vm670, %v608, 0.0
  %v672 = vsel %vm670, %v611, 0.0
  %v673 = vadd.f32 %v671, %v672
  %v674 = vsel %vm670, %v616, 0.0
  %v675 = vadd.f32 %v673, %v674
  %v676 = vsel %vm670, %v619, 0.0
  %v677 = vadd.f32 %v675, %v676
  %v678 = vsel %vm670, %v624, 0.0
  %v679 = vadd.f32 %v677, %v678
  %v680 = vsel %vm670, %v627, 0.0
  %v681 = vadd.f32 %v679, %v680
  %v682 = vsel %vm670, %v632, 0.0
  %v683 = vadd.f32 %v681, %v682
  %v684 = vsel %vm670, %v635, 0.0
  %v685 = vadd.f32 %v683, %v684
  %v686 = vsel %vm670, %v640, 0.0
  %v687 = vadd.f32 %v685, %v686
  %v688 = vsel %vm670, %v643, 0.0
  %v689 = vadd.f32 %v687, %v688
  %v690 = vsel %vm670, %v648, 0.0
  %v691 = vadd.f32 %v689, %v690
  %v692 = vsel %vm670, %v651, 0.0
  %v693 = vadd.f32 %v691, %v692
  %v694 = vsel %vm670, %v656, 0.0
  %v695 = vadd.f32 %v693, %v694
  %v696 = vsel %vm670, %v659, 0.0
  %v697 = vadd.f32 %v695, %v696
  %v698 = vsel %vm670, %v664, 0.0
  %v699 = vadd.f32 %v697, %v698
  %v700 = vsel %vm670, %v667, 0.0
  %v701 = vadd.f32 %v699, %v700
  %v702 = vrot.slane %v701, 4
  %v703 = vadd.f32 %v701, %v702
  %v704 = vrot.slane %v703, 2
  %v705 = vadd.f32 %v703, %v704
  %v706 = vrot.slane %v705, 1
  %v707 = vadd.f32 %v705, %v706
  %v708 = vmul.f32 %v707, 0.0078125
  %v709 = vsub.f32 %v608, %v708
  %v710 = vsub.f32 %v611, %v708
  %v711 = vsub.f32 %v616, %v708
  %v712 = vsub.f32 %v619, %v708
  %v713 = vsub.f32 %v624, %v708
  %v714 = vsub.f32 %v627, %v708
  %v715 = vsub.f32 %v632, %v708
  %v716 = vsub.f32 %v635, %v708
  %v717 = vsub.f32 %v640, %v708
  %v718 = vsub.f32 %v643, %v708
  %v719 = vsub.f32 %v648, %v708
  %v720 = vsub.f32 %v651, %v708
  %v721 = vsub.f32 %v656, %v708
  %v722 = vsub.f32 %v659, %v708
  %v723 = vsub.f32 %v664, %v708
  %v724 = vsub.f32 %v667, %v708
  %v725 = vmul.f32 %v709, %v709
  %v726 = vmul.f32 %v710, %v710
  %v727 = vmul.f32 %v711, %v711
  %v728 = vmul.f32 %v712, %v712
  %v729 = vmul.f32 %v713, %v713
  %v730 = vmul.f32 %v714, %v714
  %v731 = vmul.f32 %v715, %v715
  %v732 = vmul.f32 %v716, %v716
  %v733 = vmul.f32 %v717, %v717
  %v734 = vmul.f32 %v718, %v718
  %v735 = vmul.f32 %v719, %v719
  %v736 = vmul.f32 %v720, %v720
  %v737 = vmul.f32 %v721, %v721
  %v738 = vmul.f32 %v722, %v722
  %v739 = vmul.f32 %v723, %v723
  %v740 = vmul.f32 %v724, %v724
  %v741 = vsel %vm670, %v725, 0.0
  %v742 = vsel %vm670, %v726, 0.0
  %v743 = vadd.f32 %v741, %v742
  %v744 = vsel %vm670, %v727, 0.0
  %v745 = vadd.f32 %v743, %v744
  %v746 = vsel %vm670, %v728, 0.0
  %v747 = vadd.f32 %v745, %v746
  %v748 = vsel %vm670, %v729, 0.0
  %v749 = vadd.f32 %v747, %v748
  %v750 = vsel %vm670, %v730, 0.0
  %v751 = vadd.f32 %v749, %v750
  %v752 = vsel %vm670, %v731, 0.0
  %v753 = vadd.f32 %v751, %v752
  %v754 = vsel %vm670, %v732, 0.0
  %v755 = vadd.f32 %v753, %v754
  %v756 = vsel %vm670, %v733, 0.0
  %v757 = vadd.f32 %v755, %v756
  %v758 = vsel %vm670, %v734, 0.0
  %v759 = vadd.f32 %v757, %v758
  %v760 = vsel %vm670, %v735, 0.0
  %v761 = vadd.f32 %v759, %v760
  %v762 = vsel %vm670, %v736, 0.0
  %v763 = vadd.f32 %v761, %v762
  %v764 = vsel %vm670, %v737, 0.0
  %v765 = vadd.f32 %v763, %v764
  %v766 = vsel %vm670, %v738, 0.0
  %v767 = vadd.f32 %v765, %v766
  %v768 = vsel %vm670, %v739, 0.0
  %v769 = vadd.f32 %v767, %v768
  %v770 = vsel %vm670, %v740, 0.0
  %v771 = vadd.f32 %v769, %v770
  %v772 = vrot.slane %v771, 4
  %v773 = vadd.f32 %v771, %v772
  %v774 = vrot.slane %v773, 2
  %v775 = vadd.f32 %v773, %v774
  %v776 = vrot.slane %v775, 1
  %v777 = vadd.f32 %v775, %v776
  %v778 = vmul.f32 %v777, 0.0078125
  %v779 = vld [vmem:[%s3] sm:$0x1]
  %v780 = vadd.f32 %v778, 1e-05
  %v781 = vrsqrt.pop %v780
  %v782 = vmul.f32 %v779, %v781
  %v784 = vlaneseq
  %v785 = vshrl.u32 %v784, 7
  %v786 = vsub.s32 0, %v785
  %v787 = vrot.slane %v782, %v786
  %v789 = vmul.f32 %v709, %v787
  %v790 = vmul.f32 %v710, %v787
  %v791 = vmul.f32 %v711, %v787
  %v792 = vmul.f32 %v712, %v787
  %v793 = vmul.f32 %v713, %v787
  %v794 = vmul.f32 %v714, %v787
  %v795 = vmul.f32 %v715, %v787
  %v796 = vmul.f32 %v716, %v787
  %v797 = vmul.f32 %v717, %v787
  %v798 = vmul.f32 %v718, %v787
  %v799 = vmul.f32 %v719, %v787
  %v800 = vmul.f32 %v720, %v787
  %v801 = vmul.f32 %v721, %v787
  %v802 = vmul.f32 %v722, %v787
  %v803 = vmul.f32 %v723, %v787
  %v804 = vmul.f32 %v724, %v787
  %v805 = vld [vmem:[%s4] sm:$0x1]
  %v807 = vlaneseq
  %v808 = vshrl.u32 %v807, 7
  %v809 = vsub.s32 0, %v808
  %v810 = vrot.slane %v805, %v809
  %v812 = vadd.f32 %v789, %v810
  %v813 = vadd.f32 %v790, %v810
  %v814 = vadd.f32 %v791, %v810
  %v815 = vadd.f32 %v792, %v810
  %v816 = vadd.f32 %v793, %v810
  %v817 = vadd.f32 %v794, %v810
  %v818 = vadd.f32 %v795, %v810
  %v819 = vadd.f32 %v796, %v810
  %v820 = vadd.f32 %v797, %v810
  %v821 = vadd.f32 %v798, %v810
  %v822 = vadd.f32 %v799, %v810
  %v823 = vadd.f32 %v800, %v810
  %v824 = vadd.f32 %v801, %v810
  %v825 = vadd.f32 %v802, %v810
  %v826 = vadd.f32 %v803, %v810
  %v827 = vadd.f32 %v804, %v810
  %vm828 = vcmp.ge.f32.partialorder %v812, 0.0
  %vm829 = vcmp.ge.f32.partialorder %v813, 0.0
  %vm830 = vcmp.ge.f32.partialorder %v814, 0.0
  %vm831 = vcmp.ge.f32.partialorder %v815, 0.0
  %vm832 = vcmp.ge.f32.partialorder %v816, 0.0
  %vm833 = vcmp.ge.f32.partialorder %v817, 0.0
  %vm834 = vcmp.ge.f32.partialorder %v818, 0.0
  %vm835 = vcmp.ge.f32.partialorder %v819, 0.0
  %vm836 = vcmp.ge.f32.partialorder %v820, 0.0
  %vm837 = vcmp.ge.f32.partialorder %v821, 0.0
  %vm838 = vcmp.ge.f32.partialorder %v822, 0.0
  %vm839 = vcmp.ge.f32.partialorder %v823, 0.0
  %vm840 = vcmp.ge.f32.partialorder %v824, 0.0
  %vm841 = vcmp.ge.f32.partialorder %v825, 0.0
  %vm842 = vcmp.ge.f32.partialorder %v826, 0.0
  %vm843 = vcmp.ge.f32.partialorder %v827, 0.0
  %v844 = vmul.f32 %v812, 0.2
  %v845 = vmul.f32 %v813, 0.2
  %v846 = vmul.f32 %v814, 0.2
  %v847 = vmul.f32 %v815, 0.2
  %v848 = vmul.f32 %v816, 0.2
  %v849 = vmul.f32 %v817, 0.2
  %v850 = vmul.f32 %v818, 0.2
  %v851 = vmul.f32 %v819, 0.2
  %v852 = vmul.f32 %v820, 0.2
  %v853 = vmul.f32 %v821, 0.2
  %v854 = vmul.f32 %v822, 0.2
  %v855 = vmul.f32 %v823, 0.2
  %v856 = vmul.f32 %v824, 0.2
  %v857 = vmul.f32 %v825, 0.2
  %v858 = vmul.f32 %v826, 0.2
  %v859 = vmul.f32 %v827, 0.2
  %v860 = vsel %vm828, %v812, %v844
  %v861 = vsel %vm829, %v813, %v845
  %v862 = vsel %vm830, %v814, %v846
  %v863 = vsel %vm831, %v815, %v847
  %v864 = vsel %vm832, %v816, %v848
  %v865 = vsel %vm833, %v817, %v849
  %v866 = vsel %vm834, %v818, %v850
  %v867 = vsel %vm835, %v819, %v851
  %v868 = vsel %vm836, %v820, %v852
  %v869 = vsel %vm837, %v821, %v853
  %v870 = vsel %vm838, %v822, %v854
  %v871 = vsel %vm839, %v823, %v855
  %v872 = vsel %vm840, %v824, %v856
  %v873 = vsel %vm841, %v825, %v857
  %v874 = vsel %vm842, %v826, %v858
  %v875 = vsel %vm843, %v827, %v859
  %v876 = vpack.c.bf16 %v861, %v860
  %v877 = vpack.c.bf16 %v863, %v862
  %v878 = vpack.c.bf16 %v865, %v864
  %v879 = vpack.c.bf16 %v867, %v866
  %v880 = vpack.c.bf16 %v869, %v868
  %v881 = vpack.c.bf16 %v871, %v870
  %v882 = vpack.c.bf16 %v873, %v872
  %v883 = vpack.c.bf16 %v875, %v874
  %v892 = vunpack.c.l.b16 %v876
  %v893 = vunpack.c.h.b16 %v876
  %v894 = vunpack.c.l.b16 %v877
  %v895 = vunpack.c.h.b16 %v877
  %v896 = vunpack.c.l.b16 %v878
  %v897 = vunpack.c.h.b16 %v878
  %v898 = vunpack.c.l.b16 %v879
  %v899 = vunpack.c.h.b16 %v879
  %v900 = vunpack.c.l.b16 %v880
  %v901 = vunpack.c.h.b16 %v880
  %v902 = vunpack.c.l.b16 %v881
  %v903 = vunpack.c.h.b16 %v881
  %v904 = vunpack.c.l.b16 %v882
  %v905 = vunpack.c.h.b16 %v882
  %v906 = vunpack.c.l.b16 %v883
  %v907 = vunpack.c.h.b16 %v883
  %v908 = vpack.c.b16 %v892, %v892
  %v909 = vpack.c.b16 %v893, %v893
  %v910 = vpack.c.b16 %v894, %v894
  %v911 = vpack.c.b16 %v895, %v895
  %v912 = vpack.c.b16 %v896, %v896
  %v913 = vpack.c.b16 %v897, %v897
  %v914 = vpack.c.b16 %v898, %v898
  %v915 = vpack.c.b16 %v899, %v899
  %v916 = vpack.c.b16 %v900, %v900
  %v917 = vpack.c.b16 %v901, %v901
  %v918 = vpack.c.b16 %v902, %v902
  %v919 = vpack.c.b16 %v903, %v903
  %v920 = vpack.c.b16 %v904, %v904
  %v921 = vpack.c.b16 %v905, %v905
  %v922 = vpack.c.b16 %v906, %v906
  %v923 = vpack.c.b16 %v907, %v907
  %vm940 = vcmask 519168
  %941 = vst.msk [vmem:[%s5] sm:$0xf] %vm940, %v908
  %942 = vst.msk [vmem:[%s5 + $0x4] sm:$0xf] %vm940, %v909
  %943 = vst.msk [vmem:[%s5 + $0x8] sm:$0xf] %vm940, %v910
  %944 = vst.msk [vmem:[%s5 + $0xc] sm:$0xf] %vm940, %v911
  %945 = vst.msk [vmem:[%s5 + $0x10] sm:$0xf] %vm940, %v912
  %946 = vst.msk [vmem:[%s5 + $0x14] sm:$0xf] %vm940, %v913
  %947 = vst.msk [vmem:[%s5 + $0x18] sm:$0xf] %vm940, %v914
  %948 = vst.msk [vmem:[%s5 + $0x1c] sm:$0xf] %vm940, %v915
  %949 = vst.msk [vmem:[%s5 + $0x20] sm:$0xf] %vm940, %v916
  %950 = vst.msk [vmem:[%s5 + $0x24] sm:$0xf] %vm940, %v917
  %951 = vst.msk [vmem:[%s5 + $0x28] sm:$0xf] %vm940, %v918
  %952 = vst.msk [vmem:[%s5 + $0x2c] sm:$0xf] %vm940, %v919
  %953 = vst.msk [vmem:[%s5 + $0x30] sm:$0xf] %vm940, %v920
  %954 = vst.msk [vmem:[%s5 + $0x34] sm:$0xf] %vm940, %v921
  %955 = vst.msk [vmem:[%s5 + $0x38] sm:$0xf] %vm940, %v922
  %956 = vst.msk [vmem:[%s5 + $0x3c] sm:$0xf] %vm940, %v923
  // Predicated region
  $region22: #{dnet_forward.6} parent=0 // pred_check
    _
  $region23: #{dnet_forward.6} parent=0 // pred_check_branch
    %958 = sbr.rel (0) target = $region25
  $region24: #{dnet_forward.6} parent=0 // pred_region
    _
  $region25: #{dnet_forward.6} parent=0 // pred_fallthru
    _
  // Predicated region
  $region26: #{dnet_forward.6} parent=0 // pred_check
    _
  $region27: #{dnet_forward.6} parent=0 // pred_check_branch
    %960 = sbr.rel (0) target = $region29
  $region28: #{dnet_forward.6} parent=0 // pred_region
    _
  $region29: #{dnet_forward.6} parent=0 // pred_fallthru
    _

// kernel: dnet_forward.7
$region0: #{dnet_forward.7}
  #allocation0 [shape = 'u32[]', space=smem, size = 0x4, offset = 0x4, fixed_abs, tag = 'smem constant byte address 0x4 - core index']
  #allocation1 [shape = 'u32[144,128]{1,0:T(1,128)}', space=vmem, size = 0x12000, scoped, tag = 'internal scratch']
  #allocation2 [shape = 'f32[1,1]{1,0:T(1,128)S(1)}', space=vmem, size = 0x200, scoped, tag = 'scoped memory for dnet_forward.7']
  %s0 = inlined_call_operand.vmem [shape: bf16[32,1024], index: 0, kind: input, shape index: {}]
  %s1 = inlined_call_operand.vmem [shape: bf16[1024,128], index: 1, kind: input, shape index: {}]
  %s2 = inlined_call_operand.vmem [shape: f32[1,128], index: 2, kind: input, shape index: {}]
  %s3 = inlined_call_operand.vmem [shape: f32[1,128], index: 3, kind: input, shape index: {}]
  %s4 = inlined_call_operand.vmem [shape: f32[1,128], index: 4, kind: input, shape index: {}]
  %s5 = inlined_call_operand.vmem [shape: f32[32,128], index: 5, kind: input, shape index: {}]
  %s6 = inlined_call_operand.<no memory space> [shape: f32[1,1], index: 6, kind: input, shape index: {}]
  %s7 = inlined_call_operand.hbm [shape: f32[1,1], index: 7, kind: output, shape index: {}]
  %s8 = sld [smem:[#allocation0]]
  $region38: #{dnet_forward.7} parent=0
    _
  %s10 = ssub.s32 1, %s8
  %s11 = scalar_select 0, %s10, %s8
  %v12 = vstv %s6
  %13 = vst [vmem:[#allocation2] sm:$0x1] %v12
  $region1: #{dnet_forward.7} parent=0
    #allocation3 [shape = 'u8[512]{0}', space=vmem, size = 0x400, scoped, tag = 'output window, operand 0, single buffered']
    #allocation4 [shape = 's32[1]{0}', space=sflag, size = 0x4, scoped, tag = 'scoped memory for dnet_forward.7']
    %14 = vsyncpa [#allocation4], 0
    // Predicated region
    $region2: #{dnet_forward.7} parent=1 // pred_check
      _
    $region3: #{dnet_forward.7} parent=1 // pred_check_branch
      %16 = sbr.rel (0) target = $region5
    $region4: #{dnet_forward.7} parent=1 // pred_region
      _
    $region5: #{dnet_forward.7} parent=1 // pred_fallthru
      _
    // Predicated region
    $region6: #{dnet_forward.7} parent=1 // pred_check
      _
    $region7: #{dnet_forward.7} parent=1 // pred_check_branch
      %18 = sbr.rel (0) target = $region9
    $region8: #{dnet_forward.7} parent=1 // pred_region
      _
    $region9: #{dnet_forward.7} parent=1 // pred_fallthru
      _
    // Predicated region
    $region10: #{dnet_forward.7} parent=1 // pred_check
      _
    $region11: #{dnet_forward.7} parent=1 // pred_check_branch
      %20 = sbr.rel (0) target = $region13
    $region12: #{dnet_forward.7} parent=1 // pred_region
      _
    $region13: #{dnet_forward.7} parent=1 // pred_fallthru
      _
    // Predicated region
    $region14: #{dnet_forward.7} parent=1 // pred_check
      _
    $region15: #{dnet_forward.7} parent=1 // pred_check_branch
      %22 = sbr.rel (0) target = $region17
    $region16: #{dnet_forward.7} parent=1 // pred_region
      _
    $region17: #{dnet_forward.7} parent=1 // pred_fallthru
      _
    // Predicated region
    $region18: #{dnet_forward.7} parent=1 // pred_check
      _
    $region19: #{dnet_forward.7} parent=1 // pred_check_branch
      %24 = sbr.rel (0) target = $region21
    $region20: #{dnet_forward.7} parent=1 // pred_region
      _
    $region21: #{dnet_forward.7} parent=1 // pred_fallthru
      _
    // Predicated region
    $region22: #{dnet_forward.7} parent=1 // pred_check
      _
    $region23: #{dnet_forward.7} parent=1 // pred_check_branch
      %26 = sbr.rel (0) target = $region25
    $region24: #{dnet_forward.7} parent=1 // pred_region
      _
    $region25: #{dnet_forward.7} parent=1 // pred_fallthru
      _
    // Predicated region
    $region26: #{dnet_forward.7} parent=1 // pred_check
      _
    $region27: #{dnet_forward.7} parent=1 // pred_check_branch
      %28 = sbr.rel (0) target = $region29
    $region28: #{dnet_forward.7} parent=1 // pred_region
      _
    $region29: #{dnet_forward.7} parent=1 // pred_fallthru
      _
    %v30 = vld [vmem:[%s0] sm:$0xff]
    %v31 = vld [vmem:[%s0 + $0x8] sm:$0xff]
    %v32 = vld [vmem:[%s0 + $0x10] sm:$0xff]
    %v33 = vld [vmem:[%s0 + $0x18] sm:$0xff]
    %v34 = vld [vmem:[%s0 + $0x20] sm:$0xff]
    %v35 = vld [vmem:[%s0 + $0x28] sm:$0xff]
    %v36 = vld [vmem:[%s0 + $0x30] sm:$0xff]
    %v37 = vld [vmem:[%s0 + $0x38] sm:$0xff]
    %v38 = vld [vmem:[%s0 + $0x40] sm:$0xff]
    %v39 = vld [vmem:[%s0 + $0x48] sm:$0xff]
    %v40 = vld [vmem:[%s0 + $0x50] sm:$0xff]
    %v41 = vld [vmem:[%s0 + $0x58] sm:$0xff]
    %v42 = vld [vmem:[%s0 + $0x60] sm:$0xff]
    %v43 = vld [vmem:[%s0 + $0x68] sm:$0xff]
    %v44 = vld [vmem:[%s0 + $0x70] sm:$0xff]
    %v45 = vld [vmem:[%s0 + $0x78] sm:$0xff]
    %v46 = vld [vmem:[%s1] sm:$0xf]
    %v47 = vld [vmem:[%s1 + $0x4] sm:$0xf]
    %v48 = vld [vmem:[%s1 + $0x8] sm:$0xf]
    %v49 = vld [vmem:[%s1 + $0xc] sm:$0xf]
    %v50 = vld [vmem:[%s1 + $0x10] sm:$0xf]
    %v51 = vld [vmem:[%s1 + $0x14] sm:$0xf]
    %v52 = vld [vmem:[%s1 + $0x18] sm:$0xf]
    %v53 = vld [vmem:[%s1 + $0x1c] sm:$0xf]
    %v54 = vld [vmem:[%s1 + $0x20] sm:$0xf]
    %v55 = vld [vmem:[%s1 + $0x24] sm:$0xf]
    %v56 = vld [vmem:[%s1 + $0x28] sm:$0xf]
    %v57 = vld [vmem:[%s1 + $0x2c] sm:$0xf]
    %v58 = vld [vmem:[%s1 + $0x30] sm:$0xf]
    %v59 = vld [vmem:[%s1 + $0x34] sm:$0xf]
    %v60 = vld [vmem:[%s1 + $0x38] sm:$0xf]
    %v61 = vld [vmem:[%s1 + $0x3c] sm:$0xf]
    %v62 = vld [vmem:[%s1 + $0x40] sm:$0xf]
    %v63 = vld [vmem:[%s1 + $0x44] sm:$0xf]
    %v64 = vld [vmem:[%s1 + $0x48] sm:$0xf]
    %v65 = vld [vmem:[%s1 + $0x4c] sm:$0xf]
    %v66 = vld [vmem:[%s1 + $0x50] sm:$0xf]
    %v67 = vld [vmem:[%s1 + $0x54] sm:$0xf]
    %v68 = vld [vmem:[%s1 + $0x58] sm:$0xf]
    %v69 = vld [vmem:[%s1 + $0x5c] sm:$0xf]
    %v70 = vld [vmem:[%s1 + $0x60] sm:$0xf]
    %v71 = vld [vmem:[%s1 + $0x64] sm:$0xf]
    %v72 = vld [vmem:[%s1 + $0x68] sm:$0xf]
    %v73 = vld [vmem:[%s1 + $0x6c] sm:$0xf]
    %v74 = vld [vmem:[%s1 + $0x70] sm:$0xf]
    %v75 = vld [vmem:[%s1 + $0x74] sm:$0xf]
    %v76 = vld [vmem:[%s1 + $0x78] sm:$0xf]
    %v77 = vld [vmem:[%s1 + $0x7c] sm:$0xf]
    %v78 = vld [vmem:[%s1 + $0x80] sm:$0xf]
    %v79 = vld [vmem:[%s1 + $0x84] sm:$0xf]
    %v80 = vld [vmem:[%s1 + $0x88] sm:$0xf]
    %v81 = vld [vmem:[%s1 + $0x8c] sm:$0xf]
    %v82 = vld [vmem:[%s1 + $0x90] sm:$0xf]
    %v83 = vld [vmem:[%s1 + $0x94] sm:$0xf]
    %v84 = vld [vmem:[%s1 + $0x98] sm:$0xf]
    %v85 = vld [vmem:[%s1 + $0x9c] sm:$0xf]
    %v86 = vld [vmem:[%s1 + $0xa0] sm:$0xf]
    %v87 = vld [vmem:[%s1 + $0xa4] sm:$0xf]
    %v88 = vld [vmem:[%s1 + $0xa8] sm:$0xf]
    %v89 = vld [vmem:[%s1 + $0xac] sm:$0xf]
    %v90 = vld [vmem:[%s1 + $0xb0] sm:$0xf]
    %v91 = vld [vmem:[%s1 + $0xb4] sm:$0xf]
    %v92 = vld [vmem:[%s1 + $0xb8] sm:$0xf]
    %v93 = vld [vmem:[%s1 + $0xbc] sm:$0xf]
    %v94 = vld [vmem:[%s1 + $0xc0] sm:$0xf]
    %v95 = vld [vmem:[%s1 + $0xc4] sm:$0xf]
    %v96 = vld [vmem:[%s1 + $0xc8] sm:$0xf]
    %v97 = vld [vmem:[%s1 + $0xcc] sm:$0xf]
    %v98 = vld [vmem:[%s1 + $0xd0] sm:$0xf]
    %v99 = vld [vmem:[%s1 + $0xd4] sm:$0xf]
    %v100 = vld [vmem:[%s1 + $0xd8] sm:$0xf]
    %v101 = vld [vmem:[%s1 + $0xdc] sm:$0xf]
    %v102 = vld [vmem:[%s1 + $0xe0] sm:$0xf]
    %v103 = vld [vmem:[%s1 + $0xe4] sm:$0xf]
    %v104 = vld [vmem:[%s1 + $0xe8] sm:$0xf]
    %v105 = vld [vmem:[%s1 + $0xec] sm:$0xf]
    %v106 = vld [vmem:[%s1 + $0xf0] sm:$0xf]
    %v107 = vld [vmem:[%s1 + $0xf4] sm:$0xf]
    %v108 = vld [vmem:[%s1 + $0xf8] sm:$0xf]
    %v109 = vld [vmem:[%s1 + $0xfc] sm:$0xf]
    %v110 = vld [vmem:[%s1 + $0x100] sm:$0xf]
    %v111 = vld [vmem:[%s1 + $0x104] sm:$0xf]
    %v112 = vld [vmem:[%s1 + $0x108] sm:$0xf]
    %v113 = vld [vmem:[%s1 + $0x10c] sm:$0xf]
    %v114 = vld [vmem:[%s1 + $0x110] sm:$0xf]
    %v115 = vld [vmem:[%s1 + $0x114] sm:$0xf]
    %v116 = vld [vmem:[%s1 + $0x118] sm:$0xf]
    %v117 = vld [vmem:[%s1 + $0x11c] sm:$0xf]
    %v118 = vld [vmem:[%s1 + $0x120] sm:$0xf]
    %v119 = vld [vmem:[%s1 + $0x124] sm:$0xf]
    %v120 = vld [vmem:[%s1 + $0x128] sm:$0xf]
    %v121 = vld [vmem:[%s1 + $0x12c] sm:$0xf]
    %v122 = vld [vmem:[%s1 + $0x130] sm:$0xf]
    %v123 = vld [vmem:[%s1 + $0x134] sm:$0xf]
    %v124 = vld [vmem:[%s1 + $0x138] sm:$0xf]
    %v125 = vld [vmem:[%s1 + $0x13c] sm:$0xf]
    %v126 = vld [vmem:[%s1 + $0x140] sm:$0xf]
    %v127 = vld [vmem:[%s1 + $0x144] sm:$0xf]
    %v128 = vld [vmem:[%s1 + $0x148] sm:$0xf]
    %v129 = vld [vmem:[%s1 + $0x14c] sm:$0xf]
    %v130 = vld [vmem:[%s1 + $0x150] sm:$0xf]
    %v131 = vld [vmem:[%s1 + $0x154] sm:$0xf]
    %v132 = vld [vmem:[%s1 + $0x158] sm:$0xf]
    %v133 = vld [vmem:[%s1 + $0x15c] sm:$0xf]
    %v134 = vld [vmem:[%s1 + $0x160] sm:$0xf]
    %v135 = vld [vmem:[%s1 + $0x164] sm:$0xf]
    %v136 = vld [vmem:[%s1 + $0x168] sm:$0xf]
    %v137 = vld [vmem:[%s1 + $0x16c] sm:$0xf]
    %v138 = vld [vmem:[%s1 + $0x170] sm:$0xf]
    %v139 = vld [vmem:[%s1 + $0x174] sm:$0xf]
    %v140 = vld [vmem:[%s1 + $0x178] sm:$0xf]
    %v141 = vld [vmem:[%s1 + $0x17c] sm:$0xf]
    %v142 = vld [vmem:[%s1 + $0x180] sm:$0xf]
    %v143 = vld [vmem:[%s1 + $0x184] sm:$0xf]
    %v144 = vld [vmem:[%s1 + $0x188] sm:$0xf]
    %v145 = vld [vmem:[%s1 + $0x18c] sm:$0xf]
    %v146 = vld [vmem:[%s1 + $0x190] sm:$0xf]
    %v147 = vld [vmem:[%s1 + $0x194] sm:$0xf]
    %v148 = vld [vmem:[%s1 + $0x198] sm:$0xf]
    %v149 = vld [vmem:[%s1 + $0x19c] sm:$0xf]
    %v150 = vld [vmem:[%s1 + $0x1a0] sm:$0xf]
    %v151 = vld [vmem:[%s1 + $0x1a4] sm:$0xf]
    %v152 = vld [vmem:[%s1 + $0x1a8] sm:$0xf]
    %v153 = vld [vmem:[%s1 + $0x1ac] sm:$0xf]
    %v154 = vld [vmem:[%s1 + $0x1b0] sm:$0xf]
    %v155 = vld [vmem:[%s1 + $0x1b4] sm:$0xf]
    %v156 = vld [vmem:[%s1 + $0x1b8] sm:$0xf]
    %v157 = vld [vmem:[%s1 + $0x1bc] sm:$0xf]
    %v158 = vld [vmem:[%s1 + $0x1c0] sm:$0xf]
    %v159 = vld [vmem:[%s1 + $0x1c4] sm:$0xf]
    %v160 = vld [vmem:[%s1 + $0x1c8] sm:$0xf]
    %v161 = vld [vmem:[%s1 + $0x1cc] sm:$0xf]
    %v162 = vld [vmem:[%s1 + $0x1d0] sm:$0xf]
    %v163 = vld [vmem:[%s1 + $0x1d4] sm:$0xf]
    %v164 = vld [vmem:[%s1 + $0x1d8] sm:$0xf]
    %v165 = vld [vmem:[%s1 + $0x1dc] sm:$0xf]
    %v166 = vld [vmem:[%s1 + $0x1e0] sm:$0xf]
    %v167 = vld [vmem:[%s1 + $0x1e4] sm:$0xf]
    %v168 = vld [vmem:[%s1 + $0x1e8] sm:$0xf]
    %v169 = vld [vmem:[%s1 + $0x1ec] sm:$0xf]
    %v170 = vld [vmem:[%s1 + $0x1f0] sm:$0xf]
    %v171 = vld [vmem:[%s1 + $0x1f4] sm:$0xf]
    %v172 = vld [vmem:[%s1 + $0x1f8] sm:$0xf]
    %v173 = vld [vmem:[%s1 + $0x1fc] sm:$0xf]
    %v174 = vld [vmem:[%s2] sm:$0x1]
    %v176 = vlaneseq
    %v177 = vshrl.u32 %v176, 7
    %v178 = vsub.s32 0, %v177
    %v179 = vrot.slane %v174, %v178
    %v197 = vunpack.c.l.b16 %v30
    %v198 = vunpack.c.h.b16 %v30
    %v199 = vunpack.c.l.b16 %v31
    %v200 = vunpack.c.h.b16 %v31
    %v201 = vunpack.c.l.b16 %v32
    %v202 = vunpack.c.h.b16 %v32
    %v203 = vunpack.c.l.b16 %v33
    %v204 = vunpack.c.h.b16 %v33
    %v205 = vunpack.c.l.b16 %v34
    %v206 = vunpack.c.h.b16 %v34
    %v207 = vunpack.c.l.b16 %v35
    %v208 = vunpack.c.h.b16 %v35
    %v209 = vunpack.c.l.b16 %v36
    %v210 = vunpack.c.h.b16 %v36
    %v211 = vunpack.c.l.b16 %v37
    %v212 = vunpack.c.h.b16 %v37
    %v213 = vunpack.c.l.b16 %v38
    %v214 = vunpack.c.h.b16 %v38
    %v215 = vunpack.c.l.b16 %v39
    %v216 = vunpack.c.h.b16 %v39
    %v217 = vunpack.c.l.b16 %v40
    %v218 = vunpack.c.h.b16 %v40
    %v219 = vunpack.c.l.b16 %v41
    %v220 = vunpack.c.h.b16 %v41
    %v221 = vunpack.c.l.b16 %v42
    %v222 = vunpack.c.h.b16 %v42
    %v223 = vunpack.c.l.b16 %v43
    %v224 = vunpack.c.h.b16 %v43
    %v225 = vunpack.c.l.b16 %v44
    %v226 = vunpack.c.h.b16 %v44
    %v227 = vunpack.c.l.b16 %v45
    %v228 = vunpack.c.h.b16 %v45
    %v229 = vpack.c.b16 %v205, %v197
    %v230 = vpack.c.b16 %v206, %v198
    %v231 = vpack.c.b16 %v207, %v199
    %v232 = vpack.c.b16 %v208, %v200
    %v233 = vpack.c.b16 %v209, %v201
    %v234 = vpack.c.b16 %v210, %v202
    %v235 = vpack.c.b16 %v211, %v203
    %v236 = vpack.c.b16 %v212, %v204
    %v237 = vpack.c.b16 %v221, %v213
    %v238 = vpack.c.b16 %v222, %v214
    %v239 = vpack.c.b16 %v223, %v215
    %v240 = vpack.c.b16 %v224, %v216
    %v241 = vpack.c.b16 %v225, %v217
    %v242 = vpack.c.b16 %v226, %v218
    %v243 = vpack.c.b16 %v227, %v219
    %v244 = vpack.c.b16 %v228, %v220
    %v389 = vunpack.c.l.b16 %v46
    %v390 = vunpack.c.l.b16 %v47
    %v391 = vunpack.c.l.b16 %v48
    %v392 = vunpack.c.l.b16 %v49
    %v393 = vunpack.c.l.b16 %v50
    %v394 = vunpack.c.l.b16 %v51
    %v395 = vunpack.c.l.b16 %v52
    %v396 = vunpack.c.l.b16 %v53
    %v397 = vunpack.c.l.b16 %v54
    %v398 = vunpack.c.l.b16 %v55
    %v399 = vunpack.c.l.b16 %v56
    %v400 = vunpack.c.l.b16 %v57
    %v401 = vunpack.c.l.b16 %v58
    %v402 = vunpack.c.l.b16 %v59
    %v403 = vunpack.c.l.b16 %v60
    %v404 = vunpack.c.l.b16 %v61
    %v405 = vunpack.c.l.b16 %v62
    %v406 = vunpack.c.l.b16 %v63
    %v407 = vunpack.c.l.b16 %v64
    %v408 = vunpack.c.l.b16 %v65
    %v409 = vunpack.c.l.b16 %v66
    %v410 = vunpack.c.l.b16 %v67
    %v411 = vunpack.c.l.b16 %v68
    %v412 = vunpack.c.l.b16 %v69
    %v413 = vunpack.c.l.b16 %v70
    %v414 = vunpack.c.l.b16 %v71
    %v415 = vunpack.c.l.b16 %v72
    %v416 = vunpack.c.l.b16 %v73
    %v417 = vunpack.c.l.b16 %v74
    %v418 = vunpack.c.l.b16 %v75
    %v419 = vunpack.c.l.b16 %v76
    %v420 = vunpack.c.l.b16 %v77
    %v421 = vunpack.c.l.b16 %v78
    %v422 = vunpack.c.l.b16 %v79
    %v423 = vunpack.c.l.b16 %v80
    %v424 = vunpack.c.l.b16 %v81
    %v425 = vunpack.c.l.b16 %v82
    %v426 = vunpack.c.l.b16 %v83
    %v427 = vunpack.c.l.b16 %v84
    %v428 = vunpack.c.l.b16 %v85
    %v429 = vunpack.c.l.b16 %v86
    %v430 = vunpack.c.l.b16 %v87
    %v431 = vunpack.c.l.b16 %v88
    %v432 = vunpack.c.l.b16 %v89
    %v433 = vunpack.c.l.b16 %v90
    %v434 = vunpack.c.l.b16 %v91
    %v435 = vunpack.c.l.b16 %v92
    %v436 = vunpack.c.l.b16 %v93
    %v437 = vunpack.c.l.b16 %v94
    %v438 = vunpack.c.l.b16 %v95
    %v439 = vunpack.c.l.b16 %v96
    %v440 = vunpack.c.l.b16 %v97
    %v441 = vunpack.c.l.b16 %v98
    %v442 = vunpack.c.l.b16 %v99
    %v443 = vunpack.c.l.b16 %v100
    %v444 = vunpack.c.l.b16 %v101
    %v445 = vunpack.c.l.b16 %v102
    %v446 = vunpack.c.l.b16 %v103
    %v447 = vunpack.c.l.b16 %v104
    %v448 = vunpack.c.l.b16 %v105
    %v449 = vunpack.c.l.b16 %v106
    %v450 = vunpack.c.l.b16 %v107
    %v451 = vunpack.c.l.b16 %v108
    %v452 = vunpack.c.l.b16 %v109
    %v453 = vunpack.c.l.b16 %v110
    %v454 = vunpack.c.l.b16 %v111
    %v455 = vunpack.c.l.b16 %v112
    %v456 = vunpack.c.l.b16 %v113
    %v457 = vunpack.c.l.b16 %v114
    %v458 = vunpack.c.l.b16 %v115
    %v459 = vunpack.c.l.b16 %v116
    %v460 = vunpack.c.l.b16 %v117
    %v461 = vunpack.c.l.b16 %v118
    %v462 = vunpack.c.l.b16 %v119
    %v463 = vunpack.c.l.b16 %v120
    %v464 = vunpack.c.l.b16 %v121
    %v465 = vunpack.c.l.b16 %v122
    %v466 = vunpack.c.l.b16 %v123
    %v467 = vunpack.c.l.b16 %v124
    %v468 = vunpack.c.l.b16 %v125
    %v469 = vunpack.c.l.b16 %v126
    %v470 = vunpack.c.l.b16 %v127
    %v471 = vunpack.c.l.b16 %v128
    %v472 = vunpack.c.l.b16 %v129
    %v473 = vunpack.c.l.b16 %v130
    %v474 = vunpack.c.l.b16 %v131
    %v475 = vunpack.c.l.b16 %v132
    %v476 = vunpack.c.l.b16 %v133
    %v477 = vunpack.c.l.b16 %v134
    %v478 = vunpack.c.l.b16 %v135
    %v479 = vunpack.c.l.b16 %v136
    %v480 = vunpack.c.l.b16 %v137
    %v481 = vunpack.c.l.b16 %v138
    %v482 = vunpack.c.l.b16 %v139
    %v483 = vunpack.c.l.b16 %v140
    %v484 = vunpack.c.l.b16 %v141
    %v485 = vunpack.c.l.b16 %v142
    %v486 = vunpack.c.l.b16 %v143
    %v487 = vunpack.c.l.b16 %v144
    %v488 = vunpack.c.l.b16 %v145
    %v489 = vunpack.c.l.b16 %v146
    %v490 = vunpack.c.l.b16 %v147
    %v491 = vunpack.c.l.b16 %v148
    %v492 = vunpack.c.l.b16 %v149
    %v493 = vunpack.c.l.b16 %v150
    %v494 = vunpack.c.l.b16 %v151
    %v495 = vunpack.c.l.b16 %v152
    %v496 = vunpack.c.l.b16 %v153
    %v497 = vunpack.c.l.b16 %v154
    %v498 = vunpack.c.l.b16 %v155
    %v499 = vunpack.c.l.b16 %v156
    %v500 = vunpack.c.l.b16 %v157
    %v501 = vunpack.c.l.b16 %v158
    %v502 = vunpack.c.l.b16 %v159
    %v503 = vunpack.c.l.b16 %v160
    %v504 = vunpack.c.l.b16 %v161
    %v505 = vunpack.c.l.b16 %v162
    %v506 = vunpack.c.l.b16 %v163
    %v507 = vunpack.c.l.b16 %v164
    %v508 = vunpack.c.l.b16 %v165
    %v509 = vunpack.c.l.b16 %v166
    %v510 = vunpack.c.l.b16 %v167
    %v511 = vunpack.c.l.b16 %v168
    %v512 = vunpack.c.l.b16 %v169
    %v513 = vunpack.c.l.b16 %v170
    %v514 = vunpack.c.l.b16 %v171
    %v515 = vunpack.c.l.b16 %v172
    %v516 = vunpack.c.l.b16 %v173
    %v517 = vpack.c.b16 %v390, %v389
    %v518 = vpack.c.b16 %v392, %v391
    %v519 = vpack.c.b16 %v394, %v393
    %v520 = vpack.c.b16 %v396, %v395
    %v521 = vpack.c.b16 %v398, %v397
    %v522 = vpack.c.b16 %v400, %v399
    %v523 = vpack.c.b16 %v402, %v401
    %v524 = vpack.c.b16 %v404, %v403
    %v525 = vpack.c.b16 %v406, %v405
    %v526 = vpack.c.b16 %v408, %v407
    %v527 = vpack.c.b16 %v410, %v409
    %v528 = vpack.c.b16 %v412, %v411
    %v529 = vpack.c.b16 %v414, %v413
    %v530 = vpack.c.b16 %v416, %v415
    %v531 = vpack.c.b16 %v418, %v417
    %v532 = vpack.c.b16 %v420, %v419
    %v533 = vpack.c.b16 %v422, %v421
    %v534 = vpack.c.b16 %v424, %v423
    %v535 = vpack.c.b16 %v426, %v425
    %v536 = vpack.c.b16 %v428, %v427
    %v537 = vpack.c.b16 %v430, %v429
    %v538 = vpack.c.b16 %v432, %v431
    %v539 = vpack.c.b16 %v434, %v433
    %v540 = vpack.c.b16 %v436, %v435
    %v541 = vpack.c.b16 %v438, %v437
    %v542 = vpack.c.b16 %v440, %v439
    %v543 = vpack.c.b16 %v442, %v441
    %v544 = vpack.c.b16 %v444, %v443
    %v545 = vpack.c.b16 %v446, %v445
    %v546 = vpack.c.b16 %v448, %v447
    %v547 = vpack.c.b16 %v450, %v449
    %v548 = vpack.c.b16 %v452, %v451
    %v549 = vpack.c.b16 %v454, %v453
    %v550 = vpack.c.b16 %v456, %v455
    %v551 = vpack.c.b16 %v458, %v457
    %v552 = vpack.c.b16 %v460, %v459
    %v553 = vpack.c.b16 %v462, %v461
    %v554 = vpack.c.b16 %v464, %v463
    %v555 = vpack.c.b16 %v466, %v465
    %v556 = vpack.c.b16 %v468, %v467
    %v557 = vpack.c.b16 %v470, %v469
    %v558 = vpack.c.b16 %v472, %v471
    %v559 = vpack.c.b16 %v474, %v473
    %v560 = vpack.c.b16 %v476, %v475
    %v561 = vpack.c.b16 %v478, %v477
    %v562 = vpack.c.b16 %v480, %v479
    %v563 = vpack.c.b16 %v482, %v481
    %v564 = vpack.c.b16 %v484, %v483
    %v565 = vpack.c.b16 %v486, %v485
    %v566 = vpack.c.b16 %v488, %v487
    %v567 = vpack.c.b16 %v490, %v489
    %v568 = vpack.c.b16 %v492, %v491
    %v569 = vpack.c.b16 %v494, %v493
    %v570 = vpack.c.b16 %v496, %v495
    %v571 = vpack.c.b16 %v498, %v497
    %v572 = vpack.c.b16 %v500, %v499
    %v573 = vpack.c.b16 %v502, %v501
    %v574 = vpack.c.b16 %v504, %v503
    %v575 = vpack.c.b16 %v506, %v505
    %v576 = vpack.c.b16 %v508, %v507
    %v577 = vpack.c.b16 %v510, %v509
    %v578 = vpack.c.b16 %v512, %v511
    %v579 = vpack.c.b16 %v514, %v513
    %v580 = vpack.c.b16 %v516, %v515
    %645 = vmatprep.subr.bf16.mxu0 0
    %646 = vmatpush1.bf16.msra.mxu0 %v517
    %647 = vmatprep.subr.bf16.mxu0 0
    %648 = vmatpush1.bf16.msra.mxu0 %v518
    %649 = vmatprep.subr.bf16.mxu0 0
    %650 = vmatpush1.bf16.msra.mxu0 %v519
    %651 = vmatprep.subr.bf16.mxu0 0
    %652 = vmatpush1.bf16.msra.mxu0 %v520
    %653 = vmatprep.subr.bf16.mxu0 0
    %654 = vmatpush1.bf16.msra.mxu0 %v521
    %655 = vmatprep.subr.bf16.mxu0 0
    %656 = vmatpush1.bf16.msra.mxu0 %v522
    %657 = vmatprep.subr.bf16.mxu0 0
    %658 = vmatpush1.bf16.msra.mxu0 %v523
    %659 = vmatprep.subr.bf16.mxu0 0
    %660 = vmatpush1.bf16.msra.mxu0 %v524
    %661 = vmatprep.subr.bf16.mxu0 0
    %662 = vmatpush1.bf16.msra.mxu0 %v525
    %663 = vmatprep.subr.bf16.mxu0 0
    %664 = vmatpush1.bf16.msra.mxu0 %v526
    %665 = vmatprep.subr.bf16.mxu0 0
    %666 = vmatpush1.bf16.msra.mxu0 %v527
    %667 = vmatprep.subr.bf16.mxu0 0
    %668 = vmatpush1.bf16.msra.mxu0 %v528
    %669 = vmatprep.subr.bf16.mxu0 0
    %670 = vmatpush1.bf16.msra.mxu0 %v529
    %671 = vmatprep.subr.bf16.mxu0 0
    %672 = vmatpush1.bf16.msra.mxu0 %v530
    %673 = vmatprep.subr.bf16.mxu0 0
    %674 = vmatpush1.bf16.msra.mxu0 %v531
    %675 = vmatprep.subr.bf16.mxu0 0
    %676 = vmatpush1.bf16.msra.mxu0 %v532
    %677 = vmatprep.mubr.bf16.mxu0 %v230
    %678 = vmatmul.mubr.bf16.gmra.mrb[0].mxu0 %v229
    %v679 = vpop.f32.mrb[0].mxu0
    %v680 = vadd.f32 %v179, %v679
    %v681 = vpop.f32.mrb[0].mxu0
    %v682 = vpop.f32.mrb[0].mxu0
    %v683 = vadd.f32 %v179, %v682
    %v684 = vpop.f32.mrb[0].mxu0
    %685 = vmatprep.mubr.bf16.mxu0 %v238
    %686 = vmatmul.mubr.bf16.gmra.mrb[0].mxu0 %v237
    %v687 = vpop.f32.mrb[0].mxu0
    %v688 = vadd.f32 %v179, %v687
    %v689 = vpop.f32.mrb[0].mxu0
    %v690 = vpop.f32.mrb[0].mxu0
    %v691 = vadd.f32 %v179, %v690
    %v692 = vpop.f32.mrb[0].mxu0
    %693 = vdwg.mxu0
    %694 = vmatprep.subr.bf16.mxu0 0
    %695 = vmatpush1.bf16.msra.mxu0 %v533
    %696 = vmatprep.subr.bf16.mxu0 0
    %697 = vmatpush1.bf16.msra.mxu0 %v534
    %698 = vmatprep.subr.bf16.mxu0 0
    %699 = vmatpush1.bf16.msra.mxu0 %v535
    %700 = vmatprep.subr.bf16.mxu0 0
    %701 = vmatpush1.bf16.msra.mxu0 %v536
    %702 = vmatprep.subr.bf16.mxu0 0
    %703 = vmatpush1.bf16.msra.mxu0 %v537
    %704 = vmatprep.subr.bf16.mxu0 0
    %705 = vmatpush1.bf16.msra.mxu0 %v538
    %706 = vmatprep.subr.bf16.mxu0 0
    %707 = vmatpush1.bf16.msra.mxu0 %v539
    %708 = vmatprep.subr.bf16.mxu0 0
    %709 = vmatpush1.bf16.msra.mxu0 %v540
    %710 = vmatprep.subr.bf16.mxu0 0
    %711 = vmatpush1.bf16.msra.mxu0 %v541
    %712 = vmatprep.subr.bf16.mxu0 0
    %713 = vmatpush1.bf16.msra.mxu0 %v542
    %714 = vmatprep.subr.bf16.mxu0 0
    %715 = vmatpush1.bf16.msra.mxu0 %v543
    %716 = vmatprep.subr.bf16.mxu0 0
    %717 = vmatpush1.bf16.msra.mxu0 %v544
    %718 = vmatprep.subr.bf16.mxu0 0
    %719 = vmatpush1.bf16.msra.mxu0 %v545
    %720 = vmatprep.subr.bf16.mxu0 0
    %721 = vmatpush1.bf16.msra.mxu0 %v546
    %722 = vmatprep.subr.bf16.mxu0 0
    %723 = vmatpush1.bf16.msra.mxu0 %v547
    %724 = vmatprep.subr.bf16.mxu0 0
    %725 = vmatpush1.bf16.msra.mxu0 %v548
    %726 = vmatprep.mubr.bf16.mxu0 %v232
    %727 = vmatmul.mubr.bf16.gmra.mrb[0].mxu0 %v231
    %v728 = vpop.f32.mrb[0].mxu0
    %v729 = vadd.f32 %v680, %v728
    %v730 = vpop.f32.mrb[0].mxu0
    %v731 = vpop.f32.mrb[0].mxu0
    %v732 = vadd.f32 %v683, %v731
    %v733 = vpop.f32.mrb[0].mxu0
    %734 = vmatprep.mubr.bf16.mxu0 %v240
    %735 = vmatmul.mubr.bf16.gmra.mrb[0].mxu0 %v239
    %v736 = vpop.f32.mrb[0].mxu0
    %v737 = vadd.f32 %v688, %v736
    %v738 = vpop.f32.mrb[0].mxu0
    %v739 = vpop.f32.mrb[0].mxu0
    %v740 = vadd.f32 %v691, %v739
    %v741 = vpop.f32.mrb[0].mxu0
    %742 = vdwg.mxu0
    %743 = vmatprep.subr.bf16.mxu0 0
    %744 = vmatpush1.bf16.msra.mxu0 %v549
    %745 = vmatprep.subr.bf16.mxu0 0
    %746 = vmatpush1.bf16.msra.mxu0 %v550
    %747 = vmatprep.subr.bf16.mxu0 0
    %748 = vmatpush1.bf16.msra.mxu0 %v551
    %749 = vmatprep.subr.bf16.mxu0 0
    %750 = vmatpush1.bf16.msra.mxu0 %v552
    %751 = vmatprep.subr.bf16.mxu0 0
    %752 = vmatpush1.bf16.msra.mxu0 %v553
    %753 = vmatprep.subr.bf16.mxu0 0
    %754 = vmatpush1.bf16.msra.mxu0 %v554
    %755 = vmatprep.subr.bf16.mxu0 0
    %756 = vmatpush1.bf16.msra.mxu0 %v555
    %757 = vmatprep.subr.bf16.mxu0 0
    %758 = vmatpush1.bf16.msra.mxu0 %v556
    %759 = vmatprep.subr.bf16.mxu0 0
    %760 = vmatpush1.bf16.msra.mxu0 %v557
    %761 = vmatprep.subr.bf16.mxu0 0
    %762 = vmatpush1.bf16.msra.mxu0 %v558
    %763 = vmatprep.subr.bf16.mxu0 0
    %764 = vmatpush1.bf16.msra.mxu0 %v559
    %765 = vmatprep.subr.bf16.mxu0 0
    %766 = vmatpush1.bf16.msra.mxu0 %v560
    %767 = vmatprep.subr.bf16.mxu0 0
    %768 = vmatpush1.bf16.msra.mxu0 %v561
    %769 = vmatprep.subr.bf16.mxu0 0
    %770 = vmatpush1.bf16.msra.mxu0 %v562
    %771 = vmatprep.subr.bf16.mxu0 0
    %772 = vmatpush1.bf16.msra.mxu0 %v563
    %773 = vmatprep.subr.bf16.mxu0 0
    %774 = vmatpush1.bf16.msra.mxu0 %v564
    %775 = vmatprep.mubr.bf16.mxu0 %v234
    %776 = vmatmul.mubr.bf16.gmra.mrb[0].mxu0 %v233
    %v777 = vpop.f32.mrb[0].mxu0
    %v778 = vadd.f32 %v729, %v777
    %v779 = vpop.f32.mrb[0].mxu0
    %v780 = vpop.f32.mrb[0].mxu0
    %v781 = vadd.f32 %v732, %v780
    %v782 = vpop.f32.mrb[0].mxu0
    %783 = vmatprep.mubr.bf16.mxu0 %v242
    %784 = vmatmul.mubr.bf16.gmra.mrb[0].mxu0 %v241
    %v785 = vpop.f32.mrb[0].mxu0
    %v786 = vadd.f32 %v737, %v785
    %v787 = vpop.f32.mrb[0].mxu0
    %v788 = vpop.f32.mrb[0].mxu0
    %v789 = vadd.f32 %v740, %v788
    %v790 = vpop.f32.mrb[0].mxu0
    %791 = vdwg.mxu0
    %792 = vmatprep.subr.bf16.mxu0 0
    %793 = vmatpush1.bf16.msra.mxu0 %v565
    %794 = vmatprep.subr.bf16.mxu0 0
    %795 = vmatpush1.bf16.msra.mxu0 %v566
    %796 = vmatprep.subr.bf16.mxu0 0
    %797 = vmatpush1.bf16.msra.mxu0 %v567
    %798 = vmatprep.subr.bf16.mxu0 0
    %799 = vmatpush1.bf16.msra.mxu0 %v568
    %800 = vmatprep.subr.bf16.mxu0 0
    %801 = vmatpush1.bf16.msra.mxu0 %v569
    %802 = vmatprep.subr.bf16.mxu0 0
    %803 = vmatpush1.bf16.msra.mxu0 %v570
    %804 = vmatprep.subr.bf16.mxu0 0
    %805 = vmatpush1.bf16.msra.mxu0 %v571
    %806 = vmatprep.subr.bf16.mxu0 0
    %807 = vmatpush1.bf16.msra.mxu0 %v572
    %808 = vmatprep.subr.bf16.mxu0 0
    %809 = vmatpush1.bf16.msra.mxu0 %v573
    %810 = vmatprep.subr.bf16.mxu0 0
    %811 = vmatpush1.bf16.msra.mxu0 %v574
    %812 = vmatprep.subr.bf16.mxu0 0
    %813 = vmatpush1.bf16.msra.mxu0 %v575
    %814 = vmatprep.subr.bf16.mxu0 0
    %815 = vmatpush1.bf16.msra.mxu0 %v576
    %816 = vmatprep.subr.bf16.mxu0 0
    %817 = vmatpush1.bf16.msra.mxu0 %v577
    %818 = vmatprep.subr.bf16.mxu0 0
    %819 = vmatpush1.bf16.msra.mxu0 %v578
    %820 = vmatprep.subr.bf16.mxu0 0
    %821 = vmatpush1.bf16.msra.mxu0 %v579
    %822 = vmatprep.subr.bf16.mxu0 0
    %823 = vmatpush1.bf16.msra.mxu0 %v580
    %824 = vmatprep.mubr.bf16.mxu0 %v236
    %825 = vmatmul.mubr.bf16.gmra.mrb[0].mxu0 %v235
    %v826 = vpop.f32.mrb[0].mxu0
    %v827 = vadd.f32 %v778, %v826
    %v828 = vpop.f32.mrb[0].mxu0
    %v829 = vpop.f32.mrb[0].mxu0
    %v830 = vadd.f32 %v781, %v829
    %v831 = vpop.f32.mrb[0].mxu0
    %832 = vmatprep.mubr.bf16.mxu0 %v244
    %833 = vmatmul.mubr.bf16.gmra.mrb[0].mxu0 %v243
    %v834 = vpop.f32.mrb[0].mxu0
    %v835 = vadd.f32 %v786, %v834
    %v836 = vpop.f32.mrb[0].mxu0
    %v837 = vpop.f32.mrb[0].mxu0
    %v838 = vadd.f32 %v789, %v837
    %v839 = vpop.f32.mrb[0].mxu0
    %840 = vdwg.mxu0
    %v841 = vadd.f32 %v827, %v830
    %v842 = vadd.f32 %v841, %v835
    %v843 = vadd.f32 %v842, %v838
    %v844 = vrot.slane %v843, 4
    %v845 = vadd.f32 %v843, %v844
    %v846 = vrot.slane %v845, 2
    %v847 = vadd.f32 %v845, %v846
    %v848 = vrot.slane %v847, 1
    %v849 = vadd.f32 %v847, %v848
    %v850 = vmul.f32 %v849, 0.03125
    %v851 = vsub.f32 %v827, %v850
    %v852 = vsub.f32 %v830, %v850
    %v853 = vsub.f32 %v835, %v850
    %v854 = vsub.f32 %v838, %v850
    %v855 = vmul.f32 %v851, %v851
    %v856 = vmul.f32 %v852, %v852
    %v857 = vmul.f32 %v853, %v853
    %v858 = vmul.f32 %v854, %v854
    %v859 = vadd.f32 %v855, %v856
    %v860 = vadd.f32 %v859, %v857
    %v861 = vadd.f32 %v860, %v858
    %v862 = vrot.slane %v861, 4
    %v863 = vadd.f32 %v861, %v862
    %v864 = vrot.slane %v863, 2
    %v865 = vadd.f32 %v863, %v864
    %v866 = vrot.slane %v865, 1
    %v867 = vadd.f32 %v865, %v866
    %v868 = vmul.f32 %v867, 0.03125
    %v869 = vld [vmem:[%s3] sm:$0x1]
    %v870 = vadd.f32 %v868, 1e-05
    %v871 = vrsqrt.pop %v870
    %v872 = vmul.f32 %v869, %v871
    %v874 = vlaneseq
    %v875 = vshrl.u32 %v874, 7
    %v876 = vsub.s32 0, %v875
    %v877 = vrot.slane %v872, %v876
    %v879 = vmul.f32 %v851, %v877
    %v880 = vmul.f32 %v852, %v877
    %v881 = vmul.f32 %v853, %v877
    %v882 = vmul.f32 %v854, %v877
    %v883 = vld [vmem:[%s4] sm:$0x1]
    %v885 = vlaneseq
    %v886 = vshrl.u32 %v885, 7
    %v887 = vsub.s32 0, %v886
    %v888 = vrot.slane %v883, %v887
    %v890 = vadd.f32 %v879, %v888
    %v891 = vadd.f32 %v880, %v888
    %v892 = vadd.f32 %v881, %v888
    %v893 = vadd.f32 %v882, %v888
    %vm894 = vcmp.ge.f32.partialorder %v890, 0.0
    %vm895 = vcmp.ge.f32.partialorder %v891, 0.0
    %vm896 = vcmp.ge.f32.partialorder %v892, 0.0
    %vm897 = vcmp.ge.f32.partialorder %v893, 0.0
    %v898 = vmul.f32 %v890, 0.2
    %v899 = vmul.f32 %v891, 0.2
    %v900 = vmul.f32 %v892, 0.2
    %v901 = vmul.f32 %v893, 0.2
    %v902 = vsel %vm894, %v890, %v898
    %v903 = vsel %vm895, %v891, %v899
    %v904 = vsel %vm896, %v892, %v900
    %v905 = vsel %vm897, %v893, %v901
    %v906 = vld [vmem:[%s5] sm:$0xff]
    %v907 = vld [vmem:[%s5 + $0x8] sm:$0xff]
    %v908 = vld [vmem:[%s5 + $0x10] sm:$0xff]
    %v909 = vld [vmem:[%s5 + $0x18] sm:$0xff]
    %v910 = vmul.f32 %v902, %v906
    %v911 = vmul.f32 %v903, %v907
    %v912 = vmul.f32 %v904, %v908
    %v913 = vmul.f32 %v905, %v909
    %914 = vadd.xlane.f32.xlu0 %v910
    %v915 = vpop.xlane.xlu0 %914
    %916 = vadd.xlane.f32.xlu0 %v911
    %v917 = vpop.xlane.xlu0 %916
    %918 = vadd.xlane.f32.xlu0 %v912
    %v919 = vpop.xlane.xlu0 %918
    %920 = vadd.xlane.f32.xlu0 %v913
    %v921 = vpop.xlane.xlu0 %920
    %v922 = vadd.f32 %v915, %v917
    %v923 = vadd.f32 %v922, %v919
    %v924 = vadd.f32 %v923, %v921
    %v925 = vrot.slane %v924, 4
    %v926 = vadd.f32 %v924, %v925
    %v927 = vrot.slane %v926, 2
    %v928 = vadd.f32 %v926, %v927
    %v929 = vrot.slane %v928, 1
    %v930 = vadd.f32 %v928, %v929
    %v931 = vmul.f32 %v930, 0.5
    %v932 = vld [vmem:[#allocation2] sm:$0x1]
    %v933 = vadd.f32 %v931, %v932
    %vm934 = vcmask 0
    %935 = vst.msk [vmem:[#allocation3] sm:$0x1] %vm934, %v933
    // Predicated region
    $region30: #{dnet_forward.7} parent=1 // pred_check
      _
    $region31: #{dnet_forward.7} parent=1 // pred_check_branch
      %937 = sbr.rel (0) target = $region33
    $region32: #{dnet_forward.7} parent=1 // pred_region
      %s939 = ssub.s32 16, 16
      %940 = vsyncadd [#allocation4], %s939
      %s942 = sshll.u32 [#allocation3], 4
      %s943 = int_to_ptr.vmem [resolvable:$true] %s942
      %945 = dma.vmem_to_hbm [thread:$0]  %s943, 16, %s7, [#allocation4]
    $region33: #{dnet_forward.7} parent=1 // pred_fallthru
      _
    // Predicated region
    $region34: #{dnet_forward.7} parent=1 // pred_check
      _
    $region35: #{dnet_forward.7} parent=1 // pred_check_branch
      %947 = sbr.rel (0) target = $region37
    $region36: #{dnet_forward.7} parent=1 // pred_region
      %948 = dma.done [#allocation4], 16
    $region37: #{dnet_forward.7} parent=1 // pred_fallthru
      _
    %949 = vsyncpa [#allocation4], 1

</llo_original>
